<compile_context>
chip_gen: v7x
topology: tpu7x:2x2x1
jax: 0.10.0
libtpu: 0.0.40
codegen_flags: <defaults>
</compile_context>

<pallas_src>
import math

import jax
import jax.numpy as jnp
from jax.experimental import pallas as pl
from jax.experimental.pallas import tpu as pltpu

SCORE_MASK_VALUE = -1e30  # large finite negative instead of -inf (NaN hazard)
_MiB = 1024 * 1024


def _attention_kernel(q_ref, mem_ref, pmem_ref, mask_ref, wq_ref, v_ref,
                      ctx_ref, w_ref):
    bb, tp, a = pmem_ref.shape

    # --- query projection on the MXU: (bb, Q) @ (Q, A) -> (bb, A) f32 ---
    pq = jnp.dot(q_ref[...], wq_ref[...], preferred_element_type=jnp.float32)

    # --- additive energies: v . tanh(pq + processed_memory) -> (bb, Tp) ---
    # tanh operand upcast to f32 (no bf16 VPU/EUP on v5e); A-contraction runs
    # on the MXU against the (A, 1) column instead of an XLU lane reduce.
    e = jnp.tanh(pq[:, None, :] + pmem_ref[...].astype(jnp.float32))  # (bb,tp,A) f32
    energies = jnp.dot(e.reshape(bb * tp, a), v_ref[...],
                       preferred_element_type=jnp.float32).reshape(bb, tp)

    # --- masked_fill(mask, score_mask_value); pad T columns are masked too ---
    align = jnp.where(mask_ref[...] != 0, SCORE_MASK_VALUE, energies)

    # --- softmax over T (dim=1), f32 throughout ---
    mmax = jnp.max(align, axis=1, keepdims=True)
    p = jnp.exp(align - mmax)                     # masked cols underflow to 0
    w = p / jnp.sum(p, axis=1, keepdims=True)     # (bb, tp) f32

    # --- context: batched MXU contraction over T (memory streams to the MXU) ---
    ctx = jnp.einsum("bqt,btm->bqm",
                     w.astype(mem_ref.dtype)[:, None, :], mem_ref[...],
                     preferred_element_type=jnp.float32)[:, 0, :]    # (bb, M)

    ctx_ref[...] = ctx.astype(ctx_ref.dtype)
    w_ref[...] = w.astype(w_ref.dtype)            # lane-dense (Tp % 128 == 0)


def _round_up(x, m):
    return (x + m - 1) // m * m


def _vmem_bytes(bb, tp, q, a, m):
    # double-buffered pipelined input streams: memory/pmem bf16, mask i32, query f32
    dma_in = 2 * (bb * tp * (2 * m + 2 * a + 4) + bb * q * 4)
    # double-buffered outputs: context f32, weights f32
    dma_out = 2 * (bb * m * 4 + bb * tp * 4)
    # resident weights (counted double for buffering slack)
    weights = 2 * (q * a * 4 + a * 4)
    # in-kernel f32 temporaries: two (bb, tp, A) intermediates (upcast + tanh)
    # plus a handful of (bb, tp) f32 maps (energies / align / p / w / bf16 w)
    temps = bb * tp * (8 * a + 32)
    return dma_in + dma_out + weights + temps


def _choose_block_b(b_padded, tp, q, a, m, budget):
    bb = 8
    while bb + 8 <= b_padded and _vmem_bytes(bb + 8, tp, q, a, m) <= budget:
        bb += 8
    # Keep >=2 grid steps when the batch allows it so both v7x TensorCores get
    # work under "parallel"; costs only ~0.35us/step on single-TC chips.
    if b_padded >= 16:
        bb = min(bb, max(8, (b_padded // 2) // 8 * 8))
    return min(bb, b_padded)


def attention_forward(query, memory, processed_memory, mask, wq, wv, *,
                      block_b=None):
    """query (B,1024) f32, memory (B,T,512), processed_memory (B,T,128),
    mask (B,T) bool/int (nonzero = masked), wq (128,1024) torch-layout,
    wv (1,128). Returns (attention_context (B,512), attention_weights (B,T))."""
    B, T, M = memory.shape
    Q = query.shape[1]
    A = processed_memory.shape[2]

    # Per-generation VMEM budgets (leave headroom for compiler scratch).
    try:
        vmem_cap = int(pltpu.get_tpu_info().vmem_capacity_bytes)
    except Exception:  # conservative fallback (v7x-sized)
        vmem_cap = 64 * _MiB
    if vmem_cap <= 64 * _MiB:            # v7x-class TensorCore
        budget, limit_cap = 40 * _MiB, 56 * _MiB
    else:                                # v5e / v6e (128 MiB physical)
        budget, limit_cap = 96 * _MiB, 112 * _MiB

    # Lane-dense T for the weights output; batch padded to the tile size.
    Tp = _round_up(T, 128)
    if block_b is None:
        block_b = _choose_block_b(_round_up(B, 8), Tp, Q, A, M, budget)
    Bp = _round_up(B, block_b)

    pad_b, pad_t = Bp - B, Tp - T
    # bf16 streaming for the two big (B, T, *) operands (f32 accumulation kept
    # in-kernel); query / weights stay f32 (tiny streams).
    query_p = jnp.pad(jnp.asarray(query, jnp.float32), ((0, pad_b), (0, 0)))
    memory_p = jnp.pad(jnp.asarray(memory, jnp.bfloat16),
                       ((0, pad_b), (0, pad_t), (0, 0)))
    pmem_p = jnp.pad(jnp.asarray(processed_memory, jnp.bfloat16),
                     ((0, pad_b), (0, pad_t), (0, 0)))
    mask_p = jnp.pad(jnp.asarray(mask, jnp.int32),
                     ((0, pad_b), (0, pad_t)), constant_values=1)

    wq_t = jnp.transpose(jnp.asarray(wq, jnp.float32))    # (Q, A)
    v_col = jnp.transpose(jnp.asarray(wv, jnp.float32))   # (A, 1)

    grid = (Bp // block_b,)

    cost = pl.CostEstimate(
        flops=2 * Bp * Q * A + Bp * Tp * (3 * A + 2 * M + 6),
        transcendentals=Bp * Tp * (A + 1),
        bytes_accessed=(4 * Bp * Q + 2 * Bp * Tp * (M + A) + 4 * Bp * Tp
                        + 4 * (Q * A + A) + 4 * Bp * (M + Tp)),
    )
    est = _vmem_bytes(block_b, Tp, Q, A, M)
    vmem_limit = int(min(max(1.3 * est, 32 * _MiB), limit_cap))

    ctx_p, w_p = pl.pallas_call(
        _attention_kernel,
        out_shape=(jax.ShapeDtypeStruct((Bp, M), jnp.float32),
                   jax.ShapeDtypeStruct((Bp, Tp), jnp.float32)),
        grid_spec=pltpu.PrefetchScalarGridSpec(
            num_scalar_prefetch=0,
            grid=grid,
            in_specs=[
                pl.BlockSpec((block_b, Q), lambda i: (i, 0)),          # query
                pl.BlockSpec((block_b, Tp, M), lambda i: (i, 0, 0)),   # memory (bf16)
                pl.BlockSpec((block_b, Tp, A), lambda i: (i, 0, 0)),   # proc. mem (bf16)
                pl.BlockSpec((block_b, Tp), lambda i: (i, 0)),         # mask
                pl.BlockSpec((Q, A), lambda i: (0, 0)),                # W_q^T resident
                pl.BlockSpec((A, 1), lambda i: (0, 0)),                # v column resident
            ],
            out_specs=[
                pl.BlockSpec((block_b, M), lambda i: (i, 0)),          # context
                pl.BlockSpec((block_b, Tp), lambda i: (i, 0)),         # weights
            ],
        ),
        compiler_params=pltpu.CompilerParams(
            dimension_semantics=("parallel",),     # shard B tiles across TCs (v7x)
            vmem_limit_bytes=vmem_limit),
        cost_estimate=cost,
    )(query_p, memory_p, pmem_p, mask_p, wq_t, v_col)

    return ctx_p[:B], w_p[:B, :T]


def _xavier_uniform(key, shape, gain):
    # torch nn.Linear weight shape is (out, in)
    fan_out, fan_in = shape
    bound = gain * math.sqrt(6.0 / (fan_in + fan_out))
    return jax.random.uniform(key, shape, jnp.float32, -bound, bound)


def _reference(query, memory, processed_memory, mask, wq, wv):
    pq = query @ wq.T                                                   # (B,128)
    energies = jnp.squeeze(jnp.tanh(pq[:, None, :] + processed_memory) @ wv.T, -1)
    align = jnp.where(mask, float("-inf"), energies)
    w = jax.nn.softmax(align, axis=1)
    ctx = jnp.einsum("bt,btd->bd", w, memory)
    return ctx, w


if __name__ == "__main__":
    key = jax.random.PRNGKey(0)
    k1, k2, k3, k4, k5 = jax.random.split(key, 5)

    # deterministic parameter init (matches LinearNorm xavier_uniform, bias=False)
    tanh_gain = 5.0 / 3.0
    Wq = _xavier_uniform(k1, (128, 1024), tanh_gain)   # query_layer.weight
    Wm = _xavier_uniform(k2, (128, 512), tanh_gain)    # memory_layer.weight
    Wv = _xavier_uniform(k3, (1, 128), 1.0)            # v.weight

    B, T = 2, 8
    attention_hidden_state = jax.random.normal(k4, (B, 1024), jnp.float32)
    memory = jax.random.normal(k5, (B, T, 512), jnp.float32)
    # processed_memory is a forward input; build it from memory_layer (plain JAX glue)
    processed_memory = memory @ Wm.T                   # (B, T, 128)
    # attention_weights_cat is accepted by the module but unused by its energies
    attention_weights_cat = jnp.zeros((B, 2, T), jnp.float32)
    # mask: last two timesteps of batch element 1 are padding
    mask = jnp.zeros((B, T), jnp.bool_).at[1, T - 2:].set(True)

    ctx, attn_w = attention_forward(
        attention_hidden_state, memory, processed_memory, mask, Wq, Wv)
    jax.block_until_ready((ctx, attn_w))

    ref_ctx, ref_w = _reference(attention_hidden_state, memory,
                                processed_memory, mask, Wq, Wv)
    assert ctx.shape == (B, 512) and attn_w.shape == (B, T)
    # tolerances loosened because memory / processed_memory stream in bf16
    assert jnp.allclose(ctx, ref_ctx, atol=5e-2, rtol=5e-2)
    assert jnp.allclose(attn_w, ref_w, atol=3e-2, rtol=3e-2)
    assert not bool(jnp.any(jnp.isnan(ctx))) and not bool(jnp.any(jnp.isnan(attn_w)))

    print("KERNEL_OK")
</pallas_src>

<mosaic_0001>
module attributes {stable_mosaic.version = 11 : i64} {
  func.func @_attention_kernel(%arg0: i32, %arg1: memref<8x1024xf32, #tpu.memory_space<vmem>>, %arg2: memref<8x128x512xbf16, #tpu.memory_space<vmem>>, %arg3: memref<8x128x128xbf16, #tpu.memory_space<vmem>>, %arg4: memref<8x128xi32, #tpu.memory_space<vmem>>, %arg5: memref<1024x128xf32, #tpu.memory_space<vmem>>, %arg6: memref<128x1xf32, #tpu.memory_space<vmem>>, %arg7: memref<8x512xf32, #tpu.memory_space<vmem>>, %arg8: memref<8x128xf32, #tpu.memory_space<vmem>>) attributes {dimension_semantics = [#tpu.dimension_semantics<parallel>], iteration_bounds = array<i64: 1>, scalar_prefetch = 0 : i64, scratch_operands = 0 : i64, tpu.core_type = #tpu.core_type<tc>, window_params = [{transform_indices = @transform_0, window_bounds = array<i64: 8, 1024>}, {transform_indices = @transform_1, window_bounds = array<i64: 8, 128, 512>}, {transform_indices = @transform_2, window_bounds = array<i64: 8, 128, 128>}, {transform_indices = @transform_3, window_bounds = array<i64: 8, 128>}, {pipeline_mode = #tpu.pipeline_mode<synchronous>, transform_indices = @transform_4, window_bounds = array<i64: 1024, 128>}, {pipeline_mode = #tpu.pipeline_mode<synchronous>, transform_indices = @transform_5, window_bounds = array<i64: 128, 1>}, {transform_indices = @transform_6, window_bounds = array<i64: 8, 512>}, {transform_indices = @transform_7, window_bounds = array<i64: 8, 128>}]} {
    %c0 = arith.constant 0 : index
    %c0_0 = arith.constant 0 : index
    %0 = vector.load %arg1[%c0, %c0_0] : memref<8x1024xf32, #tpu.memory_space<vmem>>, vector<8x1024xf32>
    %c0_1 = arith.constant 0 : index
    %c0_2 = arith.constant 0 : index
    %1 = vector.load %arg5[%c0_1, %c0_2] : memref<1024x128xf32, #tpu.memory_space<vmem>>, vector<1024x128xf32>
    %cst = arith.constant dense<0.000000e+00> : vector<8x128xf32>
    %2 = tpu.matmul %0, %1, %cst {dimension_numbers = #tpu.dot_dimension_numbers<[1], [0], [0], [1], [0, 0, 1, 1], [], []>} : vector<8x1024xf32>, vector<1024x128xf32>, vector<8x128xf32> -> vector<8x128xf32>
    %3 = vector.shape_cast %2 : vector<8x128xf32> to vector<8x1x128xf32>
    %c0_3 = arith.constant 0 : index
    %c0_4 = arith.constant 0 : index
    %c0_5 = arith.constant 0 : index
    %4 = vector.load %arg3[%c0_3, %c0_4, %c0_5] : memref<8x128x128xbf16, #tpu.memory_space<vmem>>, vector<8x128x128xbf16>
    %5 = arith.extf %4 : vector<8x128x128xbf16> to vector<8x128x128xf32>
    %6 = vector.broadcast %3 : vector<8x1x128xf32> to vector<8x128x128xf32>
    %7 = arith.addf %6, %5 : vector<8x128x128xf32>
    %8 = math.tanh %7 : vector<8x128x128xf32>
    %9 = vector.shape_cast %8 : vector<8x128x128xf32> to vector<1024x128xf32>
    %c0_6 = arith.constant 0 : index
    %c0_7 = arith.constant 0 : index
    %10 = vector.load %arg6[%c0_6, %c0_7] : memref<128x1xf32, #tpu.memory_space<vmem>>, vector<128x1xf32>
    %cst_8 = arith.constant dense<0.000000e+00> : vector<1024x1xf32>
    %11 = tpu.matmul %9, %10, %cst_8 {dimension_numbers = #tpu.dot_dimension_numbers<[1], [0], [0], [1], [0, 0, 1, 1], [], []>} : vector<1024x128xf32>, vector<128x1xf32>, vector<1024x1xf32> -> vector<1024x1xf32>
    %12 = vector.shape_cast %11 : vector<1024x1xf32> to vector<8x128xf32>
    %c0_9 = arith.constant 0 : index
    %c0_10 = arith.constant 0 : index
    %13 = vector.load %arg4[%c0_9, %c0_10] : memref<8x128xi32, #tpu.memory_space<vmem>>, vector<8x128xi32>
    %c0_i32 = arith.constant 0 : i32
    %14 = vector.broadcast %c0_i32 : i32 to vector<8x128xi32>
    %15 = arith.cmpi ne, %13, %14 : vector<8x128xi32>
    %cst_11 = arith.constant -1.000000e+30 : f32
    %16 = vector.broadcast %cst_11 : f32 to vector<8x128xf32>
    %17 = arith.select %15, %16, %12 : vector<8x128xi1>, vector<8x128xf32>
    %cst_12 = arith.constant dense<0xFF800000> : vector<8xf32>
    %18 = vector.multi_reduction <maximumf>, %17, %cst_12 [1] : vector<8x128xf32> to vector<8xf32>
    %19 = vector.shape_cast %18 : vector<8xf32> to vector<8x1xf32>
    %20 = vector.broadcast %19 : vector<8x1xf32> to vector<8x128xf32>
    %21 = arith.subf %17, %20 : vector<8x128xf32>
    %22 = math.exp %21 : vector<8x128xf32>
    %cst_13 = arith.constant dense<0.000000e+00> : vector<8xf32>
    %23 = vector.multi_reduction <add>, %22, %cst_13 [1] : vector<8x128xf32> to vector<8xf32>
    %24 = vector.shape_cast %23 : vector<8xf32> to vector<8x1xf32>
    %25 = vector.broadcast %24 : vector<8x1xf32> to vector<8x128xf32>
    %26 = arith.divf %22, %25 : vector<8x128xf32>
    %27 = arith.truncf %26 : vector<8x128xf32> to vector<8x128xbf16>
    %28 = vector.shape_cast %27 : vector<8x128xbf16> to vector<8x1x128xbf16>
    %c0_14 = arith.constant 0 : index
    %c0_15 = arith.constant 0 : index
    %c0_16 = arith.constant 0 : index
    %29 = vector.load %arg2[%c0_14, %c0_15, %c0_16] : memref<8x128x512xbf16, #tpu.memory_space<vmem>>, vector<8x128x512xbf16>
    "tpu.trace_start"() <{level = 10 : i32, message = "bqt,btm->bqm"}> : () -> ()
    %cst_17 = arith.constant dense<0.000000e+00> : vector<8x1x512xf32>
    %30 = tpu.matmul %28, %29, %cst_17 {dimension_numbers = #tpu.dot_dimension_numbers<[2], [1], [1], [2], [0, 0, 0, 1, 1, 2], [0], [0]>} : vector<8x1x128xbf16>, vector<8x128x512xbf16>, vector<8x1x512xf32> -> vector<8x1x512xf32>
    "tpu.trace_stop"() : () -> ()
    %31 = vector.shape_cast %30 : vector<8x1x512xf32> to vector<8x512xf32>
    %c0_18 = arith.constant 0 : index
    %c0_19 = arith.constant 0 : index
    %32 = vector.load %arg7[%c0_18, %c0_19] : memref<8x512xf32, #tpu.memory_space<vmem>>, vector<8x512xf32>
    tpu.vector_store %arg7[%c0_18, %c0_19], %31 {strides = array<i32>} : memref<8x512xf32, #tpu.memory_space<vmem>>, vector<8x512xf32>,
    %c0_20 = arith.constant 0 : index
    %c0_21 = arith.constant 0 : index
    %33 = vector.load %arg8[%c0_20, %c0_21] : memref<8x128xf32, #tpu.memory_space<vmem>>, vector<8x128xf32>
    tpu.vector_store %arg8[%c0_20, %c0_21], %26 {strides = array<i32>} : memref<8x128xf32, #tpu.memory_space<vmem>>, vector<8x128xf32>,
    return
  }
  func.func @transform_0(%arg0: i32) -> (i32, i32) {
    %c0_i32 = arith.constant 0 : i32
    %c0_i32_0 = arith.constant 0 : i32
    return %arg0, %c0_i32 : i32, i32
  }
  func.func @transform_1(%arg0: i32) -> (i32, i32, i32) {
    %c0_i32 = arith.constant 0 : i32
    %c0_i32_0 = arith.constant 0 : i32
    %c0_i32_1 = arith.constant 0 : i32
    return %arg0, %c0_i32, %c0_i32_0 : i32, i32, i32
  }
  func.func @transform_2(%arg0: i32) -> (i32, i32, i32) {
    %c0_i32 = arith.constant 0 : i32
    %c0_i32_0 = arith.constant 0 : i32
    %c0_i32_1 = arith.constant 0 : i32
    return %arg0, %c0_i32, %c0_i32_0 : i32, i32, i32
  }
  func.func @transform_3(%arg0: i32) -> (i32, i32) {
    %c0_i32 = arith.constant 0 : i32
    %c0_i32_0 = arith.constant 0 : i32
    return %arg0, %c0_i32 : i32, i32
  }
  func.func @transform_4(%arg0: i32) -> (i32, i32) {
    %c0_i32 = arith.constant 0 : i32
    %c0_i32_0 = arith.constant 0 : i32
    %c0_i32_1 = arith.constant 0 : i32
    return %c0_i32, %c0_i32_0 : i32, i32
  }
  func.func @transform_5(%arg0: i32) -> (i32, i32) {
    %c0_i32 = arith.constant 0 : i32
    %c0_i32_0 = arith.constant 0 : i32
    %c0_i32_1 = arith.constant 0 : i32
    return %c0_i32, %c0_i32_0 : i32, i32
  }
  func.func @transform_6(%arg0: i32) -> (i32, i32) {
    %c0_i32 = arith.constant 0 : i32
    %c0_i32_0 = arith.constant 0 : i32
    return %arg0, %c0_i32 : i32, i32
  }
  func.func @transform_7(%arg0: i32) -> (i32, i32) {
    %c0_i32 = arith.constant 0 : i32
    %c0_i32_0 = arith.constant 0 : i32
    return %arg0, %c0_i32 : i32, i32
  }
}

</mosaic_0001>

<llo_original>
// kernel: tpu_custom_call.1
$region0: #{tpu_custom_call.1}
  #allocation0 [shape = 'u32[]', space=smem, size = 0x4, offset = 0x4, fixed_abs, tag = 'smem constant byte address 0x4 - core index']
  #allocation1 [shape = 'u32[144,128]{1,0:T(1,128)}', space=vmem, size = 0x12000, scoped, tag = 'internal scratch']
  %s0 = inlined_call_operand.vmem [shape: f32[8,1024], index: 0, kind: input, shape index: {}]
  %s1 = inlined_call_operand.hbm [shape: bf16[8,128,512], index: 1, kind: input, shape index: {}]
  %s2 = inlined_call_operand.hbm [shape: bf16[8,128,128], index: 2, kind: input, shape index: {}]
  %s3 = inlined_call_operand.vmem [shape: s32[8,128], index: 3, kind: input, shape index: {}]
  %s4 = inlined_call_operand.hbm [shape: f32[1024,128], index: 4, kind: input, shape index: {}]
  %s5 = inlined_call_operand.vmem [shape: f32[128,1], index: 5, kind: input, shape index: {}]
  %s6 = inlined_call_operand.hbm [shape: f32[8,512], index: 6, kind: output, shape index: {0}]
  %s7 = inlined_call_operand.hbm [shape: f32[8,128], index: 7, kind: output, shape index: {1}]
  %8 = xla_tuple %s6, %s7
  %s9 = sld [smem:[#allocation0]]
  $region54: #{tpu_custom_call.1} parent=0
    _
  %s11 = ssub.s32 1, %s9
  %s12 = scalar_select 0, %s11, %s9
  $region1: #{tpu_custom_call.1} parent=0
    #allocation2 [shape = 'u8[1048576]{0}', space=vmem, size = 0x100000, scoped, tag = 'input window, operand 1, single buffered']
    #allocation3 [shape = 's32[1]{0}', space=sflag, size = 0x4, scoped, tag = 'scoped memory for tpu_custom_call.1']
    #allocation4 [shape = 's32[1]{0}', space=sflag, size = 0x4, scoped, tag = 'scoped memory for tpu_custom_call.1']
    #allocation5 [shape = 'u8[262144]{0}', space=vmem, size = 0x40000, scoped, tag = 'input window, operand 2, single buffered']
    #allocation6 [shape = 's32[1]{0}', space=sflag, size = 0x4, scoped, tag = 'scoped memory for tpu_custom_call.1']
    #allocation7 [shape = 'u8[524288]{0}', space=vmem, size = 0x80000, scoped, tag = 'input window, operand 4, single buffered']
    #allocation8 [shape = 'u8[16384]{0}', space=vmem, size = 0x4000, scoped, tag = 'output window, operand 0, single buffered']
    #allocation9 [shape = 'u8[4096]{0}', space=vmem, size = 0x1000, scoped, tag = 'output window, operand 1, single buffered']
    #allocation10 [shape = 's32[1]{0}', space=sflag, size = 0x4, scoped, tag = 'scoped memory for tpu_custom_call.1']
    %13 = vsyncpa [#allocation3], 0
    %14 = vsyncpa [#allocation6], 0
    %15 = vsyncpa [#allocation4], 0
    %16 = vsyncpa [#allocation10], 0
    // Predicated region
    $region2: #{tpu_custom_call.1} parent=1 // pred_check
      _
    $region3: #{tpu_custom_call.1} parent=1 // pred_check_branch
      %18 = sbr.rel (0) target = $region5
    $region4: #{tpu_custom_call.1} parent=1 // pred_region
      _
    $region5: #{tpu_custom_call.1} parent=1 // pred_fallthru
      _
    // Predicated region
    $region6: #{tpu_custom_call.1} parent=1 // pred_check
      _
    $region7: #{tpu_custom_call.1} parent=1 // pred_check_branch
      %20 = sbr.rel (0) target = $region9
    $region8: #{tpu_custom_call.1} parent=1 // pred_region
      %s22 = ssub.s32 32768, 32768
      %23 = vsyncadd [#allocation3], %s22
      %s24 = sshll.u32 [#allocation2], 4
      %s25 = int_to_ptr.vmem [resolvable:$true] %s24
      %30 = dma.hbm_to_vmem [thread:$0]  %s1, 32768, %s25, [#allocation3], 256, 256, 16
    $region9: #{tpu_custom_call.1} parent=1 // pred_fallthru
      _
    // Predicated region
    $region10: #{tpu_custom_call.1} parent=1 // pred_check
      _
    $region11: #{tpu_custom_call.1} parent=1 // pred_check_branch
      %32 = sbr.rel (0) target = $region13
    $region12: #{tpu_custom_call.1} parent=1 // pred_region
      %s34 = ssub.s32 8192, 8192
      %35 = vsyncadd [#allocation6], %s34
      %s36 = sshll.u32 [#allocation5], 4
      %s37 = int_to_ptr.vmem [resolvable:$true] %s36
      %42 = dma.hbm_to_vmem [thread:$0]  %s2, 8192, %s37, [#allocation6], 64, 64, 4
    $region13: #{tpu_custom_call.1} parent=1 // pred_fallthru
      _
    // Predicated region
    $region14: #{tpu_custom_call.1} parent=1 // pred_check
      _
    $region15: #{tpu_custom_call.1} parent=1 // pred_check_branch
      %44 = sbr.rel (0) target = $region17
    $region16: #{tpu_custom_call.1} parent=1 // pred_region
      _
    $region17: #{tpu_custom_call.1} parent=1 // pred_fallthru
      _
    // Predicated region
    $region18: #{tpu_custom_call.1} parent=1 // pred_check
      _
    $region19: #{tpu_custom_call.1} parent=1 // pred_check_branch
      %46 = sbr.rel (0) target = $region21
    $region20: #{tpu_custom_call.1} parent=1 // pred_region
      %s48 = ssub.s32 16384, 16384
      %49 = vsyncadd [#allocation6], %s48
      %s50 = sshll.u32 [#allocation7], 4
      %s51 = int_to_ptr.vmem [resolvable:$true] %s50
      %56 = dma.hbm_to_vmem [thread:$0]  %s4, 16384, %s51, [#allocation6], 128, 128, 8
    $region21: #{tpu_custom_call.1} parent=1 // pred_fallthru
      _
    // Predicated region
    $region22: #{tpu_custom_call.1} parent=1 // pred_check
      _
    $region23: #{tpu_custom_call.1} parent=1 // pred_check_branch
      %58 = sbr.rel (0) target = $region25
    $region24: #{tpu_custom_call.1} parent=1 // pred_region
      _
    $region25: #{tpu_custom_call.1} parent=1 // pred_fallthru
      _
    // Predicated region
    $region26: #{tpu_custom_call.1} parent=1 // pred_check
      _
    $region27: #{tpu_custom_call.1} parent=1 // pred_check_branch
      %60 = sbr.rel (0) target = $region29
    $region28: #{tpu_custom_call.1} parent=1 // pred_region
      %61 = dma.done [#allocation3], 32768
    $region29: #{tpu_custom_call.1} parent=1 // pred_fallthru
      _
    // Predicated region
    $region30: #{tpu_custom_call.1} parent=1 // pred_check
      _
    $region31: #{tpu_custom_call.1} parent=1 // pred_check_branch
      %63 = sbr.rel (0) target = $region33
    $region32: #{tpu_custom_call.1} parent=1 // pred_region
      %64 = dma.done [#allocation6], 8192
    $region33: #{tpu_custom_call.1} parent=1 // pred_fallthru
      _
    // Predicated region
    $region34: #{tpu_custom_call.1} parent=1 // pred_check
      _
    $region35: #{tpu_custom_call.1} parent=1 // pred_check_branch
      %66 = sbr.rel (0) target = $region37
    $region36: #{tpu_custom_call.1} parent=1 // pred_region
      %67 = dma.done [#allocation6], 16384
    $region37: #{tpu_custom_call.1} parent=1 // pred_fallthru
      _
    %v69 = vld [vmem:[%s0] sm:$0xff]
    %v70 = vld [vmem:[%s0 + $0x8] sm:$0xff]
    %v71 = vld [vmem:[%s0 + $0x10] sm:$0xff]
    %v72 = vld [vmem:[%s0 + $0x18] sm:$0xff]
    %v73 = vld [vmem:[%s0 + $0x20] sm:$0xff]
    %v74 = vld [vmem:[%s0 + $0x28] sm:$0xff]
    %v75 = vld [vmem:[%s0 + $0x30] sm:$0xff]
    %v76 = vld [vmem:[%s0 + $0x38] sm:$0xff]
    %v77 = vld [vmem:[#allocation7] sm:$0xff]
    %v78 = vld [vmem:[#allocation7 + $0x8] sm:$0xff]
    %v79 = vld [vmem:[#allocation7 + $0x10] sm:$0xff]
    %v80 = vld [vmem:[#allocation7 + $0x18] sm:$0xff]
    %v81 = vld [vmem:[#allocation7 + $0x20] sm:$0xff]
    %v82 = vld [vmem:[#allocation7 + $0x28] sm:$0xff]
    %v83 = vld [vmem:[#allocation7 + $0x30] sm:$0xff]
    %v84 = vld [vmem:[#allocation7 + $0x38] sm:$0xff]
    %v85 = vld [vmem:[#allocation7 + $0x40] sm:$0xff]
    %v86 = vld [vmem:[#allocation7 + $0x48] sm:$0xff]
    %v87 = vld [vmem:[#allocation7 + $0x50] sm:$0xff]
    %v88 = vld [vmem:[#allocation7 + $0x58] sm:$0xff]
    %v89 = vld [vmem:[#allocation7 + $0x60] sm:$0xff]
    %v90 = vld [vmem:[#allocation7 + $0x68] sm:$0xff]
    %v91 = vld [vmem:[#allocation7 + $0x70] sm:$0xff]
    %v92 = vld [vmem:[#allocation7 + $0x78] sm:$0xff]
    %v93 = vld [vmem:[#allocation7 + $0x80] sm:$0xff]
    %v94 = vld [vmem:[#allocation7 + $0x88] sm:$0xff]
    %v95 = vld [vmem:[#allocation7 + $0x90] sm:$0xff]
    %v96 = vld [vmem:[#allocation7 + $0x98] sm:$0xff]
    %v97 = vld [vmem:[#allocation7 + $0xa0] sm:$0xff]
    %v98 = vld [vmem:[#allocation7 + $0xa8] sm:$0xff]
    %v99 = vld [vmem:[#allocation7 + $0xb0] sm:$0xff]
    %v100 = vld [vmem:[#allocation7 + $0xb8] sm:$0xff]
    %v101 = vld [vmem:[#allocation7 + $0xc0] sm:$0xff]
    %v102 = vld [vmem:[#allocation7 + $0xc8] sm:$0xff]
    %v103 = vld [vmem:[#allocation7 + $0xd0] sm:$0xff]
    %v104 = vld [vmem:[#allocation7 + $0xd8] sm:$0xff]
    %v105 = vld [vmem:[#allocation7 + $0xe0] sm:$0xff]
    %v106 = vld [vmem:[#allocation7 + $0xe8] sm:$0xff]
    %v107 = vld [vmem:[#allocation7 + $0xf0] sm:$0xff]
    %v108 = vld [vmem:[#allocation7 + $0xf8] sm:$0xff]
    %v109 = vld [vmem:[#allocation7 + $0x100] sm:$0xff]
    %v110 = vld [vmem:[#allocation7 + $0x108] sm:$0xff]
    %v111 = vld [vmem:[#allocation7 + $0x110] sm:$0xff]
    %v112 = vld [vmem:[#allocation7 + $0x118] sm:$0xff]
    %v113 = vld [vmem:[#allocation7 + $0x120] sm:$0xff]
    %v114 = vld [vmem:[#allocation7 + $0x128] sm:$0xff]
    %v115 = vld [vmem:[#allocation7 + $0x130] sm:$0xff]
    %v116 = vld [vmem:[#allocation7 + $0x138] sm:$0xff]
    %v117 = vld [vmem:[#allocation7 + $0x140] sm:$0xff]
    %v118 = vld [vmem:[#allocation7 + $0x148] sm:$0xff]
    %v119 = vld [vmem:[#allocation7 + $0x150] sm:$0xff]
    %v120 = vld [vmem:[#allocation7 + $0x158] sm:$0xff]
    %v121 = vld [vmem:[#allocation7 + $0x160] sm:$0xff]
    %v122 = vld [vmem:[#allocation7 + $0x168] sm:$0xff]
    %v123 = vld [vmem:[#allocation7 + $0x170] sm:$0xff]
    %v124 = vld [vmem:[#allocation7 + $0x178] sm:$0xff]
    %v125 = vld [vmem:[#allocation7 + $0x180] sm:$0xff]
    %v126 = vld [vmem:[#allocation7 + $0x188] sm:$0xff]
    %v127 = vld [vmem:[#allocation7 + $0x190] sm:$0xff]
    %v128 = vld [vmem:[#allocation7 + $0x198] sm:$0xff]
    %v129 = vld [vmem:[#allocation7 + $0x1a0] sm:$0xff]
    %v130 = vld [vmem:[#allocation7 + $0x1a8] sm:$0xff]
    %v131 = vld [vmem:[#allocation7 + $0x1b0] sm:$0xff]
    %v132 = vld [vmem:[#allocation7 + $0x1b8] sm:$0xff]
    %v133 = vld [vmem:[#allocation7 + $0x1c0] sm:$0xff]
    %v134 = vld [vmem:[#allocation7 + $0x1c8] sm:$0xff]
    %v135 = vld [vmem:[#allocation7 + $0x1d0] sm:$0xff]
    %v136 = vld [vmem:[#allocation7 + $0x1d8] sm:$0xff]
    %v137 = vld [vmem:[#allocation7 + $0x1e0] sm:$0xff]
    %v138 = vld [vmem:[#allocation7 + $0x1e8] sm:$0xff]
    %v139 = vld [vmem:[#allocation7 + $0x1f0] sm:$0xff]
    %v140 = vld [vmem:[#allocation7 + $0x1f8] sm:$0xff]
    %v141 = vld [vmem:[#allocation7 + $0x200] sm:$0xff]
    %v142 = vld [vmem:[#allocation7 + $0x208] sm:$0xff]
    %v143 = vld [vmem:[#allocation7 + $0x210] sm:$0xff]
    %v144 = vld [vmem:[#allocation7 + $0x218] sm:$0xff]
    %v145 = vld [vmem:[#allocation7 + $0x220] sm:$0xff]
    %v146 = vld [vmem:[#allocation7 + $0x228] sm:$0xff]
    %v147 = vld [vmem:[#allocation7 + $0x230] sm:$0xff]
    %v148 = vld [vmem:[#allocation7 + $0x238] sm:$0xff]
    %v149 = vld [vmem:[#allocation7 + $0x240] sm:$0xff]
    %v150 = vld [vmem:[#allocation7 + $0x248] sm:$0xff]
    %v151 = vld [vmem:[#allocation7 + $0x250] sm:$0xff]
    %v152 = vld [vmem:[#allocation7 + $0x258] sm:$0xff]
    %v153 = vld [vmem:[#allocation7 + $0x260] sm:$0xff]
    %v154 = vld [vmem:[#allocation7 + $0x268] sm:$0xff]
    %v155 = vld [vmem:[#allocation7 + $0x270] sm:$0xff]
    %v156 = vld [vmem:[#allocation7 + $0x278] sm:$0xff]
    %v157 = vld [vmem:[#allocation7 + $0x280] sm:$0xff]
    %v158 = vld [vmem:[#allocation7 + $0x288] sm:$0xff]
    %v159 = vld [vmem:[#allocation7 + $0x290] sm:$0xff]
    %v160 = vld [vmem:[#allocation7 + $0x298] sm:$0xff]
    %v161 = vld [vmem:[#allocation7 + $0x2a0] sm:$0xff]
    %v162 = vld [vmem:[#allocation7 + $0x2a8] sm:$0xff]
    %v163 = vld [vmem:[#allocation7 + $0x2b0] sm:$0xff]
    %v164 = vld [vmem:[#allocation7 + $0x2b8] sm:$0xff]
    %v165 = vld [vmem:[#allocation7 + $0x2c0] sm:$0xff]
    %v166 = vld [vmem:[#allocation7 + $0x2c8] sm:$0xff]
    %v167 = vld [vmem:[#allocation7 + $0x2d0] sm:$0xff]
    %v168 = vld [vmem:[#allocation7 + $0x2d8] sm:$0xff]
    %v169 = vld [vmem:[#allocation7 + $0x2e0] sm:$0xff]
    %v170 = vld [vmem:[#allocation7 + $0x2e8] sm:$0xff]
    %v171 = vld [vmem:[#allocation7 + $0x2f0] sm:$0xff]
    %v172 = vld [vmem:[#allocation7 + $0x2f8] sm:$0xff]
    %v173 = vld [vmem:[#allocation7 + $0x300] sm:$0xff]
    %v174 = vld [vmem:[#allocation7 + $0x308] sm:$0xff]
    %v175 = vld [vmem:[#allocation7 + $0x310] sm:$0xff]
    %v176 = vld [vmem:[#allocation7 + $0x318] sm:$0xff]
    %v177 = vld [vmem:[#allocation7 + $0x320] sm:$0xff]
    %v178 = vld [vmem:[#allocation7 + $0x328] sm:$0xff]
    %v179 = vld [vmem:[#allocation7 + $0x330] sm:$0xff]
    %v180 = vld [vmem:[#allocation7 + $0x338] sm:$0xff]
    %v181 = vld [vmem:[#allocation7 + $0x340] sm:$0xff]
    %v182 = vld [vmem:[#allocation7 + $0x348] sm:$0xff]
    %v183 = vld [vmem:[#allocation7 + $0x350] sm:$0xff]
    %v184 = vld [vmem:[#allocation7 + $0x358] sm:$0xff]
    %v185 = vld [vmem:[#allocation7 + $0x360] sm:$0xff]
    %v186 = vld [vmem:[#allocation7 + $0x368] sm:$0xff]
    %v187 = vld [vmem:[#allocation7 + $0x370] sm:$0xff]
    %v188 = vld [vmem:[#allocation7 + $0x378] sm:$0xff]
    %v189 = vld [vmem:[#allocation7 + $0x380] sm:$0xff]
    %v190 = vld [vmem:[#allocation7 + $0x388] sm:$0xff]
    %v191 = vld [vmem:[#allocation7 + $0x390] sm:$0xff]
    %v192 = vld [vmem:[#allocation7 + $0x398] sm:$0xff]
    %v193 = vld [vmem:[#allocation7 + $0x3a0] sm:$0xff]
    %v194 = vld [vmem:[#allocation7 + $0x3a8] sm:$0xff]
    %v195 = vld [vmem:[#allocation7 + $0x3b0] sm:$0xff]
    %v196 = vld [vmem:[#allocation7 + $0x3b8] sm:$0xff]
    %v197 = vld [vmem:[#allocation7 + $0x3c0] sm:$0xff]
    %v198 = vld [vmem:[#allocation7 + $0x3c8] sm:$0xff]
    %v199 = vld [vmem:[#allocation7 + $0x3d0] sm:$0xff]
    %v200 = vld [vmem:[#allocation7 + $0x3d8] sm:$0xff]
    %v201 = vld [vmem:[#allocation7 + $0x3e0] sm:$0xff]
    %v202 = vld [vmem:[#allocation7 + $0x3e8] sm:$0xff]
    %v203 = vld [vmem:[#allocation7 + $0x3f0] sm:$0xff]
    %v204 = vld [vmem:[#allocation7 + $0x3f8] sm:$0xff]
    %205 = vmatprep.subr.mxu0 0.0
    %206 = vmatpush1.msra.mxu0 %v77
    %207 = vmatprep.subr.mxu0 0.0
    %208 = vmatpush1.msra.mxu0 %v78
    %209 = vmatprep.subr.mxu0 0.0
    %210 = vmatpush1.msra.mxu0 %v79
    %211 = vmatprep.subr.mxu0 0.0
    %212 = vmatpush1.msra.mxu0 %v80
    %213 = vmatprep.subr.mxu0 0.0
    %214 = vmatpush1.msra.mxu0 %v81
    %215 = vmatprep.subr.mxu0 0.0
    %216 = vmatpush1.msra.mxu0 %v82
    %217 = vmatprep.subr.mxu0 0.0
    %218 = vmatpush1.msra.mxu0 %v83
    %219 = vmatprep.subr.mxu0 0.0
    %220 = vmatpush1.msra.mxu0 %v84
    %221 = vmatprep.subr.mxu0 0.0
    %222 = vmatpush1.msra.mxu0 %v85
    %223 = vmatprep.subr.mxu0 0.0
    %224 = vmatpush1.msra.mxu0 %v86
    %225 = vmatprep.subr.mxu0 0.0
    %226 = vmatpush1.msra.mxu0 %v87
    %227 = vmatprep.subr.mxu0 0.0
    %228 = vmatpush1.msra.mxu0 %v88
    %229 = vmatprep.subr.mxu0 0.0
    %230 = vmatpush1.msra.mxu0 %v89
    %231 = vmatprep.subr.mxu0 0.0
    %232 = vmatpush1.msra.mxu0 %v90
    %233 = vmatprep.subr.mxu0 0.0
    %234 = vmatpush1.msra.mxu0 %v91
    %235 = vmatprep.subr.mxu0 0.0
    %236 = vmatpush1.msra.mxu0 %v92
    %237 = vmatprep.subr.mxu0 0.0
    %238 = vmatpush1.msra.mxu0 %v93
    %239 = vmatprep.subr.mxu0 0.0
    %240 = vmatpush1.msra.mxu0 %v94
    %241 = vmatprep.subr.mxu0 0.0
    %242 = vmatpush1.msra.mxu0 %v95
    %243 = vmatprep.subr.mxu0 0.0
    %244 = vmatpush1.msra.mxu0 %v96
    %245 = vmatprep.subr.mxu0 0.0
    %246 = vmatpush1.msra.mxu0 %v97
    %247 = vmatprep.subr.mxu0 0.0
    %248 = vmatpush1.msra.mxu0 %v98
    %249 = vmatprep.subr.mxu0 0.0
    %250 = vmatpush1.msra.mxu0 %v99
    %251 = vmatprep.subr.mxu0 0.0
    %252 = vmatpush1.msra.mxu0 %v100
    %253 = vmatprep.subr.mxu0 0.0
    %254 = vmatpush1.msra.mxu0 %v101
    %255 = vmatprep.subr.mxu0 0.0
    %256 = vmatpush1.msra.mxu0 %v102
    %257 = vmatprep.subr.mxu0 0.0
    %258 = vmatpush1.msra.mxu0 %v103
    %259 = vmatprep.subr.mxu0 0.0
    %260 = vmatpush1.msra.mxu0 %v104
    %261 = vmatprep.subr.mxu0 0.0
    %262 = vmatpush1.msra.mxu0 %v105
    %263 = vmatprep.subr.mxu0 0.0
    %264 = vmatpush1.msra.mxu0 %v106
    %265 = vmatprep.subr.mxu0 0.0
    %266 = vmatpush1.msra.mxu0 %v107
    %267 = vmatprep.subr.mxu0 0.0
    %268 = vmatpush1.msra.mxu0 %v108
    %269 = vmatprep.mubr.f32.mxu0 %v70
    %270 = vmatmul.mubr.f32.gmra.mrb[0].mxu0 %v69
    %v271 = vpop.f32.mrb[0].mxu0
    %v272 = vadd.f32 0.0, %v271
    %v273 = vpop.f32.mrb[0].mxu0
    %274 = vdwg.mxu0
    %275 = vmatprep.subr.mxu0 0.0
    %276 = vmatpush1.msra.mxu0 %v109
    %277 = vmatprep.subr.mxu0 0.0
    %278 = vmatpush1.msra.mxu0 %v110
    %279 = vmatprep.subr.mxu0 0.0
    %280 = vmatpush1.msra.mxu0 %v111
    %281 = vmatprep.subr.mxu0 0.0
    %282 = vmatpush1.msra.mxu0 %v112
    %283 = vmatprep.subr.mxu0 0.0
    %284 = vmatpush1.msra.mxu0 %v113
    %285 = vmatprep.subr.mxu0 0.0
    %286 = vmatpush1.msra.mxu0 %v114
    %287 = vmatprep.subr.mxu0 0.0
    %288 = vmatpush1.msra.mxu0 %v115
    %289 = vmatprep.subr.mxu0 0.0
    %290 = vmatpush1.msra.mxu0 %v116
    %291 = vmatprep.subr.mxu0 0.0
    %292 = vmatpush1.msra.mxu0 %v117
    %293 = vmatprep.subr.mxu0 0.0
    %294 = vmatpush1.msra.mxu0 %v118
    %295 = vmatprep.subr.mxu0 0.0
    %296 = vmatpush1.msra.mxu0 %v119
    %297 = vmatprep.subr.mxu0 0.0
    %298 = vmatpush1.msra.mxu0 %v120
    %299 = vmatprep.subr.mxu0 0.0
    %300 = vmatpush1.msra.mxu0 %v121
    %301 = vmatprep.subr.mxu0 0.0
    %302 = vmatpush1.msra.mxu0 %v122
    %303 = vmatprep.subr.mxu0 0.0
    %304 = vmatpush1.msra.mxu0 %v123
    %305 = vmatprep.subr.mxu0 0.0
    %306 = vmatpush1.msra.mxu0 %v124
    %307 = vmatprep.subr.mxu0 0.0
    %308 = vmatpush1.msra.mxu0 %v125
    %309 = vmatprep.subr.mxu0 0.0
    %310 = vmatpush1.msra.mxu0 %v126
    %311 = vmatprep.subr.mxu0 0.0
    %312 = vmatpush1.msra.mxu0 %v127
    %313 = vmatprep.subr.mxu0 0.0
    %314 = vmatpush1.msra.mxu0 %v128
    %315 = vmatprep.subr.mxu0 0.0
    %316 = vmatpush1.msra.mxu0 %v129
    %317 = vmatprep.subr.mxu0 0.0
    %318 = vmatpush1.msra.mxu0 %v130
    %319 = vmatprep.subr.mxu0 0.0
    %320 = vmatpush1.msra.mxu0 %v131
    %321 = vmatprep.subr.mxu0 0.0
    %322 = vmatpush1.msra.mxu0 %v132
    %323 = vmatprep.subr.mxu0 0.0
    %324 = vmatpush1.msra.mxu0 %v133
    %325 = vmatprep.subr.mxu0 0.0
    %326 = vmatpush1.msra.mxu0 %v134
    %327 = vmatprep.subr.mxu0 0.0
    %328 = vmatpush1.msra.mxu0 %v135
    %329 = vmatprep.subr.mxu0 0.0
    %330 = vmatpush1.msra.mxu0 %v136
    %331 = vmatprep.subr.mxu0 0.0
    %332 = vmatpush1.msra.mxu0 %v137
    %333 = vmatprep.subr.mxu0 0.0
    %334 = vmatpush1.msra.mxu0 %v138
    %335 = vmatprep.subr.mxu0 0.0
    %336 = vmatpush1.msra.mxu0 %v139
    %337 = vmatprep.subr.mxu0 0.0
    %338 = vmatpush1.msra.mxu0 %v140
    %339 = vmatprep.mubr.f32.mxu0 %v72
    %340 = vmatmul.mubr.f32.gmra.mrb[0].mxu0 %v71
    %v341 = vpop.f32.mrb[0].mxu0
    %v342 = vadd.f32 %v272, %v341
    %v343 = vpop.f32.mrb[0].mxu0
    %344 = vdwg.mxu0
    %345 = vmatprep.subr.mxu0 0.0
    %346 = vmatpush1.msra.mxu0 %v141
    %347 = vmatprep.subr.mxu0 0.0
    %348 = vmatpush1.msra.mxu0 %v142
    %349 = vmatprep.subr.mxu0 0.0
    %350 = vmatpush1.msra.mxu0 %v143
    %351 = vmatprep.subr.mxu0 0.0
    %352 = vmatpush1.msra.mxu0 %v144
    %353 = vmatprep.subr.mxu0 0.0
    %354 = vmatpush1.msra.mxu0 %v145
    %355 = vmatprep.subr.mxu0 0.0
    %356 = vmatpush1.msra.mxu0 %v146
    %357 = vmatprep.subr.mxu0 0.0
    %358 = vmatpush1.msra.mxu0 %v147
    %359 = vmatprep.subr.mxu0 0.0
    %360 = vmatpush1.msra.mxu0 %v148
    %361 = vmatprep.subr.mxu0 0.0
    %362 = vmatpush1.msra.mxu0 %v149
    %363 = vmatprep.subr.mxu0 0.0
    %364 = vmatpush1.msra.mxu0 %v150
    %365 = vmatprep.subr.mxu0 0.0
    %366 = vmatpush1.msra.mxu0 %v151
    %367 = vmatprep.subr.mxu0 0.0
    %368 = vmatpush1.msra.mxu0 %v152
    %369 = vmatprep.subr.mxu0 0.0
    %370 = vmatpush1.msra.mxu0 %v153
    %371 = vmatprep.subr.mxu0 0.0
    %372 = vmatpush1.msra.mxu0 %v154
    %373 = vmatprep.subr.mxu0 0.0
    %374 = vmatpush1.msra.mxu0 %v155
    %375 = vmatprep.subr.mxu0 0.0
    %376 = vmatpush1.msra.mxu0 %v156
    %377 = vmatprep.subr.mxu0 0.0
    %378 = vmatpush1.msra.mxu0 %v157
    %379 = vmatprep.subr.mxu0 0.0
    %380 = vmatpush1.msra.mxu0 %v158
    %381 = vmatprep.subr.mxu0 0.0
    %382 = vmatpush1.msra.mxu0 %v159
    %383 = vmatprep.subr.mxu0 0.0
    %384 = vmatpush1.msra.mxu0 %v160
    %385 = vmatprep.subr.mxu0 0.0
    %386 = vmatpush1.msra.mxu0 %v161
    %387 = vmatprep.subr.mxu0 0.0
    %388 = vmatpush1.msra.mxu0 %v162
    %389 = vmatprep.subr.mxu0 0.0
    %390 = vmatpush1.msra.mxu0 %v163
    %391 = vmatprep.subr.mxu0 0.0
    %392 = vmatpush1.msra.mxu0 %v164
    %393 = vmatprep.subr.mxu0 0.0
    %394 = vmatpush1.msra.mxu0 %v165
    %395 = vmatprep.subr.mxu0 0.0
    %396 = vmatpush1.msra.mxu0 %v166
    %397 = vmatprep.subr.mxu0 0.0
    %398 = vmatpush1.msra.mxu0 %v167
    %399 = vmatprep.subr.mxu0 0.0
    %400 = vmatpush1.msra.mxu0 %v168
    %401 = vmatprep.subr.mxu0 0.0
    %402 = vmatpush1.msra.mxu0 %v169
    %403 = vmatprep.subr.mxu0 0.0
    %404 = vmatpush1.msra.mxu0 %v170
    %405 = vmatprep.subr.mxu0 0.0
    %406 = vmatpush1.msra.mxu0 %v171
    %407 = vmatprep.subr.mxu0 0.0
    %408 = vmatpush1.msra.mxu0 %v172
    %409 = vmatprep.mubr.f32.mxu0 %v74
    %410 = vmatmul.mubr.f32.gmra.mrb[0].mxu0 %v73
    %v411 = vpop.f32.mrb[0].mxu0
    %v412 = vadd.f32 %v342, %v411
    %v413 = vpop.f32.mrb[0].mxu0
    %414 = vdwg.mxu0
    %415 = vmatprep.subr.mxu0 0.0
    %416 = vmatpush1.msra.mxu0 %v173
    %417 = vmatprep.subr.mxu0 0.0
    %418 = vmatpush1.msra.mxu0 %v174
    %419 = vmatprep.subr.mxu0 0.0
    %420 = vmatpush1.msra.mxu0 %v175
    %421 = vmatprep.subr.mxu0 0.0
    %422 = vmatpush1.msra.mxu0 %v176
    %423 = vmatprep.subr.mxu0 0.0
    %424 = vmatpush1.msra.mxu0 %v177
    %425 = vmatprep.subr.mxu0 0.0
    %426 = vmatpush1.msra.mxu0 %v178
    %427 = vmatprep.subr.mxu0 0.0
    %428 = vmatpush1.msra.mxu0 %v179
    %429 = vmatprep.subr.mxu0 0.0
    %430 = vmatpush1.msra.mxu0 %v180
    %431 = vmatprep.subr.mxu0 0.0
    %432 = vmatpush1.msra.mxu0 %v181
    %433 = vmatprep.subr.mxu0 0.0
    %434 = vmatpush1.msra.mxu0 %v182
    %435 = vmatprep.subr.mxu0 0.0
    %436 = vmatpush1.msra.mxu0 %v183
    %437 = vmatprep.subr.mxu0 0.0
    %438 = vmatpush1.msra.mxu0 %v184
    %439 = vmatprep.subr.mxu0 0.0
    %440 = vmatpush1.msra.mxu0 %v185
    %441 = vmatprep.subr.mxu0 0.0
    %442 = vmatpush1.msra.mxu0 %v186
    %443 = vmatprep.subr.mxu0 0.0
    %444 = vmatpush1.msra.mxu0 %v187
    %445 = vmatprep.subr.mxu0 0.0
    %446 = vmatpush1.msra.mxu0 %v188
    %447 = vmatprep.subr.mxu0 0.0
    %448 = vmatpush1.msra.mxu0 %v189
    %449 = vmatprep.subr.mxu0 0.0
    %450 = vmatpush1.msra.mxu0 %v190
    %451 = vmatprep.subr.mxu0 0.0
    %452 = vmatpush1.msra.mxu0 %v191
    %453 = vmatprep.subr.mxu0 0.0
    %454 = vmatpush1.msra.mxu0 %v192
    %455 = vmatprep.subr.mxu0 0.0
    %456 = vmatpush1.msra.mxu0 %v193
    %457 = vmatprep.subr.mxu0 0.0
    %458 = vmatpush1.msra.mxu0 %v194
    %459 = vmatprep.subr.mxu0 0.0
    %460 = vmatpush1.msra.mxu0 %v195
    %461 = vmatprep.subr.mxu0 0.0
    %462 = vmatpush1.msra.mxu0 %v196
    %463 = vmatprep.subr.mxu0 0.0
    %464 = vmatpush1.msra.mxu0 %v197
    %465 = vmatprep.subr.mxu0 0.0
    %466 = vmatpush1.msra.mxu0 %v198
    %467 = vmatprep.subr.mxu0 0.0
    %468 = vmatpush1.msra.mxu0 %v199
    %469 = vmatprep.subr.mxu0 0.0
    %470 = vmatpush1.msra.mxu0 %v200
    %471 = vmatprep.subr.mxu0 0.0
    %472 = vmatpush1.msra.mxu0 %v201
    %473 = vmatprep.subr.mxu0 0.0
    %474 = vmatpush1.msra.mxu0 %v202
    %475 = vmatprep.subr.mxu0 0.0
    %476 = vmatpush1.msra.mxu0 %v203
    %477 = vmatprep.subr.mxu0 0.0
    %478 = vmatpush1.msra.mxu0 %v204
    %479 = vmatprep.mubr.f32.mxu0 %v76
    %480 = vmatmul.mubr.f32.gmra.mrb[0].mxu0 %v75
    %v481 = vpop.f32.mrb[0].mxu0
    %v482 = vadd.f32 %v412, %v481
    %v483 = vpop.f32.mrb[0].mxu0
    %484 = vdwg.mxu0
    %v486 = vcombine.high %v482, %v482
    %v488 = vunpack.c.l.s4 1966171168
    %v489 = vunpack.c.0.s8 %v488
    %v490 = vlaneseq
    %v491 = vshrl.u32 %v490, 7
    %v492 = vsub.s32 %v489, %v491
    %v493 = vrot.slane %v482, %v492
    %v495 = vunpack.c.l.s4 1966171168
    %v496 = vunpack.c.0.s8 %v495
    %v497 = vlaneseq
    %v498 = vshrl.u32 %v497, 7
    %v499 = vsub.s32 %v496, %v498
    %v500 = vrot.slane %v486, %v499
    %v501 = vcombine.high %v493, %v493
    %v502 = vcombine.high %v500, %v500
    %v504 = vunpack.c.l.s4 1966171168
    %v505 = vunpack.c.0.s8 %v504
    %v506 = vlaneseq
    %v507 = vshrl.u32 %v506, 7
    %v508 = vsub.s32 %v505, %v507
    %v509 = vrot.slane %v493, %v508
    %v511 = vunpack.c.l.s4 1966171168
    %v512 = vunpack.c.0.s8 %v511
    %v513 = vlaneseq
    %v514 = vshrl.u32 %v513, 7
    %v515 = vsub.s32 %v512, %v514
    %v516 = vrot.slane %v500, %v515
    %v518 = vunpack.c.l.s4 1966171168
    %v519 = vunpack.c.0.s8 %v518
    %v520 = vlaneseq
    %v521 = vshrl.u32 %v520, 7
    %v522 = vsub.s32 %v519, %v521
    %v523 = vrot.slane %v501, %v522
    %v525 = vunpack.c.l.s4 1966171168
    %v526 = vunpack.c.0.s8 %v525
    %v527 = vlaneseq
    %v528 = vshrl.u32 %v527, 7
    %v529 = vsub.s32 %v526, %v528
    %v530 = vrot.slane %v502, %v529
    %v531 = vcombine.high %v509, %v509
    %v532 = vcombine.high %v516, %v516
    %v533 = vcombine.high %v523, %v523
    %v534 = vcombine.high %v530, %v530
    %v535 = vld [vmem:[#allocation5] sm:$0xf]
    %v536 = vld [vmem:[#allocation5 + $0x4] sm:$0xf]
    %v537 = vld [vmem:[#allocation5 + $0x8] sm:$0xf]
    %v538 = vld [vmem:[#allocation5 + $0xc] sm:$0xf]
    %v539 = vld [vmem:[#allocation5 + $0x10] sm:$0xf]
    %v540 = vld [vmem:[#allocation5 + $0x14] sm:$0xf]
    %v541 = vld [vmem:[#allocation5 + $0x18] sm:$0xf]
    %v542 = vld [vmem:[#allocation5 + $0x1c] sm:$0xf]
    %v543 = vld [vmem:[#allocation5 + $0x20] sm:$0xf]
    %v544 = vld [vmem:[#allocation5 + $0x24] sm:$0xf]
    %v545 = vld [vmem:[#allocation5 + $0x28] sm:$0xf]
    %v546 = vld [vmem:[#allocation5 + $0x2c] sm:$0xf]
    %v547 = vld [vmem:[#allocation5 + $0x30] sm:$0xf]
    %v548 = vld [vmem:[#allocation5 + $0x34] sm:$0xf]
    %v549 = vld [vmem:[#allocation5 + $0x38] sm:$0xf]
    %v550 = vld [vmem:[#allocation5 + $0x3c] sm:$0xf]
    %v551 = vld [vmem:[#allocation5 + $0x40] sm:$0xf]
    %v552 = vld [vmem:[#allocation5 + $0x44] sm:$0xf]
    %v553 = vld [vmem:[#allocation5 + $0x48] sm:$0xf]
    %v554 = vld [vmem:[#allocation5 + $0x4c] sm:$0xf]
    %v555 = vld [vmem:[#allocation5 + $0x50] sm:$0xf]
    %v556 = vld [vmem:[#allocation5 + $0x54] sm:$0xf]
    %v557 = vld [vmem:[#allocation5 + $0x58] sm:$0xf]
    %v558 = vld [vmem:[#allocation5 + $0x5c] sm:$0xf]
    %v559 = vld [vmem:[#allocation5 + $0x60] sm:$0xf]
    %v560 = vld [vmem:[#allocation5 + $0x64] sm:$0xf]
    %v561 = vld [vmem:[#allocation5 + $0x68] sm:$0xf]
    %v562 = vld [vmem:[#allocation5 + $0x6c] sm:$0xf]
    %v563 = vld [vmem:[#allocation5 + $0x70] sm:$0xf]
    %v564 = vld [vmem:[#allocation5 + $0x74] sm:$0xf]
    %v565 = vld [vmem:[#allocation5 + $0x78] sm:$0xf]
    %v566 = vld [vmem:[#allocation5 + $0x7c] sm:$0xf]
    %v567 = vld [vmem:[#allocation5 + $0x80] sm:$0xf]
    %v568 = vld [vmem:[#allocation5 + $0x84] sm:$0xf]
    %v569 = vld [vmem:[#allocation5 + $0x88] sm:$0xf]
    %v570 = vld [vmem:[#allocation5 + $0x8c] sm:$0xf]
    %v571 = vld [vmem:[#allocation5 + $0x90] sm:$0xf]
    %v572 = vld [vmem:[#allocation5 + $0x94] sm:$0xf]
    %v573 = vld [vmem:[#allocation5 + $0x98] sm:$0xf]
    %v574 = vld [vmem:[#allocation5 + $0x9c] sm:$0xf]
    %v575 = vld [vmem:[#allocation5 + $0xa0] sm:$0xf]
    %v576 = vld [vmem:[#allocation5 + $0xa4] sm:$0xf]
    %v577 = vld [vmem:[#allocation5 + $0xa8] sm:$0xf]
    %v578 = vld [vmem:[#allocation5 + $0xac] sm:$0xf]
    %v579 = vld [vmem:[#allocation5 + $0xb0] sm:$0xf]
    %v580 = vld [vmem:[#allocation5 + $0xb4] sm:$0xf]
    %v581 = vld [vmem:[#allocation5 + $0xb8] sm:$0xf]
    %v582 = vld [vmem:[#allocation5 + $0xbc] sm:$0xf]
    %v583 = vld [vmem:[#allocation5 + $0xc0] sm:$0xf]
    %v584 = vld [vmem:[#allocation5 + $0xc4] sm:$0xf]
    %v585 = vld [vmem:[#allocation5 + $0xc8] sm:$0xf]
    %v586 = vld [vmem:[#allocation5 + $0xcc] sm:$0xf]
    %v587 = vld [vmem:[#allocation5 + $0xd0] sm:$0xf]
    %v588 = vld [vmem:[#allocation5 + $0xd4] sm:$0xf]
    %v589 = vld [vmem:[#allocation5 + $0xd8] sm:$0xf]
    %v590 = vld [vmem:[#allocation5 + $0xdc] sm:$0xf]
    %v591 = vld [vmem:[#allocation5 + $0xe0] sm:$0xf]
    %v592 = vld [vmem:[#allocation5 + $0xe4] sm:$0xf]
    %v593 = vld [vmem:[#allocation5 + $0xe8] sm:$0xf]
    %v594 = vld [vmem:[#allocation5 + $0xec] sm:$0xf]
    %v595 = vld [vmem:[#allocation5 + $0xf0] sm:$0xf]
    %v596 = vld [vmem:[#allocation5 + $0xf4] sm:$0xf]
    %v597 = vld [vmem:[#allocation5 + $0xf8] sm:$0xf]
    %v598 = vld [vmem:[#allocation5 + $0xfc] sm:$0xf]
    %v599 = vld [vmem:[#allocation5 + $0x100] sm:$0xf]
    %v600 = vld [vmem:[#allocation5 + $0x104] sm:$0xf]
    %v601 = vld [vmem:[#allocation5 + $0x108] sm:$0xf]
    %v602 = vld [vmem:[#allocation5 + $0x10c] sm:$0xf]
    %v603 = vld [vmem:[#allocation5 + $0x110] sm:$0xf]
    %v604 = vld [vmem:[#allocation5 + $0x114] sm:$0xf]
    %v605 = vld [vmem:[#allocation5 + $0x118] sm:$0xf]
    %v606 = vld [vmem:[#allocation5 + $0x11c] sm:$0xf]
    %v607 = vld [vmem:[#allocation5 + $0x120] sm:$0xf]
    %v608 = vld [vmem:[#allocation5 + $0x124] sm:$0xf]
    %v609 = vld [vmem:[#allocation5 + $0x128] sm:$0xf]
    %v610 = vld [vmem:[#allocation5 + $0x12c] sm:$0xf]
    %v611 = vld [vmem:[#allocation5 + $0x130] sm:$0xf]
    %v612 = vld [vmem:[#allocation5 + $0x134] sm:$0xf]
    %v613 = vld [vmem:[#allocation5 + $0x138] sm:$0xf]
    %v614 = vld [vmem:[#allocation5 + $0x13c] sm:$0xf]
    %v615 = vld [vmem:[#allocation5 + $0x140] sm:$0xf]
    %v616 = vld [vmem:[#allocation5 + $0x144] sm:$0xf]
    %v617 = vld [vmem:[#allocation5 + $0x148] sm:$0xf]
    %v618 = vld [vmem:[#allocation5 + $0x14c] sm:$0xf]
    %v619 = vld [vmem:[#allocation5 + $0x150] sm:$0xf]
    %v620 = vld [vmem:[#allocation5 + $0x154] sm:$0xf]
    %v621 = vld [vmem:[#allocation5 + $0x158] sm:$0xf]
    %v622 = vld [vmem:[#allocation5 + $0x15c] sm:$0xf]
    %v623 = vld [vmem:[#allocation5 + $0x160] sm:$0xf]
    %v624 = vld [vmem:[#allocation5 + $0x164] sm:$0xf]
    %v625 = vld [vmem:[#allocation5 + $0x168] sm:$0xf]
    %v626 = vld [vmem:[#allocation5 + $0x16c] sm:$0xf]
    %v627 = vld [vmem:[#allocation5 + $0x170] sm:$0xf]
    %v628 = vld [vmem:[#allocation5 + $0x174] sm:$0xf]
    %v629 = vld [vmem:[#allocation5 + $0x178] sm:$0xf]
    %v630 = vld [vmem:[#allocation5 + $0x17c] sm:$0xf]
    %v631 = vld [vmem:[#allocation5 + $0x180] sm:$0xf]
    %v632 = vld [vmem:[#allocation5 + $0x184] sm:$0xf]
    %v633 = vld [vmem:[#allocation5 + $0x188] sm:$0xf]
    %v634 = vld [vmem:[#allocation5 + $0x18c] sm:$0xf]
    %v635 = vld [vmem:[#allocation5 + $0x190] sm:$0xf]
    %v636 = vld [vmem:[#allocation5 + $0x194] sm:$0xf]
    %v637 = vld [vmem:[#allocation5 + $0x198] sm:$0xf]
    %v638 = vld [vmem:[#allocation5 + $0x19c] sm:$0xf]
    %v639 = vld [vmem:[#allocation5 + $0x1a0] sm:$0xf]
    %v640 = vld [vmem:[#allocation5 + $0x1a4] sm:$0xf]
    %v641 = vld [vmem:[#allocation5 + $0x1a8] sm:$0xf]
    %v642 = vld [vmem:[#allocation5 + $0x1ac] sm:$0xf]
    %v643 = vld [vmem:[#allocation5 + $0x1b0] sm:$0xf]
    %v644 = vld [vmem:[#allocation5 + $0x1b4] sm:$0xf]
    %v645 = vld [vmem:[#allocation5 + $0x1b8] sm:$0xf]
    %v646 = vld [vmem:[#allocation5 + $0x1bc] sm:$0xf]
    %v647 = vld [vmem:[#allocation5 + $0x1c0] sm:$0xf]
    %v648 = vld [vmem:[#allocation5 + $0x1c4] sm:$0xf]
    %v649 = vld [vmem:[#allocation5 + $0x1c8] sm:$0xf]
    %v650 = vld [vmem:[#allocation5 + $0x1cc] sm:$0xf]
    %v651 = vld [vmem:[#allocation5 + $0x1d0] sm:$0xf]
    %v652 = vld [vmem:[#allocation5 + $0x1d4] sm:$0xf]
    %v653 = vld [vmem:[#allocation5 + $0x1d8] sm:$0xf]
    %v654 = vld [vmem:[#allocation5 + $0x1dc] sm:$0xf]
    %v655 = vld [vmem:[#allocation5 + $0x1e0] sm:$0xf]
    %v656 = vld [vmem:[#allocation5 + $0x1e4] sm:$0xf]
    %v657 = vld [vmem:[#allocation5 + $0x1e8] sm:$0xf]
    %v658 = vld [vmem:[#allocation5 + $0x1ec] sm:$0xf]
    %v659 = vld [vmem:[#allocation5 + $0x1f0] sm:$0xf]
    %v660 = vld [vmem:[#allocation5 + $0x1f4] sm:$0xf]
    %v661 = vld [vmem:[#allocation5 + $0x1f8] sm:$0xf]
    %v662 = vld [vmem:[#allocation5 + $0x1fc] sm:$0xf]
    %v663 = vunpack.c.l.bf16 %v535
    %v664 = vunpack.c.l.bf16 %v536
    %v665 = vunpack.c.l.bf16 %v537
    %v666 = vunpack.c.l.bf16 %v538
    %v667 = vunpack.c.l.bf16 %v539
    %v668 = vunpack.c.l.bf16 %v540
    %v669 = vunpack.c.l.bf16 %v541
    %v670 = vunpack.c.l.bf16 %v542
    %v671 = vunpack.c.l.bf16 %v543
    %v672 = vunpack.c.l.bf16 %v544
    %v673 = vunpack.c.l.bf16 %v545
    %v674 = vunpack.c.l.bf16 %v546
    %v675 = vunpack.c.l.bf16 %v547
    %v676 = vunpack.c.l.bf16 %v548
    %v677 = vunpack.c.l.bf16 %v549
    %v678 = vunpack.c.l.bf16 %v550
    %v679 = vunpack.c.l.bf16 %v551
    %v680 = vunpack.c.l.bf16 %v552
    %v681 = vunpack.c.l.bf16 %v553
    %v682 = vunpack.c.l.bf16 %v554
    %v683 = vunpack.c.l.bf16 %v555
    %v684 = vunpack.c.l.bf16 %v556
    %v685 = vunpack.c.l.bf16 %v557
    %v686 = vunpack.c.l.bf16 %v558
    %v687 = vunpack.c.l.bf16 %v559
    %v688 = vunpack.c.l.bf16 %v560
    %v689 = vunpack.c.l.bf16 %v561
    %v690 = vunpack.c.l.bf16 %v562
    %v691 = vunpack.c.l.bf16 %v563
    %v692 = vunpack.c.l.bf16 %v564
    %v693 = vunpack.c.l.bf16 %v565
    %v694 = vunpack.c.l.bf16 %v566
    %v695 = vunpack.c.l.bf16 %v567
    %v696 = vunpack.c.l.bf16 %v568
    %v697 = vunpack.c.l.bf16 %v569
    %v698 = vunpack.c.l.bf16 %v570
    %v699 = vunpack.c.l.bf16 %v571
    %v700 = vunpack.c.l.bf16 %v572
    %v701 = vunpack.c.l.bf16 %v573
    %v702 = vunpack.c.l.bf16 %v574
    %v703 = vunpack.c.l.bf16 %v575
    %v704 = vunpack.c.l.bf16 %v576
    %v705 = vunpack.c.l.bf16 %v577
    %v706 = vunpack.c.l.bf16 %v578
    %v707 = vunpack.c.l.bf16 %v579
    %v708 = vunpack.c.l.bf16 %v580
    %v709 = vunpack.c.l.bf16 %v581
    %v710 = vunpack.c.l.bf16 %v582
    %v711 = vunpack.c.l.bf16 %v583
    %v712 = vunpack.c.l.bf16 %v584
    %v713 = vunpack.c.l.bf16 %v585
    %v714 = vunpack.c.l.bf16 %v586
    %v715 = vunpack.c.l.bf16 %v587
    %v716 = vunpack.c.l.bf16 %v588
    %v717 = vunpack.c.l.bf16 %v589
    %v718 = vunpack.c.l.bf16 %v590
    %v719 = vunpack.c.l.bf16 %v591
    %v720 = vunpack.c.l.bf16 %v592
    %v721 = vunpack.c.l.bf16 %v593
    %v722 = vunpack.c.l.bf16 %v594
    %v723 = vunpack.c.l.bf16 %v595
    %v724 = vunpack.c.l.bf16 %v596
    %v725 = vunpack.c.l.bf16 %v597
    %v726 = vunpack.c.l.bf16 %v598
    %v727 = vunpack.c.l.bf16 %v599
    %v728 = vunpack.c.l.bf16 %v600
    %v729 = vunpack.c.l.bf16 %v601
    %v730 = vunpack.c.l.bf16 %v602
    %v731 = vunpack.c.l.bf16 %v603
    %v732 = vunpack.c.l.bf16 %v604
    %v733 = vunpack.c.l.bf16 %v605
    %v734 = vunpack.c.l.bf16 %v606
    %v735 = vunpack.c.l.bf16 %v607
    %v736 = vunpack.c.l.bf16 %v608
    %v737 = vunpack.c.l.bf16 %v609
    %v738 = vunpack.c.l.bf16 %v610
    %v739 = vunpack.c.l.bf16 %v611
    %v740 = vunpack.c.l.bf16 %v612
    %v741 = vunpack.c.l.bf16 %v613
    %v742 = vunpack.c.l.bf16 %v614
    %v743 = vunpack.c.l.bf16 %v615
    %v744 = vunpack.c.l.bf16 %v616
    %v745 = vunpack.c.l.bf16 %v617
    %v746 = vunpack.c.l.bf16 %v618
    %v747 = vunpack.c.l.bf16 %v619
    %v748 = vunpack.c.l.bf16 %v620
    %v749 = vunpack.c.l.bf16 %v621
    %v750 = vunpack.c.l.bf16 %v622
    %v751 = vunpack.c.l.bf16 %v623
    %v752 = vunpack.c.l.bf16 %v624
    %v753 = vunpack.c.l.bf16 %v625
    %v754 = vunpack.c.l.bf16 %v626
    %v755 = vunpack.c.l.bf16 %v627
    %v756 = vunpack.c.l.bf16 %v628
    %v757 = vunpack.c.l.bf16 %v629
    %v758 = vunpack.c.l.bf16 %v630
    %v759 = vunpack.c.l.bf16 %v631
    %v760 = vunpack.c.l.bf16 %v632
    %v761 = vunpack.c.l.bf16 %v633
    %v762 = vunpack.c.l.bf16 %v634
    %v763 = vunpack.c.l.bf16 %v635
    %v764 = vunpack.c.l.bf16 %v636
    %v765 = vunpack.c.l.bf16 %v637
    %v766 = vunpack.c.l.bf16 %v638
    %v767 = vunpack.c.l.bf16 %v639
    %v768 = vunpack.c.l.bf16 %v640
    %v769 = vunpack.c.l.bf16 %v641
    %v770 = vunpack.c.l.bf16 %v642
    %v771 = vunpack.c.l.bf16 %v643
    %v772 = vunpack.c.l.bf16 %v644
    %v773 = vunpack.c.l.bf16 %v645
    %v774 = vunpack.c.l.bf16 %v646
    %v775 = vunpack.c.l.bf16 %v647
    %v776 = vunpack.c.l.bf16 %v648
    %v777 = vunpack.c.l.bf16 %v649
    %v778 = vunpack.c.l.bf16 %v650
    %v779 = vunpack.c.l.bf16 %v651
    %v780 = vunpack.c.l.bf16 %v652
    %v781 = vunpack.c.l.bf16 %v653
    %v782 = vunpack.c.l.bf16 %v654
    %v783 = vunpack.c.l.bf16 %v655
    %v784 = vunpack.c.l.bf16 %v656
    %v785 = vunpack.c.l.bf16 %v657
    %v786 = vunpack.c.l.bf16 %v658
    %v787 = vunpack.c.l.bf16 %v659
    %v788 = vunpack.c.l.bf16 %v660
    %v789 = vunpack.c.l.bf16 %v661
    %v790 = vunpack.c.l.bf16 %v662
    %v791 = vlaneseq
    %v792 = vshrl.u32 %v791, 7
    %v793 = vsub.s32 0, %v792
    %v794 = vrot.slane %v509, %v793
    %v795 = vlaneseq
    %v796 = vshrl.u32 %v795, 7
    %v797 = vsub.s32 0, %v796
    %v798 = vrot.slane %v523, %v797
    %v799 = vlaneseq
    %v800 = vshrl.u32 %v799, 7
    %v801 = vsub.s32 0, %v800
    %v802 = vrot.slane %v531, %v801
    %v803 = vlaneseq
    %v804 = vshrl.u32 %v803, 7
    %v805 = vsub.s32 0, %v804
    %v806 = vrot.slane %v533, %v805
    %v807 = vlaneseq
    %v808 = vshrl.u32 %v807, 7
    %v809 = vsub.s32 0, %v808
    %v810 = vrot.slane %v516, %v809
    %v811 = vlaneseq
    %v812 = vshrl.u32 %v811, 7
    %v813 = vsub.s32 0, %v812
    %v814 = vrot.slane %v530, %v813
    %v815 = vlaneseq
    %v816 = vshrl.u32 %v815, 7
    %v817 = vsub.s32 0, %v816
    %v818 = vrot.slane %v532, %v817
    %v819 = vlaneseq
    %v820 = vshrl.u32 %v819, 7
    %v821 = vsub.s32 0, %v820
    %v822 = vrot.slane %v534, %v821
    %v831 = vadd.f32 %v794, %v663
    %v832 = vadd.f32 %v794, %v664
    %v833 = vadd.f32 %v794, %v665
    %v834 = vadd.f32 %v794, %v666
    %v835 = vadd.f32 %v794, %v667
    %v836 = vadd.f32 %v794, %v668
    %v837 = vadd.f32 %v794, %v669
    %v838 = vadd.f32 %v794, %v670
    %v839 = vadd.f32 %v794, %v671
    %v840 = vadd.f32 %v794, %v672
    %v841 = vadd.f32 %v794, %v673
    %v842 = vadd.f32 %v794, %v674
    %v843 = vadd.f32 %v794, %v675
    %v844 = vadd.f32 %v794, %v676
    %v845 = vadd.f32 %v794, %v677
    %v846 = vadd.f32 %v794, %v678
    %v847 = vadd.f32 %v798, %v679
    %v848 = vadd.f32 %v798, %v680
    %v849 = vadd.f32 %v798, %v681
    %v850 = vadd.f32 %v798, %v682
    %v851 = vadd.f32 %v798, %v683
    %v852 = vadd.f32 %v798, %v684
    %v853 = vadd.f32 %v798, %v685
    %v854 = vadd.f32 %v798, %v686
    %v855 = vadd.f32 %v798, %v687
    %v856 = vadd.f32 %v798, %v688
    %v857 = vadd.f32 %v798, %v689
    %v858 = vadd.f32 %v798, %v690
    %v859 = vadd.f32 %v798, %v691
    %v860 = vadd.f32 %v798, %v692
    %v861 = vadd.f32 %v798, %v693
    %v862 = vadd.f32 %v798, %v694
    %v863 = vadd.f32 %v802, %v695
    %v864 = vadd.f32 %v802, %v696
    %v865 = vadd.f32 %v802, %v697
    %v866 = vadd.f32 %v802, %v698
    %v867 = vadd.f32 %v802, %v699
    %v868 = vadd.f32 %v802, %v700
    %v869 = vadd.f32 %v802, %v701
    %v870 = vadd.f32 %v802, %v702
    %v871 = vadd.f32 %v802, %v703
    %v872 = vadd.f32 %v802, %v704
    %v873 = vadd.f32 %v802, %v705
    %v874 = vadd.f32 %v802, %v706
    %v875 = vadd.f32 %v802, %v707
    %v876 = vadd.f32 %v802, %v708
    %v877 = vadd.f32 %v802, %v709
    %v878 = vadd.f32 %v802, %v710
    %v879 = vadd.f32 %v806, %v711
    %v880 = vadd.f32 %v806, %v712
    %v881 = vadd.f32 %v806, %v713
    %v882 = vadd.f32 %v806, %v714
    %v883 = vadd.f32 %v806, %v715
    %v884 = vadd.f32 %v806, %v716
    %v885 = vadd.f32 %v806, %v717
    %v886 = vadd.f32 %v806, %v718
    %v887 = vadd.f32 %v806, %v719
    %v888 = vadd.f32 %v806, %v720
    %v889 = vadd.f32 %v806, %v721
    %v890 = vadd.f32 %v806, %v722
    %v891 = vadd.f32 %v806, %v723
    %v892 = vadd.f32 %v806, %v724
    %v893 = vadd.f32 %v806, %v725
    %v894 = vadd.f32 %v806, %v726
    %v895 = vadd.f32 %v810, %v727
    %v896 = vadd.f32 %v810, %v728
    %v897 = vadd.f32 %v810, %v729
    %v898 = vadd.f32 %v810, %v730
    %v899 = vadd.f32 %v810, %v731
    %v900 = vadd.f32 %v810, %v732
    %v901 = vadd.f32 %v810, %v733
    %v902 = vadd.f32 %v810, %v734
    %v903 = vadd.f32 %v810, %v735
    %v904 = vadd.f32 %v810, %v736
    %v905 = vadd.f32 %v810, %v737
    %v906 = vadd.f32 %v810, %v738
    %v907 = vadd.f32 %v810, %v739
    %v908 = vadd.f32 %v810, %v740
    %v909 = vadd.f32 %v810, %v741
    %v910 = vadd.f32 %v810, %v742
    %v911 = vadd.f32 %v814, %v743
    %v912 = vadd.f32 %v814, %v744
    %v913 = vadd.f32 %v814, %v745
    %v914 = vadd.f32 %v814, %v746
    %v915 = vadd.f32 %v814, %v747
    %v916 = vadd.f32 %v814, %v748
    %v917 = vadd.f32 %v814, %v749
    %v918 = vadd.f32 %v814, %v750
    %v919 = vadd.f32 %v814, %v751
    %v920 = vadd.f32 %v814, %v752
    %v921 = vadd.f32 %v814, %v753
    %v922 = vadd.f32 %v814, %v754
    %v923 = vadd.f32 %v814, %v755
    %v924 = vadd.f32 %v814, %v756
    %v925 = vadd.f32 %v814, %v757
    %v926 = vadd.f32 %v814, %v758
    %v927 = vadd.f32 %v818, %v759
    %v928 = vadd.f32 %v818, %v760
    %v929 = vadd.f32 %v818, %v761
    %v930 = vadd.f32 %v818, %v762
    %v931 = vadd.f32 %v818, %v763
    %v932 = vadd.f32 %v818, %v764
    %v933 = vadd.f32 %v818, %v765
    %v934 = vadd.f32 %v818, %v766
    %v935 = vadd.f32 %v818, %v767
    %v936 = vadd.f32 %v818, %v768
    %v937 = vadd.f32 %v818, %v769
    %v938 = vadd.f32 %v818, %v770
    %v939 = vadd.f32 %v818, %v771
    %v940 = vadd.f32 %v818, %v772
    %v941 = vadd.f32 %v818, %v773
    %v942 = vadd.f32 %v818, %v774
    %v943 = vadd.f32 %v822, %v775
    %v944 = vadd.f32 %v822, %v776
    %v945 = vadd.f32 %v822, %v777
    %v946 = vadd.f32 %v822, %v778
    %v947 = vadd.f32 %v822, %v779
    %v948 = vadd.f32 %v822, %v780
    %v949 = vadd.f32 %v822, %v781
    %v950 = vadd.f32 %v822, %v782
    %v951 = vadd.f32 %v822, %v783
    %v952 = vadd.f32 %v822, %v784
    %v953 = vadd.f32 %v822, %v785
    %v954 = vadd.f32 %v822, %v786
    %v955 = vadd.f32 %v822, %v787
    %v956 = vadd.f32 %v822, %v788
    %v957 = vadd.f32 %v822, %v789
    %v958 = vadd.f32 %v822, %v790
    %v959 = vtanh.pop %v831
    %v960 = vtanh.pop %v832
    %v961 = vtanh.pop %v833
    %v962 = vtanh.pop %v834
    %v963 = vtanh.pop %v835
    %v964 = vtanh.pop %v836
    %v965 = vtanh.pop %v837
    %v966 = vtanh.pop %v838
    %v967 = vtanh.pop %v839
    %v968 = vtanh.pop %v840
    %v969 = vtanh.pop %v841
    %v970 = vtanh.pop %v842
    %v971 = vtanh.pop %v843
    %v972 = vtanh.pop %v844
    %v973 = vtanh.pop %v845
    %v974 = vtanh.pop %v846
    %v975 = vtanh.pop %v847
    %v976 = vtanh.pop %v848
    %v977 = vtanh.pop %v849
    %v978 = vtanh.pop %v850
    %v979 = vtanh.pop %v851
    %v980 = vtanh.pop %v852
    %v981 = vtanh.pop %v853
    %v982 = vtanh.pop %v854
    %v983 = vtanh.pop %v855
    %v984 = vtanh.pop %v856
    %v985 = vtanh.pop %v857
    %v986 = vtanh.pop %v858
    %v987 = vtanh.pop %v859
    %v988 = vtanh.pop %v860
    %v989 = vtanh.pop %v861
    %v990 = vtanh.pop %v862
    %v991 = vtanh.pop %v863
    %v992 = vtanh.pop %v864
    %v993 = vtanh.pop %v865
    %v994 = vtanh.pop %v866
    %v995 = vtanh.pop %v867
    %v996 = vtanh.pop %v868
    %v997 = vtanh.pop %v869
    %v998 = vtanh.pop %v870
    %v999 = vtanh.pop %v871
    %v1000 = vtanh.pop %v872
    %v1001 = vtanh.pop %v873
    %v1002 = vtanh.pop %v874
    %v1003 = vtanh.pop %v875
    %v1004 = vtanh.pop %v876
    %v1005 = vtanh.pop %v877
    %v1006 = vtanh.pop %v878
    %v1007 = vtanh.pop %v879
    %v1008 = vtanh.pop %v880
    %v1009 = vtanh.pop %v881
    %v1010 = vtanh.pop %v882
    %v1011 = vtanh.pop %v883
    %v1012 = vtanh.pop %v884
    %v1013 = vtanh.pop %v885
    %v1014 = vtanh.pop %v886
    %v1015 = vtanh.pop %v887
    %v1016 = vtanh.pop %v888
    %v1017 = vtanh.pop %v889
    %v1018 = vtanh.pop %v890
    %v1019 = vtanh.pop %v891
    %v1020 = vtanh.pop %v892
    %v1021 = vtanh.pop %v893
    %v1022 = vtanh.pop %v894
    %v1023 = vtanh.pop %v895
    %v1024 = vtanh.pop %v896
    %v1025 = vtanh.pop %v897
    %v1026 = vtanh.pop %v898
    %v1027 = vtanh.pop %v899
    %v1028 = vtanh.pop %v900
    %v1029 = vtanh.pop %v901
    %v1030 = vtanh.pop %v902
    %v1031 = vtanh.pop %v903
    %v1032 = vtanh.pop %v904
    %v1033 = vtanh.pop %v905
    %v1034 = vtanh.pop %v906
    %v1035 = vtanh.pop %v907
    %v1036 = vtanh.pop %v908
    %v1037 = vtanh.pop %v909
    %v1038 = vtanh.pop %v910
    %v1039 = vtanh.pop %v911
    %v1040 = vtanh.pop %v912
    %v1041 = vtanh.pop %v913
    %v1042 = vtanh.pop %v914
    %v1043 = vtanh.pop %v915
    %v1044 = vtanh.pop %v916
    %v1045 = vtanh.pop %v917
    %v1046 = vtanh.pop %v918
    %v1047 = vtanh.pop %v919
    %v1048 = vtanh.pop %v920
    %v1049 = vtanh.pop %v921
    %v1050 = vtanh.pop %v922
    %v1051 = vtanh.pop %v923
    %v1052 = vtanh.pop %v924
    %v1053 = vtanh.pop %v925
    %v1054 = vtanh.pop %v926
    %v1055 = vtanh.pop %v927
    %v1056 = vtanh.pop %v928
    %v1057 = vtanh.pop %v929
    %v1058 = vtanh.pop %v930
    %v1059 = vtanh.pop %v931
    %v1060 = vtanh.pop %v932
    %v1061 = vtanh.pop %v933
    %v1062 = vtanh.pop %v934
    %v1063 = vtanh.pop %v935
    %v1064 = vtanh.pop %v936
    %v1065 = vtanh.pop %v937
    %v1066 = vtanh.pop %v938
    %v1067 = vtanh.pop %v939
    %v1068 = vtanh.pop %v940
    %v1069 = vtanh.pop %v941
    %v1070 = vtanh.pop %v942
    %v1071 = vtanh.pop %v943
    %v1072 = vtanh.pop %v944
    %v1073 = vtanh.pop %v945
    %v1074 = vtanh.pop %v946
    %v1075 = vtanh.pop %v947
    %v1076 = vtanh.pop %v948
    %v1077 = vtanh.pop %v949
    %v1078 = vtanh.pop %v950
    %v1079 = vtanh.pop %v951
    %v1080 = vtanh.pop %v952
    %v1081 = vtanh.pop %v953
    %v1082 = vtanh.pop %v954
    %v1083 = vtanh.pop %v955
    %v1084 = vtanh.pop %v956
    %v1085 = vtanh.pop %v957
    %v1086 = vtanh.pop %v958
    %v1087 = vld [vmem:[%s5] sm:$0xff]
    %v1088 = vld [vmem:[%s5 + $0x8] sm:$0xff]
    %v1089 = vld [vmem:[%s5 + $0x10] sm:$0xff]
    %v1090 = vld [vmem:[%s5 + $0x18] sm:$0xff]
    %v1091 = vld [vmem:[%s5 + $0x20] sm:$0xff]
    %v1092 = vld [vmem:[%s5 + $0x28] sm:$0xff]
    %v1093 = vld [vmem:[%s5 + $0x30] sm:$0xff]
    %v1094 = vld [vmem:[%s5 + $0x38] sm:$0xff]
    %v1095 = vld [vmem:[%s5 + $0x40] sm:$0xff]
    %v1096 = vld [vmem:[%s5 + $0x48] sm:$0xff]
    %v1097 = vld [vmem:[%s5 + $0x50] sm:$0xff]
    %v1098 = vld [vmem:[%s5 + $0x58] sm:$0xff]
    %v1099 = vld [vmem:[%s5 + $0x60] sm:$0xff]
    %v1100 = vld [vmem:[%s5 + $0x68] sm:$0xff]
    %v1101 = vld [vmem:[%s5 + $0x70] sm:$0xff]
    %v1102 = vld [vmem:[%s5 + $0x78] sm:$0xff]
    %1103 = vmatprep.subr.mxu0 0.0
    %1104 = vmatpush1.msra.mxu0 %v1087
    %1105 = vmatprep.subr.mxu0 0.0
    %1106 = vmatpush1.msra.mxu0 %v1088
    %1107 = vmatprep.subr.mxu0 0.0
    %1108 = vmatpush1.msra.mxu0 %v1089
    %1109 = vmatprep.subr.mxu0 0.0
    %1110 = vmatpush1.msra.mxu0 %v1090
    %1111 = vmatprep.subr.mxu0 0.0
    %1112 = vmatpush1.msra.mxu0 %v1091
    %1113 = vmatprep.subr.mxu0 0.0
    %1114 = vmatpush1.msra.mxu0 %v1092
    %1115 = vmatprep.subr.mxu0 0.0
    %1116 = vmatpush1.msra.mxu0 %v1093
    %1117 = vmatprep.subr.mxu0 0.0
    %1118 = vmatpush1.msra.mxu0 %v1094
    %1119 = vmatprep.subr.mxu0 0.0
    %1120 = vmatpush1.msra.mxu0 %v1095
    %1121 = vmatprep.subr.mxu0 0.0
    %1122 = vmatpush1.msra.mxu0 %v1096
    %1123 = vmatprep.subr.mxu0 0.0
    %1124 = vmatpush1.msra.mxu0 %v1097
    %1125 = vmatprep.subr.mxu0 0.0
    %1126 = vmatpush1.msra.mxu0 %v1098
    %1127 = vmatprep.subr.mxu0 0.0
    %1128 = vmatpush1.msra.mxu0 %v1099
    %1129 = vmatprep.subr.mxu0 0.0
    %1130 = vmatpush1.msra.mxu0 %v1100
    %1131 = vmatprep.subr.mxu0 0.0
    %1132 = vmatpush1.msra.mxu0 %v1101
    %1133 = vmatprep.subr.mxu0 0.0
    %1134 = vmatpush1.msra.mxu0 %v1102
    %1135 = vmatprep.subr.mxu0 0.0
    %1136 = vmatpush1.msra.mxu0 0.0
    %1137 = vmatprep.subr.mxu0 0.0
    %1138 = vmatpush1.msra.mxu0 0.0
    %1139 = vmatprep.subr.mxu0 0.0
    %1140 = vmatpush1.msra.mxu0 0.0
    %1141 = vmatprep.subr.mxu0 0.0
    %1142 = vmatpush1.msra.mxu0 0.0
    %1143 = vmatprep.subr.mxu0 0.0
    %1144 = vmatpush1.msra.mxu0 0.0
    %1145 = vmatprep.subr.mxu0 0.0
    %1146 = vmatpush1.msra.mxu0 0.0
    %1147 = vmatprep.subr.mxu0 0.0
    %1148 = vmatpush1.msra.mxu0 0.0
    %1149 = vmatprep.subr.mxu0 0.0
    %1150 = vmatpush1.msra.mxu0 0.0
    %1151 = vmatprep.subr.mxu0 0.0
    %1152 = vmatpush1.msra.mxu0 0.0
    %1153 = vmatprep.subr.mxu0 0.0
    %1154 = vmatpush1.msra.mxu0 0.0
    %1155 = vmatprep.subr.mxu0 0.0
    %1156 = vmatpush1.msra.mxu0 0.0
    %1157 = vmatprep.subr.mxu0 0.0
    %1158 = vmatpush1.msra.mxu0 0.0
    %1159 = vmatprep.subr.mxu0 0.0
    %1160 = vmatpush1.msra.mxu0 0.0
    %1161 = vmatprep.subr.mxu0 0.0
    %1162 = vmatpush1.msra.mxu0 0.0
    %1163 = vmatprep.subr.mxu0 0.0
    %1164 = vmatpush1.msra.mxu0 0.0
    %1165 = vmatprep.subr.mxu0 0.0
    %1166 = vmatpush1.msra.mxu0 0.0
    %1167 = vmatprep.mubr.f32.mxu0 0.0
    %1168 = vmatmul.mubr.f32.gmra.mrb[0].mxu0 %v959
    %v1169 = vpop.f32.mrb[0].mxu0
    %v1170 = vadd.f32 0.0, %v1169
    %v1171 = vpop.f32.mrb[0].mxu0
    %1172 = vmatprep.mubr.f32.mxu0 0.0
    %1173 = vmatmul.mubr.f32.gmra.mrb[0].mxu0 %v960
    %v1174 = vpop.f32.mrb[0].mxu0
    %v1175 = vadd.f32 0.0, %v1174
    %v1176 = vpop.f32.mrb[0].mxu0
    %1177 = vmatprep.mubr.f32.mxu0 0.0
    %1178 = vmatmul.mubr.f32.gmra.mrb[0].mxu0 %v961
    %v1179 = vpop.f32.mrb[0].mxu0
    %v1180 = vadd.f32 0.0, %v1179
    %v1181 = vpop.f32.mrb[0].mxu0
    %1182 = vmatprep.mubr.f32.mxu0 0.0
    %1183 = vmatmul.mubr.f32.gmra.mrb[0].mxu0 %v962
    %v1184 = vpop.f32.mrb[0].mxu0
    %v1185 = vadd.f32 0.0, %v1184
    %v1186 = vpop.f32.mrb[0].mxu0
    %1187 = vmatprep.mubr.f32.mxu0 0.0
    %1188 = vmatmul.mubr.f32.gmra.mrb[0].mxu0 %v963
    %v1189 = vpop.f32.mrb[0].mxu0
    %v1190 = vadd.f32 0.0, %v1189
    %v1191 = vpop.f32.mrb[0].mxu0
    %1192 = vmatprep.mubr.f32.mxu0 0.0
    %1193 = vmatmul.mubr.f32.gmra.mrb[0].mxu0 %v964
    %v1194 = vpop.f32.mrb[0].mxu0
    %v1195 = vadd.f32 0.0, %v1194
    %v1196 = vpop.f32.mrb[0].mxu0
    %1197 = vmatprep.mubr.f32.mxu0 0.0
    %1198 = vmatmul.mubr.f32.gmra.mrb[0].mxu0 %v965
    %v1199 = vpop.f32.mrb[0].mxu0
    %v1200 = vadd.f32 0.0, %v1199
    %v1201 = vpop.f32.mrb[0].mxu0
    %1202 = vmatprep.mubr.f32.mxu0 0.0
    %1203 = vmatmul.mubr.f32.gmra.mrb[0].mxu0 %v966
    %v1204 = vpop.f32.mrb[0].mxu0
    %v1205 = vadd.f32 0.0, %v1204
    %v1206 = vpop.f32.mrb[0].mxu0
    %1207 = vmatprep.mubr.f32.mxu0 0.0
    %1208 = vmatmul.mubr.f32.gmra.mrb[0].mxu0 %v967
    %v1209 = vpop.f32.mrb[0].mxu0
    %v1210 = vadd.f32 0.0, %v1209
    %v1211 = vpop.f32.mrb[0].mxu0
    %1212 = vmatprep.mubr.f32.mxu0 0.0
    %1213 = vmatmul.mubr.f32.gmra.mrb[0].mxu0 %v968
    %v1214 = vpop.f32.mrb[0].mxu0
    %v1215 = vadd.f32 0.0, %v1214
    %v1216 = vpop.f32.mrb[0].mxu0
    %1217 = vmatprep.mubr.f32.mxu0 0.0
    %1218 = vmatmul.mubr.f32.gmra.mrb[0].mxu0 %v969
    %v1219 = vpop.f32.mrb[0].mxu0
    %v1220 = vadd.f32 0.0, %v1219
    %v1221 = vpop.f32.mrb[0].mxu0
    %1222 = vmatprep.mubr.f32.mxu0 0.0
    %1223 = vmatmul.mubr.f32.gmra.mrb[0].mxu0 %v970
    %v1224 = vpop.f32.mrb[0].mxu0
    %v1225 = vadd.f32 0.0, %v1224
    %v1226 = vpop.f32.mrb[0].mxu0
    %1227 = vmatprep.mubr.f32.mxu0 0.0
    %1228 = vmatmul.mubr.f32.gmra.mrb[0].mxu0 %v971
    %v1229 = vpop.f32.mrb[0].mxu0
    %v1230 = vadd.f32 0.0, %v1229
    %v1231 = vpop.f32.mrb[0].mxu0
    %1232 = vmatprep.mubr.f32.mxu0 0.0
    %1233 = vmatmul.mubr.f32.gmra.mrb[0].mxu0 %v972
    %v1234 = vpop.f32.mrb[0].mxu0
    %v1235 = vadd.f32 0.0, %v1234
    %v1236 = vpop.f32.mrb[0].mxu0
    %1237 = vmatprep.mubr.f32.mxu0 0.0
    %1238 = vmatmul.mubr.f32.gmra.mrb[0].mxu0 %v973
    %v1239 = vpop.f32.mrb[0].mxu0
    %v1240 = vadd.f32 0.0, %v1239
    %v1241 = vpop.f32.mrb[0].mxu0
    %1242 = vmatprep.mubr.f32.mxu0 0.0
    %1243 = vmatmul.mubr.f32.gmra.mrb[0].mxu0 %v974
    %v1244 = vpop.f32.mrb[0].mxu0
    %v1245 = vadd.f32 0.0, %v1244
    %v1246 = vpop.f32.mrb[0].mxu0
    %1247 = vmatprep.mubr.f32.mxu0 0.0
    %1248 = vmatmul.mubr.f32.gmra.mrb[0].mxu0 %v975
    %v1249 = vpop.f32.mrb[0].mxu0
    %v1250 = vadd.f32 0.0, %v1249
    %v1251 = vpop.f32.mrb[0].mxu0
    %1252 = vmatprep.mubr.f32.mxu0 0.0
    %1253 = vmatmul.mubr.f32.gmra.mrb[0].mxu0 %v976
    %v1254 = vpop.f32.mrb[0].mxu0
    %v1255 = vadd.f32 0.0, %v1254
    %v1256 = vpop.f32.mrb[0].mxu0
    %1257 = vmatprep.mubr.f32.mxu0 0.0
    %1258 = vmatmul.mubr.f32.gmra.mrb[0].mxu0 %v977
    %v1259 = vpop.f32.mrb[0].mxu0
    %v1260 = vadd.f32 0.0, %v1259
    %v1261 = vpop.f32.mrb[0].mxu0
    %1262 = vmatprep.mubr.f32.mxu0 0.0
    %1263 = vmatmul.mubr.f32.gmra.mrb[0].mxu0 %v978
    %v1264 = vpop.f32.mrb[0].mxu0
    %v1265 = vadd.f32 0.0, %v1264
    %v1266 = vpop.f32.mrb[0].mxu0
    %1267 = vmatprep.mubr.f32.mxu0 0.0
    %1268 = vmatmul.mubr.f32.gmra.mrb[0].mxu0 %v979
    %v1269 = vpop.f32.mrb[0].mxu0
    %v1270 = vadd.f32 0.0, %v1269
    %v1271 = vpop.f32.mrb[0].mxu0
    %1272 = vmatprep.mubr.f32.mxu0 0.0
    %1273 = vmatmul.mubr.f32.gmra.mrb[0].mxu0 %v980
    %v1274 = vpop.f32.mrb[0].mxu0
    %v1275 = vadd.f32 0.0, %v1274
    %v1276 = vpop.f32.mrb[0].mxu0
    %1277 = vmatprep.mubr.f32.mxu0 0.0
    %1278 = vmatmul.mubr.f32.gmra.mrb[0].mxu0 %v981
    %v1279 = vpop.f32.mrb[0].mxu0
    %v1280 = vadd.f32 0.0, %v1279
    %v1281 = vpop.f32.mrb[0].mxu0
    %1282 = vmatprep.mubr.f32.mxu0 0.0
    %1283 = vmatmul.mubr.f32.gmra.mrb[0].mxu0 %v982
    %v1284 = vpop.f32.mrb[0].mxu0
    %v1285 = vadd.f32 0.0, %v1284
    %v1286 = vpop.f32.mrb[0].mxu0
    %1287 = vmatprep.mubr.f32.mxu0 0.0
    %1288 = vmatmul.mubr.f32.gmra.mrb[0].mxu0 %v983
    %v1289 = vpop.f32.mrb[0].mxu0
    %v1290 = vadd.f32 0.0, %v1289
    %v1291 = vpop.f32.mrb[0].mxu0
    %1292 = vmatprep.mubr.f32.mxu0 0.0
    %1293 = vmatmul.mubr.f32.gmra.mrb[0].mxu0 %v984
    %v1294 = vpop.f32.mrb[0].mxu0
    %v1295 = vadd.f32 0.0, %v1294
    %v1296 = vpop.f32.mrb[0].mxu0
    %1297 = vmatprep.mubr.f32.mxu0 0.0
    %1298 = vmatmul.mubr.f32.gmra.mrb[0].mxu0 %v985
    %v1299 = vpop.f32.mrb[0].mxu0
    %v1300 = vadd.f32 0.0, %v1299
    %v1301 = vpop.f32.mrb[0].mxu0
    %1302 = vmatprep.mubr.f32.mxu0 0.0
    %1303 = vmatmul.mubr.f32.gmra.mrb[0].mxu0 %v986
    %v1304 = vpop.f32.mrb[0].mxu0
    %v1305 = vadd.f32 0.0, %v1304
    %v1306 = vpop.f32.mrb[0].mxu0
    %1307 = vmatprep.mubr.f32.mxu0 0.0
    %1308 = vmatmul.mubr.f32.gmra.mrb[0].mxu0 %v987
    %v1309 = vpop.f32.mrb[0].mxu0
    %v1310 = vadd.f32 0.0, %v1309
    %v1311 = vpop.f32.mrb[0].mxu0
    %1312 = vmatprep.mubr.f32.mxu0 0.0
    %1313 = vmatmul.mubr.f32.gmra.mrb[0].mxu0 %v988
    %v1314 = vpop.f32.mrb[0].mxu0
    %v1315 = vadd.f32 0.0, %v1314
    %v1316 = vpop.f32.mrb[0].mxu0
    %1317 = vmatprep.mubr.f32.mxu0 0.0
    %1318 = vmatmul.mubr.f32.gmra.mrb[0].mxu0 %v989
    %v1319 = vpop.f32.mrb[0].mxu0
    %v1320 = vadd.f32 0.0, %v1319
    %v1321 = vpop.f32.mrb[0].mxu0
    %1322 = vmatprep.mubr.f32.mxu0 0.0
    %1323 = vmatmul.mubr.f32.gmra.mrb[0].mxu0 %v990
    %v1324 = vpop.f32.mrb[0].mxu0
    %v1325 = vadd.f32 0.0, %v1324
    %v1326 = vpop.f32.mrb[0].mxu0
    %1327 = vmatprep.mubr.f32.mxu0 0.0
    %1328 = vmatmul.mubr.f32.gmra.mrb[0].mxu0 %v991
    %v1329 = vpop.f32.mrb[0].mxu0
    %v1330 = vadd.f32 0.0, %v1329
    %v1331 = vpop.f32.mrb[0].mxu0
    %1332 = vmatprep.mubr.f32.mxu0 0.0
    %1333 = vmatmul.mubr.f32.gmra.mrb[0].mxu0 %v992
    %v1334 = vpop.f32.mrb[0].mxu0
    %v1335 = vadd.f32 0.0, %v1334
    %v1336 = vpop.f32.mrb[0].mxu0
    %1337 = vmatprep.mubr.f32.mxu0 0.0
    %1338 = vmatmul.mubr.f32.gmra.mrb[0].mxu0 %v993
    %v1339 = vpop.f32.mrb[0].mxu0
    %v1340 = vadd.f32 0.0, %v1339
    %v1341 = vpop.f32.mrb[0].mxu0
    %1342 = vmatprep.mubr.f32.mxu0 0.0
    %1343 = vmatmul.mubr.f32.gmra.mrb[0].mxu0 %v994
    %v1344 = vpop.f32.mrb[0].mxu0
    %v1345 = vadd.f32 0.0, %v1344
    %v1346 = vpop.f32.mrb[0].mxu0
    %1347 = vmatprep.mubr.f32.mxu0 0.0
    %1348 = vmatmul.mubr.f32.gmra.mrb[0].mxu0 %v995
    %v1349 = vpop.f32.mrb[0].mxu0
    %v1350 = vadd.f32 0.0, %v1349
    %v1351 = vpop.f32.mrb[0].mxu0
    %1352 = vmatprep.mubr.f32.mxu0 0.0
    %1353 = vmatmul.mubr.f32.gmra.mrb[0].mxu0 %v996
    %v1354 = vpop.f32.mrb[0].mxu0
    %v1355 = vadd.f32 0.0, %v1354
    %v1356 = vpop.f32.mrb[0].mxu0
    %1357 = vmatprep.mubr.f32.mxu0 0.0
    %1358 = vmatmul.mubr.f32.gmra.mrb[0].mxu0 %v997
    %v1359 = vpop.f32.mrb[0].mxu0
    %v1360 = vadd.f32 0.0, %v1359
    %v1361 = vpop.f32.mrb[0].mxu0
    %1362 = vmatprep.mubr.f32.mxu0 0.0
    %1363 = vmatmul.mubr.f32.gmra.mrb[0].mxu0 %v998
    %v1364 = vpop.f32.mrb[0].mxu0
    %v1365 = vadd.f32 0.0, %v1364
    %v1366 = vpop.f32.mrb[0].mxu0
    %1367 = vmatprep.mubr.f32.mxu0 0.0
    %1368 = vmatmul.mubr.f32.gmra.mrb[0].mxu0 %v999
    %v1369 = vpop.f32.mrb[0].mxu0
    %v1370 = vadd.f32 0.0, %v1369
    %v1371 = vpop.f32.mrb[0].mxu0
    %1372 = vmatprep.mubr.f32.mxu0 0.0
    %1373 = vmatmul.mubr.f32.gmra.mrb[0].mxu0 %v1000
    %v1374 = vpop.f32.mrb[0].mxu0
    %v1375 = vadd.f32 0.0, %v1374
    %v1376 = vpop.f32.mrb[0].mxu0
    %1377 = vmatprep.mubr.f32.mxu0 0.0
    %1378 = vmatmul.mubr.f32.gmra.mrb[0].mxu0 %v1001
    %v1379 = vpop.f32.mrb[0].mxu0
    %v1380 = vadd.f32 0.0, %v1379
    %v1381 = vpop.f32.mrb[0].mxu0
    %1382 = vmatprep.mubr.f32.mxu0 0.0
    %1383 = vmatmul.mubr.f32.gmra.mrb[0].mxu0 %v1002
    %v1384 = vpop.f32.mrb[0].mxu0
    %v1385 = vadd.f32 0.0, %v1384
    %v1386 = vpop.f32.mrb[0].mxu0
    %1387 = vmatprep.mubr.f32.mxu0 0.0
    %1388 = vmatmul.mubr.f32.gmra.mrb[0].mxu0 %v1003
    %v1389 = vpop.f32.mrb[0].mxu0
    %v1390 = vadd.f32 0.0, %v1389
    %v1391 = vpop.f32.mrb[0].mxu0
    %1392 = vmatprep.mubr.f32.mxu0 0.0
    %1393 = vmatmul.mubr.f32.gmra.mrb[0].mxu0 %v1004
    %v1394 = vpop.f32.mrb[0].mxu0
    %v1395 = vadd.f32 0.0, %v1394
    %v1396 = vpop.f32.mrb[0].mxu0
    %1397 = vmatprep.mubr.f32.mxu0 0.0
    %1398 = vmatmul.mubr.f32.gmra.mrb[0].mxu0 %v1005
    %v1399 = vpop.f32.mrb[0].mxu0
    %v1400 = vadd.f32 0.0, %v1399
    %v1401 = vpop.f32.mrb[0].mxu0
    %1402 = vmatprep.mubr.f32.mxu0 0.0
    %1403 = vmatmul.mubr.f32.gmra.mrb[0].mxu0 %v1006
    %v1404 = vpop.f32.mrb[0].mxu0
    %v1405 = vadd.f32 0.0, %v1404
    %v1406 = vpop.f32.mrb[0].mxu0
    %1407 = vmatprep.mubr.f32.mxu0 0.0
    %1408 = vmatmul.mubr.f32.gmra.mrb[0].mxu0 %v1007
    %v1409 = vpop.f32.mrb[0].mxu0
    %v1410 = vadd.f32 0.0, %v1409
    %v1411 = vpop.f32.mrb[0].mxu0
    %1412 = vmatprep.mubr.f32.mxu0 0.0
    %1413 = vmatmul.mubr.f32.gmra.mrb[0].mxu0 %v1008
    %v1414 = vpop.f32.mrb[0].mxu0
    %v1415 = vadd.f32 0.0, %v1414
    %v1416 = vpop.f32.mrb[0].mxu0
    %1417 = vmatprep.mubr.f32.mxu0 0.0
    %1418 = vmatmul.mubr.f32.gmra.mrb[0].mxu0 %v1009
    %v1419 = vpop.f32.mrb[0].mxu0
    %v1420 = vadd.f32 0.0, %v1419
    %v1421 = vpop.f32.mrb[0].mxu0
    %1422 = vmatprep.mubr.f32.mxu0 0.0
    %1423 = vmatmul.mubr.f32.gmra.mrb[0].mxu0 %v1010
    %v1424 = vpop.f32.mrb[0].mxu0
    %v1425 = vadd.f32 0.0, %v1424
    %v1426 = vpop.f32.mrb[0].mxu0
    %1427 = vmatprep.mubr.f32.mxu0 0.0
    %1428 = vmatmul.mubr.f32.gmra.mrb[0].mxu0 %v1011
    %v1429 = vpop.f32.mrb[0].mxu0
    %v1430 = vadd.f32 0.0, %v1429
    %v1431 = vpop.f32.mrb[0].mxu0
    %1432 = vmatprep.mubr.f32.mxu0 0.0
    %1433 = vmatmul.mubr.f32.gmra.mrb[0].mxu0 %v1012
    %v1434 = vpop.f32.mrb[0].mxu0
    %v1435 = vadd.f32 0.0, %v1434
    %v1436 = vpop.f32.mrb[0].mxu0
    %1437 = vmatprep.mubr.f32.mxu0 0.0
    %1438 = vmatmul.mubr.f32.gmra.mrb[0].mxu0 %v1013
    %v1439 = vpop.f32.mrb[0].mxu0
    %v1440 = vadd.f32 0.0, %v1439
    %v1441 = vpop.f32.mrb[0].mxu0
    %1442 = vmatprep.mubr.f32.mxu0 0.0
    %1443 = vmatmul.mubr.f32.gmra.mrb[0].mxu0 %v1014
    %v1444 = vpop.f32.mrb[0].mxu0
    %v1445 = vadd.f32 0.0, %v1444
    %v1446 = vpop.f32.mrb[0].mxu0
    %1447 = vmatprep.mubr.f32.mxu0 0.0
    %1448 = vmatmul.mubr.f32.gmra.mrb[0].mxu0 %v1015
    %v1449 = vpop.f32.mrb[0].mxu0
    %v1450 = vadd.f32 0.0, %v1449
    %v1451 = vpop.f32.mrb[0].mxu0
    %1452 = vmatprep.mubr.f32.mxu0 0.0
    %1453 = vmatmul.mubr.f32.gmra.mrb[0].mxu0 %v1016
    %v1454 = vpop.f32.mrb[0].mxu0
    %v1455 = vadd.f32 0.0, %v1454
    %v1456 = vpop.f32.mrb[0].mxu0
    %1457 = vmatprep.mubr.f32.mxu0 0.0
    %1458 = vmatmul.mubr.f32.gmra.mrb[0].mxu0 %v1017
    %v1459 = vpop.f32.mrb[0].mxu0
    %v1460 = vadd.f32 0.0, %v1459
    %v1461 = vpop.f32.mrb[0].mxu0
    %1462 = vmatprep.mubr.f32.mxu0 0.0
    %1463 = vmatmul.mubr.f32.gmra.mrb[0].mxu0 %v1018
    %v1464 = vpop.f32.mrb[0].mxu0
    %v1465 = vadd.f32 0.0, %v1464
    %v1466 = vpop.f32.mrb[0].mxu0
    %1467 = vmatprep.mubr.f32.mxu0 0.0
    %1468 = vmatmul.mubr.f32.gmra.mrb[0].mxu0 %v1019
    %v1469 = vpop.f32.mrb[0].mxu0
    %v1470 = vadd.f32 0.0, %v1469
    %v1471 = vpop.f32.mrb[0].mxu0
    %1472 = vmatprep.mubr.f32.mxu0 0.0
    %1473 = vmatmul.mubr.f32.gmra.mrb[0].mxu0 %v1020
    %v1474 = vpop.f32.mrb[0].mxu0
    %v1475 = vadd.f32 0.0, %v1474
    %v1476 = vpop.f32.mrb[0].mxu0
    %1477 = vmatprep.mubr.f32.mxu0 0.0
    %1478 = vmatmul.mubr.f32.gmra.mrb[0].mxu0 %v1021
    %v1479 = vpop.f32.mrb[0].mxu0
    %v1480 = vadd.f32 0.0, %v1479
    %v1481 = vpop.f32.mrb[0].mxu0
    %1482 = vmatprep.mubr.f32.mxu0 0.0
    %1483 = vmatmul.mubr.f32.gmra.mrb[0].mxu0 %v1022
    %v1484 = vpop.f32.mrb[0].mxu0
    %v1485 = vadd.f32 0.0, %v1484
    %v1486 = vpop.f32.mrb[0].mxu0
    %1487 = vmatprep.mubr.f32.mxu0 0.0
    %1488 = vmatmul.mubr.f32.gmra.mrb[0].mxu0 %v1023
    %v1489 = vpop.f32.mrb[0].mxu0
    %v1490 = vadd.f32 0.0, %v1489
    %v1491 = vpop.f32.mrb[0].mxu0
    %1492 = vmatprep.mubr.f32.mxu0 0.0
    %1493 = vmatmul.mubr.f32.gmra.mrb[0].mxu0 %v1024
    %v1494 = vpop.f32.mrb[0].mxu0
    %v1495 = vadd.f32 0.0, %v1494
    %v1496 = vpop.f32.mrb[0].mxu0
    %1497 = vmatprep.mubr.f32.mxu0 0.0
    %1498 = vmatmul.mubr.f32.gmra.mrb[0].mxu0 %v1025
    %v1499 = vpop.f32.mrb[0].mxu0
    %v1500 = vadd.f32 0.0, %v1499
    %v1501 = vpop.f32.mrb[0].mxu0
    %1502 = vmatprep.mubr.f32.mxu0 0.0
    %1503 = vmatmul.mubr.f32.gmra.mrb[0].mxu0 %v1026
    %v1504 = vpop.f32.mrb[0].mxu0
    %v1505 = vadd.f32 0.0, %v1504
    %v1506 = vpop.f32.mrb[0].mxu0
    %1507 = vmatprep.mubr.f32.mxu0 0.0
    %1508 = vmatmul.mubr.f32.gmra.mrb[0].mxu0 %v1027
    %v1509 = vpop.f32.mrb[0].mxu0
    %v1510 = vadd.f32 0.0, %v1509
    %v1511 = vpop.f32.mrb[0].mxu0
    %1512 = vmatprep.mubr.f32.mxu0 0.0
    %1513 = vmatmul.mubr.f32.gmra.mrb[0].mxu0 %v1028
    %v1514 = vpop.f32.mrb[0].mxu0
    %v1515 = vadd.f32 0.0, %v1514
    %v1516 = vpop.f32.mrb[0].mxu0
    %1517 = vmatprep.mubr.f32.mxu0 0.0
    %1518 = vmatmul.mubr.f32.gmra.mrb[0].mxu0 %v1029
    %v1519 = vpop.f32.mrb[0].mxu0
    %v1520 = vadd.f32 0.0, %v1519
    %v1521 = vpop.f32.mrb[0].mxu0
    %1522 = vmatprep.mubr.f32.mxu0 0.0
    %1523 = vmatmul.mubr.f32.gmra.mrb[0].mxu0 %v1030
    %v1524 = vpop.f32.mrb[0].mxu0
    %v1525 = vadd.f32 0.0, %v1524
    %v1526 = vpop.f32.mrb[0].mxu0
    %1527 = vmatprep.mubr.f32.mxu0 0.0
    %1528 = vmatmul.mubr.f32.gmra.mrb[0].mxu0 %v1031
    %v1529 = vpop.f32.mrb[0].mxu0
    %v1530 = vadd.f32 0.0, %v1529
    %v1531 = vpop.f32.mrb[0].mxu0
    %1532 = vmatprep.mubr.f32.mxu0 0.0
    %1533 = vmatmul.mubr.f32.gmra.mrb[0].mxu0 %v1032
    %v1534 = vpop.f32.mrb[0].mxu0
    %v1535 = vadd.f32 0.0, %v1534
    %v1536 = vpop.f32.mrb[0].mxu0
    %1537 = vmatprep.mubr.f32.mxu0 0.0
    %1538 = vmatmul.mubr.f32.gmra.mrb[0].mxu0 %v1033
    %v1539 = vpop.f32.mrb[0].mxu0
    %v1540 = vadd.f32 0.0, %v1539
    %v1541 = vpop.f32.mrb[0].mxu0
    %1542 = vmatprep.mubr.f32.mxu0 0.0
    %1543 = vmatmul.mubr.f32.gmra.mrb[0].mxu0 %v1034
    %v1544 = vpop.f32.mrb[0].mxu0
    %v1545 = vadd.f32 0.0, %v1544
    %v1546 = vpop.f32.mrb[0].mxu0
    %1547 = vmatprep.mubr.f32.mxu0 0.0
    %1548 = vmatmul.mubr.f32.gmra.mrb[0].mxu0 %v1035
    %v1549 = vpop.f32.mrb[0].mxu0
    %v1550 = vadd.f32 0.0, %v1549
    %v1551 = vpop.f32.mrb[0].mxu0
    %1552 = vmatprep.mubr.f32.mxu0 0.0
    %1553 = vmatmul.mubr.f32.gmra.mrb[0].mxu0 %v1036
    %v1554 = vpop.f32.mrb[0].mxu0
    %v1555 = vadd.f32 0.0, %v1554
    %v1556 = vpop.f32.mrb[0].mxu0
    %1557 = vmatprep.mubr.f32.mxu0 0.0
    %1558 = vmatmul.mubr.f32.gmra.mrb[0].mxu0 %v1037
    %v1559 = vpop.f32.mrb[0].mxu0
    %v1560 = vadd.f32 0.0, %v1559
    %v1561 = vpop.f32.mrb[0].mxu0
    %1562 = vmatprep.mubr.f32.mxu0 0.0
    %1563 = vmatmul.mubr.f32.gmra.mrb[0].mxu0 %v1038
    %v1564 = vpop.f32.mrb[0].mxu0
    %v1565 = vadd.f32 0.0, %v1564
    %v1566 = vpop.f32.mrb[0].mxu0
    %1567 = vmatprep.mubr.f32.mxu0 0.0
    %1568 = vmatmul.mubr.f32.gmra.mrb[0].mxu0 %v1039
    %v1569 = vpop.f32.mrb[0].mxu0
    %v1570 = vadd.f32 0.0, %v1569
    %v1571 = vpop.f32.mrb[0].mxu0
    %1572 = vmatprep.mubr.f32.mxu0 0.0
    %1573 = vmatmul.mubr.f32.gmra.mrb[0].mxu0 %v1040
    %v1574 = vpop.f32.mrb[0].mxu0
    %v1575 = vadd.f32 0.0, %v1574
    %v1576 = vpop.f32.mrb[0].mxu0
    %1577 = vmatprep.mubr.f32.mxu0 0.0
    %1578 = vmatmul.mubr.f32.gmra.mrb[0].mxu0 %v1041
    %v1579 = vpop.f32.mrb[0].mxu0
    %v1580 = vadd.f32 0.0, %v1579
    %v1581 = vpop.f32.mrb[0].mxu0
    %1582 = vmatprep.mubr.f32.mxu0 0.0
    %1583 = vmatmul.mubr.f32.gmra.mrb[0].mxu0 %v1042
    %v1584 = vpop.f32.mrb[0].mxu0
    %v1585 = vadd.f32 0.0, %v1584
    %v1586 = vpop.f32.mrb[0].mxu0
    %1587 = vmatprep.mubr.f32.mxu0 0.0
    %1588 = vmatmul.mubr.f32.gmra.mrb[0].mxu0 %v1043
    %v1589 = vpop.f32.mrb[0].mxu0
    %v1590 = vadd.f32 0.0, %v1589
    %v1591 = vpop.f32.mrb[0].mxu0
    %1592 = vmatprep.mubr.f32.mxu0 0.0
    %1593 = vmatmul.mubr.f32.gmra.mrb[0].mxu0 %v1044
    %v1594 = vpop.f32.mrb[0].mxu0
    %v1595 = vadd.f32 0.0, %v1594
    %v1596 = vpop.f32.mrb[0].mxu0
    %1597 = vmatprep.mubr.f32.mxu0 0.0
    %1598 = vmatmul.mubr.f32.gmra.mrb[0].mxu0 %v1045
    %v1599 = vpop.f32.mrb[0].mxu0
    %v1600 = vadd.f32 0.0, %v1599
    %v1601 = vpop.f32.mrb[0].mxu0
    %1602 = vmatprep.mubr.f32.mxu0 0.0
    %1603 = vmatmul.mubr.f32.gmra.mrb[0].mxu0 %v1046
    %v1604 = vpop.f32.mrb[0].mxu0
    %v1605 = vadd.f32 0.0, %v1604
    %v1606 = vpop.f32.mrb[0].mxu0
    %1607 = vmatprep.mubr.f32.mxu0 0.0
    %1608 = vmatmul.mubr.f32.gmra.mrb[0].mxu0 %v1047
    %v1609 = vpop.f32.mrb[0].mxu0
    %v1610 = vadd.f32 0.0, %v1609
    %v1611 = vpop.f32.mrb[0].mxu0
    %1612 = vmatprep.mubr.f32.mxu0 0.0
    %1613 = vmatmul.mubr.f32.gmra.mrb[0].mxu0 %v1048
    %v1614 = vpop.f32.mrb[0].mxu0
    %v1615 = vadd.f32 0.0, %v1614
    %v1616 = vpop.f32.mrb[0].mxu0
    %1617 = vmatprep.mubr.f32.mxu0 0.0
    %1618 = vmatmul.mubr.f32.gmra.mrb[0].mxu0 %v1049
    %v1619 = vpop.f32.mrb[0].mxu0
    %v1620 = vadd.f32 0.0, %v1619
    %v1621 = vpop.f32.mrb[0].mxu0
    %1622 = vmatprep.mubr.f32.mxu0 0.0
    %1623 = vmatmul.mubr.f32.gmra.mrb[0].mxu0 %v1050
    %v1624 = vpop.f32.mrb[0].mxu0
    %v1625 = vadd.f32 0.0, %v1624
    %v1626 = vpop.f32.mrb[0].mxu0
    %1627 = vmatprep.mubr.f32.mxu0 0.0
    %1628 = vmatmul.mubr.f32.gmra.mrb[0].mxu0 %v1051
    %v1629 = vpop.f32.mrb[0].mxu0
    %v1630 = vadd.f32 0.0, %v1629
    %v1631 = vpop.f32.mrb[0].mxu0
    %1632 = vmatprep.mubr.f32.mxu0 0.0
    %1633 = vmatmul.mubr.f32.gmra.mrb[0].mxu0 %v1052
    %v1634 = vpop.f32.mrb[0].mxu0
    %v1635 = vadd.f32 0.0, %v1634
    %v1636 = vpop.f32.mrb[0].mxu0
    %1637 = vmatprep.mubr.f32.mxu0 0.0
    %1638 = vmatmul.mubr.f32.gmra.mrb[0].mxu0 %v1053
    %v1639 = vpop.f32.mrb[0].mxu0
    %v1640 = vadd.f32 0.0, %v1639
    %v1641 = vpop.f32.mrb[0].mxu0
    %1642 = vmatprep.mubr.f32.mxu0 0.0
    %1643 = vmatmul.mubr.f32.gmra.mrb[0].mxu0 %v1054
    %v1644 = vpop.f32.mrb[0].mxu0
    %v1645 = vadd.f32 0.0, %v1644
    %v1646 = vpop.f32.mrb[0].mxu0
    %1647 = vmatprep.mubr.f32.mxu0 0.0
    %1648 = vmatmul.mubr.f32.gmra.mrb[0].mxu0 %v1055
    %v1649 = vpop.f32.mrb[0].mxu0
    %v1650 = vadd.f32 0.0, %v1649
    %v1651 = vpop.f32.mrb[0].mxu0
    %1652 = vmatprep.mubr.f32.mxu0 0.0
    %1653 = vmatmul.mubr.f32.gmra.mrb[0].mxu0 %v1056
    %v1654 = vpop.f32.mrb[0].mxu0
    %v1655 = vadd.f32 0.0, %v1654
    %v1656 = vpop.f32.mrb[0].mxu0
    %1657 = vmatprep.mubr.f32.mxu0 0.0
    %1658 = vmatmul.mubr.f32.gmra.mrb[0].mxu0 %v1057
    %v1659 = vpop.f32.mrb[0].mxu0
    %v1660 = vadd.f32 0.0, %v1659
    %v1661 = vpop.f32.mrb[0].mxu0
    %1662 = vmatprep.mubr.f32.mxu0 0.0
    %1663 = vmatmul.mubr.f32.gmra.mrb[0].mxu0 %v1058
    %v1664 = vpop.f32.mrb[0].mxu0
    %v1665 = vadd.f32 0.0, %v1664
    %v1666 = vpop.f32.mrb[0].mxu0
    %1667 = vmatprep.mubr.f32.mxu0 0.0
    %1668 = vmatmul.mubr.f32.gmra.mrb[0].mxu0 %v1059
    %v1669 = vpop.f32.mrb[0].mxu0
    %v1670 = vadd.f32 0.0, %v1669
    %v1671 = vpop.f32.mrb[0].mxu0
    %1672 = vmatprep.mubr.f32.mxu0 0.0
    %1673 = vmatmul.mubr.f32.gmra.mrb[0].mxu0 %v1060
    %v1674 = vpop.f32.mrb[0].mxu0
    %v1675 = vadd.f32 0.0, %v1674
    %v1676 = vpop.f32.mrb[0].mxu0
    %1677 = vmatprep.mubr.f32.mxu0 0.0
    %1678 = vmatmul.mubr.f32.gmra.mrb[0].mxu0 %v1061
    %v1679 = vpop.f32.mrb[0].mxu0
    %v1680 = vadd.f32 0.0, %v1679
    %v1681 = vpop.f32.mrb[0].mxu0
    %1682 = vmatprep.mubr.f32.mxu0 0.0
    %1683 = vmatmul.mubr.f32.gmra.mrb[0].mxu0 %v1062
    %v1684 = vpop.f32.mrb[0].mxu0
    %v1685 = vadd.f32 0.0, %v1684
    %v1686 = vpop.f32.mrb[0].mxu0
    %1687 = vmatprep.mubr.f32.mxu0 0.0
    %1688 = vmatmul.mubr.f32.gmra.mrb[0].mxu0 %v1063
    %v1689 = vpop.f32.mrb[0].mxu0
    %v1690 = vadd.f32 0.0, %v1689
    %v1691 = vpop.f32.mrb[0].mxu0
    %1692 = vmatprep.mubr.f32.mxu0 0.0
    %1693 = vmatmul.mubr.f32.gmra.mrb[0].mxu0 %v1064
    %v1694 = vpop.f32.mrb[0].mxu0
    %v1695 = vadd.f32 0.0, %v1694
    %v1696 = vpop.f32.mrb[0].mxu0
    %1697 = vmatprep.mubr.f32.mxu0 0.0
    %1698 = vmatmul.mubr.f32.gmra.mrb[0].mxu0 %v1065
    %v1699 = vpop.f32.mrb[0].mxu0
    %v1700 = vadd.f32 0.0, %v1699
    %v1701 = vpop.f32.mrb[0].mxu0
    %1702 = vmatprep.mubr.f32.mxu0 0.0
    %1703 = vmatmul.mubr.f32.gmra.mrb[0].mxu0 %v1066
    %v1704 = vpop.f32.mrb[0].mxu0
    %v1705 = vadd.f32 0.0, %v1704
    %v1706 = vpop.f32.mrb[0].mxu0
    %1707 = vmatprep.mubr.f32.mxu0 0.0
    %1708 = vmatmul.mubr.f32.gmra.mrb[0].mxu0 %v1067
    %v1709 = vpop.f32.mrb[0].mxu0
    %v1710 = vadd.f32 0.0, %v1709
    %v1711 = vpop.f32.mrb[0].mxu0
    %1712 = vmatprep.mubr.f32.mxu0 0.0
    %1713 = vmatmul.mubr.f32.gmra.mrb[0].mxu0 %v1068
    %v1714 = vpop.f32.mrb[0].mxu0
    %v1715 = vadd.f32 0.0, %v1714
    %v1716 = vpop.f32.mrb[0].mxu0
    %1717 = vmatprep.mubr.f32.mxu0 0.0
    %1718 = vmatmul.mubr.f32.gmra.mrb[0].mxu0 %v1069
    %v1719 = vpop.f32.mrb[0].mxu0
    %v1720 = vadd.f32 0.0, %v1719
    %v1721 = vpop.f32.mrb[0].mxu0
    %1722 = vmatprep.mubr.f32.mxu0 0.0
    %1723 = vmatmul.mubr.f32.gmra.mrb[0].mxu0 %v1070
    %v1724 = vpop.f32.mrb[0].mxu0
    %v1725 = vadd.f32 0.0, %v1724
    %v1726 = vpop.f32.mrb[0].mxu0
    %1727 = vmatprep.mubr.f32.mxu0 0.0
    %1728 = vmatmul.mubr.f32.gmra.mrb[0].mxu0 %v1071
    %v1729 = vpop.f32.mrb[0].mxu0
    %v1730 = vadd.f32 0.0, %v1729
    %v1731 = vpop.f32.mrb[0].mxu0
    %1732 = vmatprep.mubr.f32.mxu0 0.0
    %1733 = vmatmul.mubr.f32.gmra.mrb[0].mxu0 %v1072
    %v1734 = vpop.f32.mrb[0].mxu0
    %v1735 = vadd.f32 0.0, %v1734
    %v1736 = vpop.f32.mrb[0].mxu0
    %1737 = vmatprep.mubr.f32.mxu0 0.0
    %1738 = vmatmul.mubr.f32.gmra.mrb[0].mxu0 %v1073
    %v1739 = vpop.f32.mrb[0].mxu0
    %v1740 = vadd.f32 0.0, %v1739
    %v1741 = vpop.f32.mrb[0].mxu0
    %1742 = vmatprep.mubr.f32.mxu0 0.0
    %1743 = vmatmul.mubr.f32.gmra.mrb[0].mxu0 %v1074
    %v1744 = vpop.f32.mrb[0].mxu0
    %v1745 = vadd.f32 0.0, %v1744
    %v1746 = vpop.f32.mrb[0].mxu0
    %1747 = vmatprep.mubr.f32.mxu0 0.0
    %1748 = vmatmul.mubr.f32.gmra.mrb[0].mxu0 %v1075
    %v1749 = vpop.f32.mrb[0].mxu0
    %v1750 = vadd.f32 0.0, %v1749
    %v1751 = vpop.f32.mrb[0].mxu0
    %1752 = vmatprep.mubr.f32.mxu0 0.0
    %1753 = vmatmul.mubr.f32.gmra.mrb[0].mxu0 %v1076
    %v1754 = vpop.f32.mrb[0].mxu0
    %v1755 = vadd.f32 0.0, %v1754
    %v1756 = vpop.f32.mrb[0].mxu0
    %1757 = vmatprep.mubr.f32.mxu0 0.0
    %1758 = vmatmul.mubr.f32.gmra.mrb[0].mxu0 %v1077
    %v1759 = vpop.f32.mrb[0].mxu0
    %v1760 = vadd.f32 0.0, %v1759
    %v1761 = vpop.f32.mrb[0].mxu0
    %1762 = vmatprep.mubr.f32.mxu0 0.0
    %1763 = vmatmul.mubr.f32.gmra.mrb[0].mxu0 %v1078
    %v1764 = vpop.f32.mrb[0].mxu0
    %v1765 = vadd.f32 0.0, %v1764
    %v1766 = vpop.f32.mrb[0].mxu0
    %1767 = vmatprep.mubr.f32.mxu0 0.0
    %1768 = vmatmul.mubr.f32.gmra.mrb[0].mxu0 %v1079
    %v1769 = vpop.f32.mrb[0].mxu0
    %v1770 = vadd.f32 0.0, %v1769
    %v1771 = vpop.f32.mrb[0].mxu0
    %1772 = vmatprep.mubr.f32.mxu0 0.0
    %1773 = vmatmul.mubr.f32.gmra.mrb[0].mxu0 %v1080
    %v1774 = vpop.f32.mrb[0].mxu0
    %v1775 = vadd.f32 0.0, %v1774
    %v1776 = vpop.f32.mrb[0].mxu0
    %1777 = vmatprep.mubr.f32.mxu0 0.0
    %1778 = vmatmul.mubr.f32.gmra.mrb[0].mxu0 %v1081
    %v1779 = vpop.f32.mrb[0].mxu0
    %v1780 = vadd.f32 0.0, %v1779
    %v1781 = vpop.f32.mrb[0].mxu0
    %1782 = vmatprep.mubr.f32.mxu0 0.0
    %1783 = vmatmul.mubr.f32.gmra.mrb[0].mxu0 %v1082
    %v1784 = vpop.f32.mrb[0].mxu0
    %v1785 = vadd.f32 0.0, %v1784
    %v1786 = vpop.f32.mrb[0].mxu0
    %1787 = vmatprep.mubr.f32.mxu0 0.0
    %1788 = vmatmul.mubr.f32.gmra.mrb[0].mxu0 %v1083
    %v1789 = vpop.f32.mrb[0].mxu0
    %v1790 = vadd.f32 0.0, %v1789
    %v1791 = vpop.f32.mrb[0].mxu0
    %1792 = vmatprep.mubr.f32.mxu0 0.0
    %1793 = vmatmul.mubr.f32.gmra.mrb[0].mxu0 %v1084
    %v1794 = vpop.f32.mrb[0].mxu0
    %v1795 = vadd.f32 0.0, %v1794
    %v1796 = vpop.f32.mrb[0].mxu0
    %1797 = vmatprep.mubr.f32.mxu0 0.0
    %1798 = vmatmul.mubr.f32.gmra.mrb[0].mxu0 %v1085
    %v1799 = vpop.f32.mrb[0].mxu0
    %v1800 = vadd.f32 0.0, %v1799
    %v1801 = vpop.f32.mrb[0].mxu0
    %1802 = vmatprep.mubr.f32.mxu0 0.0
    %1803 = vmatmul.mubr.f32.gmra.mrb[0].mxu0 %v1086
    %v1804 = vpop.f32.mrb[0].mxu0
    %v1805 = vadd.f32 0.0, %v1804
    %v1806 = vpop.f32.mrb[0].mxu0
    %1807 = vdwg.mxu0
    %v1808 = vld [vmem:[%s3] sm:$0xff]
    %vm1809 = vcmp.ne.s32.totalorder %v1808, 0
    %1938 = vset.pattern.permute.xlu0 0
    %1939 = vperm.xlu0 %1938, %v1170
    %v1940 = vpop.permute.xlu0 %1939
    %1941 = vset.pattern.permute.xlu0 0
    %1942 = vperm.xlu0 %1941, %v1175
    %v1943 = vpop.permute.xlu0 %1942
    %1944 = vset.pattern.permute.xlu0 0
    %1945 = vperm.xlu0 %1944, %v1180
    %v1946 = vpop.permute.xlu0 %1945
    %1947 = vset.pattern.permute.xlu0 0
    %1948 = vperm.xlu0 %1947, %v1185
    %v1949 = vpop.permute.xlu0 %1948
    %1950 = vset.pattern.permute.xlu0 0
    %1951 = vperm.xlu0 %1950, %v1190
    %v1952 = vpop.permute.xlu0 %1951
    %1953 = vset.pattern.permute.xlu0 0
    %1954 = vperm.xlu0 %1953, %v1195
    %v1955 = vpop.permute.xlu0 %1954
    %1956 = vset.pattern.permute.xlu0 0
    %1957 = vperm.xlu0 %1956, %v1200
    %v1958 = vpop.permute.xlu0 %1957
    %1959 = vset.pattern.permute.xlu0 0
    %1960 = vperm.xlu0 %1959, %v1205
    %v1961 = vpop.permute.xlu0 %1960
    %1962 = vset.pattern.permute.xlu0 0
    %1963 = vperm.xlu0 %1962, %v1210
    %v1964 = vpop.permute.xlu0 %1963
    %1965 = vset.pattern.permute.xlu0 0
    %1966 = vperm.xlu0 %1965, %v1215
    %v1967 = vpop.permute.xlu0 %1966
    %1968 = vset.pattern.permute.xlu0 0
    %1969 = vperm.xlu0 %1968, %v1220
    %v1970 = vpop.permute.xlu0 %1969
    %1971 = vset.pattern.permute.xlu0 0
    %1972 = vperm.xlu0 %1971, %v1225
    %v1973 = vpop.permute.xlu0 %1972
    %1974 = vset.pattern.permute.xlu0 0
    %1975 = vperm.xlu0 %1974, %v1230
    %v1976 = vpop.permute.xlu0 %1975
    %1977 = vset.pattern.permute.xlu0 0
    %1978 = vperm.xlu0 %1977, %v1235
    %v1979 = vpop.permute.xlu0 %1978
    %1980 = vset.pattern.permute.xlu0 0
    %1981 = vperm.xlu0 %1980, %v1240
    %v1982 = vpop.permute.xlu0 %1981
    %1983 = vset.pattern.permute.xlu0 0
    %1984 = vperm.xlu0 %1983, %v1245
    %v1985 = vpop.permute.xlu0 %1984
    %1986 = vset.pattern.permute.xlu0 0
    %1987 = vperm.xlu0 %1986, %v1250
    %v1988 = vpop.permute.xlu0 %1987
    %1989 = vset.pattern.permute.xlu0 0
    %1990 = vperm.xlu0 %1989, %v1255
    %v1991 = vpop.permute.xlu0 %1990
    %1992 = vset.pattern.permute.xlu0 0
    %1993 = vperm.xlu0 %1992, %v1260
    %v1994 = vpop.permute.xlu0 %1993
    %1995 = vset.pattern.permute.xlu0 0
    %1996 = vperm.xlu0 %1995, %v1265
    %v1997 = vpop.permute.xlu0 %1996
    %1998 = vset.pattern.permute.xlu0 0
    %1999 = vperm.xlu0 %1998, %v1270
    %v2000 = vpop.permute.xlu0 %1999
    %2001 = vset.pattern.permute.xlu0 0
    %2002 = vperm.xlu0 %2001, %v1275
    %v2003 = vpop.permute.xlu0 %2002
    %2004 = vset.pattern.permute.xlu0 0
    %2005 = vperm.xlu0 %2004, %v1280
    %v2006 = vpop.permute.xlu0 %2005
    %2007 = vset.pattern.permute.xlu0 0
    %2008 = vperm.xlu0 %2007, %v1285
    %v2009 = vpop.permute.xlu0 %2008
    %2010 = vset.pattern.permute.xlu0 0
    %2011 = vperm.xlu0 %2010, %v1290
    %v2012 = vpop.permute.xlu0 %2011
    %2013 = vset.pattern.permute.xlu0 0
    %2014 = vperm.xlu0 %2013, %v1295
    %v2015 = vpop.permute.xlu0 %2014
    %2016 = vset.pattern.permute.xlu0 0
    %2017 = vperm.xlu0 %2016, %v1300
    %v2018 = vpop.permute.xlu0 %2017
    %2019 = vset.pattern.permute.xlu0 0
    %2020 = vperm.xlu0 %2019, %v1305
    %v2021 = vpop.permute.xlu0 %2020
    %2022 = vset.pattern.permute.xlu0 0
    %2023 = vperm.xlu0 %2022, %v1310
    %v2024 = vpop.permute.xlu0 %2023
    %2025 = vset.pattern.permute.xlu0 0
    %2026 = vperm.xlu0 %2025, %v1315
    %v2027 = vpop.permute.xlu0 %2026
    %2028 = vset.pattern.permute.xlu0 0
    %2029 = vperm.xlu0 %2028, %v1320
    %v2030 = vpop.permute.xlu0 %2029
    %2031 = vset.pattern.permute.xlu0 0
    %2032 = vperm.xlu0 %2031, %v1325
    %v2033 = vpop.permute.xlu0 %2032
    %2034 = vset.pattern.permute.xlu0 0
    %2035 = vperm.xlu0 %2034, %v1330
    %v2036 = vpop.permute.xlu0 %2035
    %2037 = vset.pattern.permute.xlu0 0
    %2038 = vperm.xlu0 %2037, %v1335
    %v2039 = vpop.permute.xlu0 %2038
    %2040 = vset.pattern.permute.xlu0 0
    %2041 = vperm.xlu0 %2040, %v1340
    %v2042 = vpop.permute.xlu0 %2041
    %2043 = vset.pattern.permute.xlu0 0
    %2044 = vperm.xlu0 %2043, %v1345
    %v2045 = vpop.permute.xlu0 %2044
    %2046 = vset.pattern.permute.xlu0 0
    %2047 = vperm.xlu0 %2046, %v1350
    %v2048 = vpop.permute.xlu0 %2047
    %2049 = vset.pattern.permute.xlu0 0
    %2050 = vperm.xlu0 %2049, %v1355
    %v2051 = vpop.permute.xlu0 %2050
    %2052 = vset.pattern.permute.xlu0 0
    %2053 = vperm.xlu0 %2052, %v1360
    %v2054 = vpop.permute.xlu0 %2053
    %2055 = vset.pattern.permute.xlu0 0
    %2056 = vperm.xlu0 %2055, %v1365
    %v2057 = vpop.permute.xlu0 %2056
    %2058 = vset.pattern.permute.xlu0 0
    %2059 = vperm.xlu0 %2058, %v1370
    %v2060 = vpop.permute.xlu0 %2059
    %2061 = vset.pattern.permute.xlu0 0
    %2062 = vperm.xlu0 %2061, %v1375
    %v2063 = vpop.permute.xlu0 %2062
    %2064 = vset.pattern.permute.xlu0 0
    %2065 = vperm.xlu0 %2064, %v1380
    %v2066 = vpop.permute.xlu0 %2065
    %2067 = vset.pattern.permute.xlu0 0
    %2068 = vperm.xlu0 %2067, %v1385
    %v2069 = vpop.permute.xlu0 %2068
    %2070 = vset.pattern.permute.xlu0 0
    %2071 = vperm.xlu0 %2070, %v1390
    %v2072 = vpop.permute.xlu0 %2071
    %2073 = vset.pattern.permute.xlu0 0
    %2074 = vperm.xlu0 %2073, %v1395
    %v2075 = vpop.permute.xlu0 %2074
    %2076 = vset.pattern.permute.xlu0 0
    %2077 = vperm.xlu0 %2076, %v1400
    %v2078 = vpop.permute.xlu0 %2077
    %2079 = vset.pattern.permute.xlu0 0
    %2080 = vperm.xlu0 %2079, %v1405
    %v2081 = vpop.permute.xlu0 %2080
    %2082 = vset.pattern.permute.xlu0 0
    %2083 = vperm.xlu0 %2082, %v1410
    %v2084 = vpop.permute.xlu0 %2083
    %2085 = vset.pattern.permute.xlu0 0
    %2086 = vperm.xlu0 %2085, %v1415
    %v2087 = vpop.permute.xlu0 %2086
    %2088 = vset.pattern.permute.xlu0 0
    %2089 = vperm.xlu0 %2088, %v1420
    %v2090 = vpop.permute.xlu0 %2089
    %2091 = vset.pattern.permute.xlu0 0
    %2092 = vperm.xlu0 %2091, %v1425
    %v2093 = vpop.permute.xlu0 %2092
    %2094 = vset.pattern.permute.xlu0 0
    %2095 = vperm.xlu0 %2094, %v1430
    %v2096 = vpop.permute.xlu0 %2095
    %2097 = vset.pattern.permute.xlu0 0
    %2098 = vperm.xlu0 %2097, %v1435
    %v2099 = vpop.permute.xlu0 %2098
    %2100 = vset.pattern.permute.xlu0 0
    %2101 = vperm.xlu0 %2100, %v1440
    %v2102 = vpop.permute.xlu0 %2101
    %2103 = vset.pattern.permute.xlu0 0
    %2104 = vperm.xlu0 %2103, %v1445
    %v2105 = vpop.permute.xlu0 %2104
    %2106 = vset.pattern.permute.xlu0 0
    %2107 = vperm.xlu0 %2106, %v1450
    %v2108 = vpop.permute.xlu0 %2107
    %2109 = vset.pattern.permute.xlu0 0
    %2110 = vperm.xlu0 %2109, %v1455
    %v2111 = vpop.permute.xlu0 %2110
    %2112 = vset.pattern.permute.xlu0 0
    %2113 = vperm.xlu0 %2112, %v1460
    %v2114 = vpop.permute.xlu0 %2113
    %2115 = vset.pattern.permute.xlu0 0
    %2116 = vperm.xlu0 %2115, %v1465
    %v2117 = vpop.permute.xlu0 %2116
    %2118 = vset.pattern.permute.xlu0 0
    %2119 = vperm.xlu0 %2118, %v1470
    %v2120 = vpop.permute.xlu0 %2119
    %2121 = vset.pattern.permute.xlu0 0
    %2122 = vperm.xlu0 %2121, %v1475
    %v2123 = vpop.permute.xlu0 %2122
    %2124 = vset.pattern.permute.xlu0 0
    %2125 = vperm.xlu0 %2124, %v1480
    %v2126 = vpop.permute.xlu0 %2125
    %2127 = vset.pattern.permute.xlu0 0
    %2128 = vperm.xlu0 %2127, %v1485
    %v2129 = vpop.permute.xlu0 %2128
    %2130 = vset.pattern.permute.xlu0 0
    %2131 = vperm.xlu0 %2130, %v1490
    %v2132 = vpop.permute.xlu0 %2131
    %2133 = vset.pattern.permute.xlu0 0
    %2134 = vperm.xlu0 %2133, %v1495
    %v2135 = vpop.permute.xlu0 %2134
    %2136 = vset.pattern.permute.xlu0 0
    %2137 = vperm.xlu0 %2136, %v1500
    %v2138 = vpop.permute.xlu0 %2137
    %2139 = vset.pattern.permute.xlu0 0
    %2140 = vperm.xlu0 %2139, %v1505
    %v2141 = vpop.permute.xlu0 %2140
    %2142 = vset.pattern.permute.xlu0 0
    %2143 = vperm.xlu0 %2142, %v1510
    %v2144 = vpop.permute.xlu0 %2143
    %2145 = vset.pattern.permute.xlu0 0
    %2146 = vperm.xlu0 %2145, %v1515
    %v2147 = vpop.permute.xlu0 %2146
    %2148 = vset.pattern.permute.xlu0 0
    %2149 = vperm.xlu0 %2148, %v1520
    %v2150 = vpop.permute.xlu0 %2149
    %2151 = vset.pattern.permute.xlu0 0
    %2152 = vperm.xlu0 %2151, %v1525
    %v2153 = vpop.permute.xlu0 %2152
    %2154 = vset.pattern.permute.xlu0 0
    %2155 = vperm.xlu0 %2154, %v1530
    %v2156 = vpop.permute.xlu0 %2155
    %2157 = vset.pattern.permute.xlu0 0
    %2158 = vperm.xlu0 %2157, %v1535
    %v2159 = vpop.permute.xlu0 %2158
    %2160 = vset.pattern.permute.xlu0 0
    %2161 = vperm.xlu0 %2160, %v1540
    %v2162 = vpop.permute.xlu0 %2161
    %2163 = vset.pattern.permute.xlu0 0
    %2164 = vperm.xlu0 %2163, %v1545
    %v2165 = vpop.permute.xlu0 %2164
    %2166 = vset.pattern.permute.xlu0 0
    %2167 = vperm.xlu0 %2166, %v1550
    %v2168 = vpop.permute.xlu0 %2167
    %2169 = vset.pattern.permute.xlu0 0
    %2170 = vperm.xlu0 %2169, %v1555
    %v2171 = vpop.permute.xlu0 %2170
    %2172 = vset.pattern.permute.xlu0 0
    %2173 = vperm.xlu0 %2172, %v1560
    %v2174 = vpop.permute.xlu0 %2173
    %2175 = vset.pattern.permute.xlu0 0
    %2176 = vperm.xlu0 %2175, %v1565
    %v2177 = vpop.permute.xlu0 %2176
    %2178 = vset.pattern.permute.xlu0 0
    %2179 = vperm.xlu0 %2178, %v1570
    %v2180 = vpop.permute.xlu0 %2179
    %2181 = vset.pattern.permute.xlu0 0
    %2182 = vperm.xlu0 %2181, %v1575
    %v2183 = vpop.permute.xlu0 %2182
    %2184 = vset.pattern.permute.xlu0 0
    %2185 = vperm.xlu0 %2184, %v1580
    %v2186 = vpop.permute.xlu0 %2185
    %2187 = vset.pattern.permute.xlu0 0
    %2188 = vperm.xlu0 %2187, %v1585
    %v2189 = vpop.permute.xlu0 %2188
    %2190 = vset.pattern.permute.xlu0 0
    %2191 = vperm.xlu0 %2190, %v1590
    %v2192 = vpop.permute.xlu0 %2191
    %2193 = vset.pattern.permute.xlu0 0
    %2194 = vperm.xlu0 %2193, %v1595
    %v2195 = vpop.permute.xlu0 %2194
    %2196 = vset.pattern.permute.xlu0 0
    %2197 = vperm.xlu0 %2196, %v1600
    %v2198 = vpop.permute.xlu0 %2197
    %2199 = vset.pattern.permute.xlu0 0
    %2200 = vperm.xlu0 %2199, %v1605
    %v2201 = vpop.permute.xlu0 %2200
    %2202 = vset.pattern.permute.xlu0 0
    %2203 = vperm.xlu0 %2202, %v1610
    %v2204 = vpop.permute.xlu0 %2203
    %2205 = vset.pattern.permute.xlu0 0
    %2206 = vperm.xlu0 %2205, %v1615
    %v2207 = vpop.permute.xlu0 %2206
    %2208 = vset.pattern.permute.xlu0 0
    %2209 = vperm.xlu0 %2208, %v1620
    %v2210 = vpop.permute.xlu0 %2209
    %2211 = vset.pattern.permute.xlu0 0
    %2212 = vperm.xlu0 %2211, %v1625
    %v2213 = vpop.permute.xlu0 %2212
    %2214 = vset.pattern.permute.xlu0 0
    %2215 = vperm.xlu0 %2214, %v1630
    %v2216 = vpop.permute.xlu0 %2215
    %2217 = vset.pattern.permute.xlu0 0
    %2218 = vperm.xlu0 %2217, %v1635
    %v2219 = vpop.permute.xlu0 %2218
    %2220 = vset.pattern.permute.xlu0 0
    %2221 = vperm.xlu0 %2220, %v1640
    %v2222 = vpop.permute.xlu0 %2221
    %2223 = vset.pattern.permute.xlu0 0
    %2224 = vperm.xlu0 %2223, %v1645
    %v2225 = vpop.permute.xlu0 %2224
    %2226 = vset.pattern.permute.xlu0 0
    %2227 = vperm.xlu0 %2226, %v1650
    %v2228 = vpop.permute.xlu0 %2227
    %2229 = vset.pattern.permute.xlu0 0
    %2230 = vperm.xlu0 %2229, %v1655
    %v2231 = vpop.permute.xlu0 %2230
    %2232 = vset.pattern.permute.xlu0 0
    %2233 = vperm.xlu0 %2232, %v1660
    %v2234 = vpop.permute.xlu0 %2233
    %2235 = vset.pattern.permute.xlu0 0
    %2236 = vperm.xlu0 %2235, %v1665
    %v2237 = vpop.permute.xlu0 %2236
    %2238 = vset.pattern.permute.xlu0 0
    %2239 = vperm.xlu0 %2238, %v1670
    %v2240 = vpop.permute.xlu0 %2239
    %2241 = vset.pattern.permute.xlu0 0
    %2242 = vperm.xlu0 %2241, %v1675
    %v2243 = vpop.permute.xlu0 %2242
    %2244 = vset.pattern.permute.xlu0 0
    %2245 = vperm.xlu0 %2244, %v1680
    %v2246 = vpop.permute.xlu0 %2245
    %2247 = vset.pattern.permute.xlu0 0
    %2248 = vperm.xlu0 %2247, %v1685
    %v2249 = vpop.permute.xlu0 %2248
    %2250 = vset.pattern.permute.xlu0 0
    %2251 = vperm.xlu0 %2250, %v1690
    %v2252 = vpop.permute.xlu0 %2251
    %2253 = vset.pattern.permute.xlu0 0
    %2254 = vperm.xlu0 %2253, %v1695
    %v2255 = vpop.permute.xlu0 %2254
    %2256 = vset.pattern.permute.xlu0 0
    %2257 = vperm.xlu0 %2256, %v1700
    %v2258 = vpop.permute.xlu0 %2257
    %2259 = vset.pattern.permute.xlu0 0
    %2260 = vperm.xlu0 %2259, %v1705
    %v2261 = vpop.permute.xlu0 %2260
    %2262 = vset.pattern.permute.xlu0 0
    %2263 = vperm.xlu0 %2262, %v1710
    %v2264 = vpop.permute.xlu0 %2263
    %2265 = vset.pattern.permute.xlu0 0
    %2266 = vperm.xlu0 %2265, %v1715
    %v2267 = vpop.permute.xlu0 %2266
    %2268 = vset.pattern.permute.xlu0 0
    %2269 = vperm.xlu0 %2268, %v1720
    %v2270 = vpop.permute.xlu0 %2269
    %2271 = vset.pattern.permute.xlu0 0
    %2272 = vperm.xlu0 %2271, %v1725
    %v2273 = vpop.permute.xlu0 %2272
    %2274 = vset.pattern.permute.xlu0 0
    %2275 = vperm.xlu0 %2274, %v1730
    %v2276 = vpop.permute.xlu0 %2275
    %2277 = vset.pattern.permute.xlu0 0
    %2278 = vperm.xlu0 %2277, %v1735
    %v2279 = vpop.permute.xlu0 %2278
    %2280 = vset.pattern.permute.xlu0 0
    %2281 = vperm.xlu0 %2280, %v1740
    %v2282 = vpop.permute.xlu0 %2281
    %2283 = vset.pattern.permute.xlu0 0
    %2284 = vperm.xlu0 %2283, %v1745
    %v2285 = vpop.permute.xlu0 %2284
    %2286 = vset.pattern.permute.xlu0 0
    %2287 = vperm.xlu0 %2286, %v1750
    %v2288 = vpop.permute.xlu0 %2287
    %2289 = vset.pattern.permute.xlu0 0
    %2290 = vperm.xlu0 %2289, %v1755
    %v2291 = vpop.permute.xlu0 %2290
    %2292 = vset.pattern.permute.xlu0 0
    %2293 = vperm.xlu0 %2292, %v1760
    %v2294 = vpop.permute.xlu0 %2293
    %2295 = vset.pattern.permute.xlu0 0
    %2296 = vperm.xlu0 %2295, %v1765
    %v2297 = vpop.permute.xlu0 %2296
    %2298 = vset.pattern.permute.xlu0 0
    %2299 = vperm.xlu0 %2298, %v1770
    %v2300 = vpop.permute.xlu0 %2299
    %2301 = vset.pattern.permute.xlu0 0
    %2302 = vperm.xlu0 %2301, %v1775
    %v2303 = vpop.permute.xlu0 %2302
    %2304 = vset.pattern.permute.xlu0 0
    %2305 = vperm.xlu0 %2304, %v1780
    %v2306 = vpop.permute.xlu0 %2305
    %2307 = vset.pattern.permute.xlu0 0
    %2308 = vperm.xlu0 %2307, %v1785
    %v2309 = vpop.permute.xlu0 %2308
    %2310 = vset.pattern.permute.xlu0 0
    %2311 = vperm.xlu0 %2310, %v1790
    %v2312 = vpop.permute.xlu0 %2311
    %2313 = vset.pattern.permute.xlu0 0
    %2314 = vperm.xlu0 %2313, %v1795
    %v2315 = vpop.permute.xlu0 %2314
    %2316 = vset.pattern.permute.xlu0 0
    %2317 = vperm.xlu0 %2316, %v1800
    %v2318 = vpop.permute.xlu0 %2317
    %2319 = vset.pattern.permute.xlu0 0
    %2320 = vperm.xlu0 %2319, %v1805
    %v2321 = vpop.permute.xlu0 %2320
    %v2322 = vlaneseq
    %v2323 = vand.u32 %v2322, 127
    %v2324 = vlaneseq
    %v2325 = vshrl.u32 %v2324, 7
    %v2326 = vsub.s32 %v2323, %v2325
    %v2327 = vrot.slane %v1940, %v2326
    %v2328 = vadd.s32 %v2323, 4294967288
    %v2329 = vlaneseq
    %v2330 = vshrl.u32 %v2329, 7
    %v2331 = vsub.s32 %v2328, %v2330
    %v2332 = vrot.slane %v1943, %v2331
    %vm2333 = vcmask 130112
    %v2334 = vsel %vm2333, %v2332, %v2327
    %v2335 = vadd.s32 %v2323, 4294967280
    %v2336 = vlaneseq
    %v2337 = vshrl.u32 %v2336, 7
    %v2338 = vsub.s32 %v2335, %v2337
    %v2339 = vrot.slane %v1946, %v2338
    %vm2340 = vcmask 195712
    %v2341 = vsel %vm2340, %v2339, %v2334
    %v2342 = vadd.s32 %v2323, 4294967272
    %v2343 = vlaneseq
    %v2344 = vshrl.u32 %v2343, 7
    %v2345 = vsub.s32 %v2342, %v2344
    %v2346 = vrot.slane %v1949, %v2345
    %vm2347 = vcmask 261312
    %v2348 = vsel %vm2347, %v2346, %v2341
    %v2349 = vadd.s32 %v2323, 4294967264
    %v2350 = vlaneseq
    %v2351 = vshrl.u32 %v2350, 7
    %v2352 = vsub.s32 %v2349, %v2351
    %v2353 = vrot.slane %v1952, %v2352
    %vm2354 = vcmask 326912
    %v2355 = vsel %vm2354, %v2353, %v2348
    %v2356 = vadd.s32 %v2323, 4294967256
    %v2357 = vlaneseq
    %v2358 = vshrl.u32 %v2357, 7
    %v2359 = vsub.s32 %v2356, %v2358
    %v2360 = vrot.slane %v1955, %v2359
    %vm2361 = vcmask 392512
    %v2362 = vsel %vm2361, %v2360, %v2355
    %v2363 = vadd.s32 %v2323, 4294967248
    %v2364 = vlaneseq
    %v2365 = vshrl.u32 %v2364, 7
    %v2366 = vsub.s32 %v2363, %v2365
    %v2367 = vrot.slane %v1958, %v2366
    %vm2368 = vcmask 458112
    %v2369 = vsel %vm2368, %v2367, %v2362
    %v2370 = vadd.s32 %v2323, 4294967240
    %v2371 = vlaneseq
    %v2372 = vshrl.u32 %v2371, 7
    %v2373 = vsub.s32 %v2370, %v2372
    %v2374 = vrot.slane %v1961, %v2373
    %vm2375 = vcmask 523712
    %v2376 = vsel %vm2375, %v2374, %v2369
    %v2377 = vadd.s32 %v2323, 4294967232
    %v2378 = vlaneseq
    %v2379 = vshrl.u32 %v2378, 7
    %v2380 = vsub.s32 %v2377, %v2379
    %v2381 = vrot.slane %v1964, %v2380
    %vm2382 = vcmask 589312
    %v2383 = vsel %vm2382, %v2381, %v2376
    %v2384 = vadd.s32 %v2323, 4294967224
    %v2385 = vlaneseq
    %v2386 = vshrl.u32 %v2385, 7
    %v2387 = vsub.s32 %v2384, %v2386
    %v2388 = vrot.slane %v1967, %v2387
    %vm2389 = vcmask 654912
    %v2390 = vsel %vm2389, %v2388, %v2383
    %v2391 = vadd.s32 %v2323, 4294967216
    %v2392 = vlaneseq
    %v2393 = vshrl.u32 %v2392, 7
    %v2394 = vsub.s32 %v2391, %v2393
    %v2395 = vrot.slane %v1970, %v2394
    %vm2396 = vcmask 720512
    %v2397 = vsel %vm2396, %v2395, %v2390
    %v2398 = vadd.s32 %v2323, 4294967208
    %v2399 = vlaneseq
    %v2400 = vshrl.u32 %v2399, 7
    %v2401 = vsub.s32 %v2398, %v2400
    %v2402 = vrot.slane %v1973, %v2401
    %vm2403 = vcmask 786112
    %v2404 = vsel %vm2403, %v2402, %v2397
    %v2405 = vadd.s32 %v2323, 4294967200
    %v2406 = vlaneseq
    %v2407 = vshrl.u32 %v2406, 7
    %v2408 = vsub.s32 %v2405, %v2407
    %v2409 = vrot.slane %v1976, %v2408
    %vm2410 = vcmask 851712
    %v2411 = vsel %vm2410, %v2409, %v2404
    %v2412 = vadd.s32 %v2323, 4294967192
    %v2413 = vlaneseq
    %v2414 = vshrl.u32 %v2413, 7
    %v2415 = vsub.s32 %v2412, %v2414
    %v2416 = vrot.slane %v1979, %v2415
    %vm2417 = vcmask 917312
    %v2418 = vsel %vm2417, %v2416, %v2411
    %v2419 = vadd.s32 %v2323, 4294967184
    %v2420 = vlaneseq
    %v2421 = vshrl.u32 %v2420, 7
    %v2422 = vsub.s32 %v2419, %v2421
    %v2423 = vrot.slane %v1982, %v2422
    %vm2424 = vcmask 982912
    %v2425 = vsel %vm2424, %v2423, %v2418
    %v2426 = vadd.s32 %v2323, 4294967176
    %v2427 = vlaneseq
    %v2428 = vshrl.u32 %v2427, 7
    %v2429 = vsub.s32 %v2426, %v2428
    %v2430 = vrot.slane %v1985, %v2429
    %vm2431 = vcmask 1048512
    %v2432 = vsel %vm2431, %v2430, %v2425
    %v2433 = vlaneseq
    %v2434 = vshrl.u32 %v2433, 7
    %v2435 = vsub.s32 %v2323, %v2434
    %v2436 = vrot.slane %v1988, %v2435
    %v2437 = vlaneseq
    %v2438 = vshrl.u32 %v2437, 7
    %v2439 = vsub.s32 %v2328, %v2438
    %v2440 = vrot.slane %v1991, %v2439
    %v2441 = vsel %vm2333, %v2440, %v2436
    %v2442 = vlaneseq
    %v2443 = vshrl.u32 %v2442, 7
    %v2444 = vsub.s32 %v2335, %v2443
    %v2445 = vrot.slane %v1994, %v2444
    %v2446 = vsel %vm2340, %v2445, %v2441
    %v2447 = vlaneseq
    %v2448 = vshrl.u32 %v2447, 7
    %v2449 = vsub.s32 %v2342, %v2448
    %v2450 = vrot.slane %v1997, %v2449
    %v2451 = vsel %vm2347, %v2450, %v2446
    %v2452 = vlaneseq
    %v2453 = vshrl.u32 %v2452, 7
    %v2454 = vsub.s32 %v2349, %v2453
    %v2455 = vrot.slane %v2000, %v2454
    %v2456 = vsel %vm2354, %v2455, %v2451
    %v2457 = vlaneseq
    %v2458 = vshrl.u32 %v2457, 7
    %v2459 = vsub.s32 %v2356, %v2458
    %v2460 = vrot.slane %v2003, %v2459
    %v2461 = vsel %vm2361, %v2460, %v2456
    %v2462 = vlaneseq
    %v2463 = vshrl.u32 %v2462, 7
    %v2464 = vsub.s32 %v2363, %v2463
    %v2465 = vrot.slane %v2006, %v2464
    %v2466 = vsel %vm2368, %v2465, %v2461
    %v2467 = vlaneseq
    %v2468 = vshrl.u32 %v2467, 7
    %v2469 = vsub.s32 %v2370, %v2468
    %v2470 = vrot.slane %v2009, %v2469
    %v2471 = vsel %vm2375, %v2470, %v2466
    %v2472 = vlaneseq
    %v2473 = vshrl.u32 %v2472, 7
    %v2474 = vsub.s32 %v2377, %v2473
    %v2475 = vrot.slane %v2012, %v2474
    %v2476 = vsel %vm2382, %v2475, %v2471
    %v2477 = vlaneseq
    %v2478 = vshrl.u32 %v2477, 7
    %v2479 = vsub.s32 %v2384, %v2478
    %v2480 = vrot.slane %v2015, %v2479
    %v2481 = vsel %vm2389, %v2480, %v2476
    %v2482 = vlaneseq
    %v2483 = vshrl.u32 %v2482, 7
    %v2484 = vsub.s32 %v2391, %v2483
    %v2485 = vrot.slane %v2018, %v2484
    %v2486 = vsel %vm2396, %v2485, %v2481
    %v2487 = vlaneseq
    %v2488 = vshrl.u32 %v2487, 7
    %v2489 = vsub.s32 %v2398, %v2488
    %v2490 = vrot.slane %v2021, %v2489
    %v2491 = vsel %vm2403, %v2490, %v2486
    %v2492 = vlaneseq
    %v2493 = vshrl.u32 %v2492, 7
    %v2494 = vsub.s32 %v2405, %v2493
    %v2495 = vrot.slane %v2024, %v2494
    %v2496 = vsel %vm2410, %v2495, %v2491
    %v2497 = vlaneseq
    %v2498 = vshrl.u32 %v2497, 7
    %v2499 = vsub.s32 %v2412, %v2498
    %v2500 = vrot.slane %v2027, %v2499
    %v2501 = vsel %vm2417, %v2500, %v2496
    %v2502 = vlaneseq
    %v2503 = vshrl.u32 %v2502, 7
    %v2504 = vsub.s32 %v2419, %v2503
    %v2505 = vrot.slane %v2030, %v2504
    %v2506 = vsel %vm2424, %v2505, %v2501
    %v2507 = vlaneseq
    %v2508 = vshrl.u32 %v2507, 7
    %v2509 = vsub.s32 %v2426, %v2508
    %v2510 = vrot.slane %v2033, %v2509
    %v2511 = vsel %vm2431, %v2510, %v2506
    %v2512 = vlaneseq
    %v2513 = vshrl.u32 %v2512, 7
    %v2514 = vsub.s32 %v2323, %v2513
    %v2515 = vrot.slane %v2036, %v2514
    %v2516 = vlaneseq
    %v2517 = vshrl.u32 %v2516, 7
    %v2518 = vsub.s32 %v2328, %v2517
    %v2519 = vrot.slane %v2039, %v2518
    %v2520 = vsel %vm2333, %v2519, %v2515
    %v2521 = vlaneseq
    %v2522 = vshrl.u32 %v2521, 7
    %v2523 = vsub.s32 %v2335, %v2522
    %v2524 = vrot.slane %v2042, %v2523
    %v2525 = vsel %vm2340, %v2524, %v2520
    %v2526 = vlaneseq
    %v2527 = vshrl.u32 %v2526, 7
    %v2528 = vsub.s32 %v2342, %v2527
    %v2529 = vrot.slane %v2045, %v2528
    %v2530 = vsel %vm2347, %v2529, %v2525
    %v2531 = vlaneseq
    %v2532 = vshrl.u32 %v2531, 7
    %v2533 = vsub.s32 %v2349, %v2532
    %v2534 = vrot.slane %v2048, %v2533
    %v2535 = vsel %vm2354, %v2534, %v2530
    %v2536 = vlaneseq
    %v2537 = vshrl.u32 %v2536, 7
    %v2538 = vsub.s32 %v2356, %v2537
    %v2539 = vrot.slane %v2051, %v2538
    %v2540 = vsel %vm2361, %v2539, %v2535
    %v2541 = vlaneseq
    %v2542 = vshrl.u32 %v2541, 7
    %v2543 = vsub.s32 %v2363, %v2542
    %v2544 = vrot.slane %v2054, %v2543
    %v2545 = vsel %vm2368, %v2544, %v2540
    %v2546 = vlaneseq
    %v2547 = vshrl.u32 %v2546, 7
    %v2548 = vsub.s32 %v2370, %v2547
    %v2549 = vrot.slane %v2057, %v2548
    %v2550 = vsel %vm2375, %v2549, %v2545
    %v2551 = vlaneseq
    %v2552 = vshrl.u32 %v2551, 7
    %v2553 = vsub.s32 %v2377, %v2552
    %v2554 = vrot.slane %v2060, %v2553
    %v2555 = vsel %vm2382, %v2554, %v2550
    %v2556 = vlaneseq
    %v2557 = vshrl.u32 %v2556, 7
    %v2558 = vsub.s32 %v2384, %v2557
    %v2559 = vrot.slane %v2063, %v2558
    %v2560 = vsel %vm2389, %v2559, %v2555
    %v2561 = vlaneseq
    %v2562 = vshrl.u32 %v2561, 7
    %v2563 = vsub.s32 %v2391, %v2562
    %v2564 = vrot.slane %v2066, %v2563
    %v2565 = vsel %vm2396, %v2564, %v2560
    %v2566 = vlaneseq
    %v2567 = vshrl.u32 %v2566, 7
    %v2568 = vsub.s32 %v2398, %v2567
    %v2569 = vrot.slane %v2069, %v2568
    %v2570 = vsel %vm2403, %v2569, %v2565
    %v2571 = vlaneseq
    %v2572 = vshrl.u32 %v2571, 7
    %v2573 = vsub.s32 %v2405, %v2572
    %v2574 = vrot.slane %v2072, %v2573
    %v2575 = vsel %vm2410, %v2574, %v2570
    %v2576 = vlaneseq
    %v2577 = vshrl.u32 %v2576, 7
    %v2578 = vsub.s32 %v2412, %v2577
    %v2579 = vrot.slane %v2075, %v2578
    %v2580 = vsel %vm2417, %v2579, %v2575
    %v2581 = vlaneseq
    %v2582 = vshrl.u32 %v2581, 7
    %v2583 = vsub.s32 %v2419, %v2582
    %v2584 = vrot.slane %v2078, %v2583
    %v2585 = vsel %vm2424, %v2584, %v2580
    %v2586 = vlaneseq
    %v2587 = vshrl.u32 %v2586, 7
    %v2588 = vsub.s32 %v2426, %v2587
    %v2589 = vrot.slane %v2081, %v2588
    %v2590 = vsel %vm2431, %v2589, %v2585
    %v2591 = vlaneseq
    %v2592 = vshrl.u32 %v2591, 7
    %v2593 = vsub.s32 %v2323, %v2592
    %v2594 = vrot.slane %v2084, %v2593
    %v2595 = vlaneseq
    %v2596 = vshrl.u32 %v2595, 7
    %v2597 = vsub.s32 %v2328, %v2596
    %v2598 = vrot.slane %v2087, %v2597
    %v2599 = vsel %vm2333, %v2598, %v2594
    %v2600 = vlaneseq
    %v2601 = vshrl.u32 %v2600, 7
    %v2602 = vsub.s32 %v2335, %v2601
    %v2603 = vrot.slane %v2090, %v2602
    %v2604 = vsel %vm2340, %v2603, %v2599
    %v2605 = vlaneseq
    %v2606 = vshrl.u32 %v2605, 7
    %v2607 = vsub.s32 %v2342, %v2606
    %v2608 = vrot.slane %v2093, %v2607
    %v2609 = vsel %vm2347, %v2608, %v2604
    %v2610 = vlaneseq
    %v2611 = vshrl.u32 %v2610, 7
    %v2612 = vsub.s32 %v2349, %v2611
    %v2613 = vrot.slane %v2096, %v2612
    %v2614 = vsel %vm2354, %v2613, %v2609
    %v2615 = vlaneseq
    %v2616 = vshrl.u32 %v2615, 7
    %v2617 = vsub.s32 %v2356, %v2616
    %v2618 = vrot.slane %v2099, %v2617
    %v2619 = vsel %vm2361, %v2618, %v2614
    %v2620 = vlaneseq
    %v2621 = vshrl.u32 %v2620, 7
    %v2622 = vsub.s32 %v2363, %v2621
    %v2623 = vrot.slane %v2102, %v2622
    %v2624 = vsel %vm2368, %v2623, %v2619
    %v2625 = vlaneseq
    %v2626 = vshrl.u32 %v2625, 7
    %v2627 = vsub.s32 %v2370, %v2626
    %v2628 = vrot.slane %v2105, %v2627
    %v2629 = vsel %vm2375, %v2628, %v2624
    %v2630 = vlaneseq
    %v2631 = vshrl.u32 %v2630, 7
    %v2632 = vsub.s32 %v2377, %v2631
    %v2633 = vrot.slane %v2108, %v2632
    %v2634 = vsel %vm2382, %v2633, %v2629
    %v2635 = vlaneseq
    %v2636 = vshrl.u32 %v2635, 7
    %v2637 = vsub.s32 %v2384, %v2636
    %v2638 = vrot.slane %v2111, %v2637
    %v2639 = vsel %vm2389, %v2638, %v2634
    %v2640 = vlaneseq
    %v2641 = vshrl.u32 %v2640, 7
    %v2642 = vsub.s32 %v2391, %v2641
    %v2643 = vrot.slane %v2114, %v2642
    %v2644 = vsel %vm2396, %v2643, %v2639
    %v2645 = vlaneseq
    %v2646 = vshrl.u32 %v2645, 7
    %v2647 = vsub.s32 %v2398, %v2646
    %v2648 = vrot.slane %v2117, %v2647
    %v2649 = vsel %vm2403, %v2648, %v2644
    %v2650 = vlaneseq
    %v2651 = vshrl.u32 %v2650, 7
    %v2652 = vsub.s32 %v2405, %v2651
    %v2653 = vrot.slane %v2120, %v2652
    %v2654 = vsel %vm2410, %v2653, %v2649
    %v2655 = vlaneseq
    %v2656 = vshrl.u32 %v2655, 7
    %v2657 = vsub.s32 %v2412, %v2656
    %v2658 = vrot.slane %v2123, %v2657
    %v2659 = vsel %vm2417, %v2658, %v2654
    %v2660 = vlaneseq
    %v2661 = vshrl.u32 %v2660, 7
    %v2662 = vsub.s32 %v2419, %v2661
    %v2663 = vrot.slane %v2126, %v2662
    %v2664 = vsel %vm2424, %v2663, %v2659
    %v2665 = vlaneseq
    %v2666 = vshrl.u32 %v2665, 7
    %v2667 = vsub.s32 %v2426, %v2666
    %v2668 = vrot.slane %v2129, %v2667
    %v2669 = vsel %vm2431, %v2668, %v2664
    %v2670 = vlaneseq
    %v2671 = vshrl.u32 %v2670, 7
    %v2672 = vsub.s32 %v2323, %v2671
    %v2673 = vrot.slane %v2132, %v2672
    %v2674 = vlaneseq
    %v2675 = vshrl.u32 %v2674, 7
    %v2676 = vsub.s32 %v2328, %v2675
    %v2677 = vrot.slane %v2135, %v2676
    %v2678 = vsel %vm2333, %v2677, %v2673
    %v2679 = vlaneseq
    %v2680 = vshrl.u32 %v2679, 7
    %v2681 = vsub.s32 %v2335, %v2680
    %v2682 = vrot.slane %v2138, %v2681
    %v2683 = vsel %vm2340, %v2682, %v2678
    %v2684 = vlaneseq
    %v2685 = vshrl.u32 %v2684, 7
    %v2686 = vsub.s32 %v2342, %v2685
    %v2687 = vrot.slane %v2141, %v2686
    %v2688 = vsel %vm2347, %v2687, %v2683
    %v2689 = vlaneseq
    %v2690 = vshrl.u32 %v2689, 7
    %v2691 = vsub.s32 %v2349, %v2690
    %v2692 = vrot.slane %v2144, %v2691
    %v2693 = vsel %vm2354, %v2692, %v2688
    %v2694 = vlaneseq
    %v2695 = vshrl.u32 %v2694, 7
    %v2696 = vsub.s32 %v2356, %v2695
    %v2697 = vrot.slane %v2147, %v2696
    %v2698 = vsel %vm2361, %v2697, %v2693
    %v2699 = vlaneseq
    %v2700 = vshrl.u32 %v2699, 7
    %v2701 = vsub.s32 %v2363, %v2700
    %v2702 = vrot.slane %v2150, %v2701
    %v2703 = vsel %vm2368, %v2702, %v2698
    %v2704 = vlaneseq
    %v2705 = vshrl.u32 %v2704, 7
    %v2706 = vsub.s32 %v2370, %v2705
    %v2707 = vrot.slane %v2153, %v2706
    %v2708 = vsel %vm2375, %v2707, %v2703
    %v2709 = vlaneseq
    %v2710 = vshrl.u32 %v2709, 7
    %v2711 = vsub.s32 %v2377, %v2710
    %v2712 = vrot.slane %v2156, %v2711
    %v2713 = vsel %vm2382, %v2712, %v2708
    %v2714 = vlaneseq
    %v2715 = vshrl.u32 %v2714, 7
    %v2716 = vsub.s32 %v2384, %v2715
    %v2717 = vrot.slane %v2159, %v2716
    %v2718 = vsel %vm2389, %v2717, %v2713
    %v2719 = vlaneseq
    %v2720 = vshrl.u32 %v2719, 7
    %v2721 = vsub.s32 %v2391, %v2720
    %v2722 = vrot.slane %v2162, %v2721
    %v2723 = vsel %vm2396, %v2722, %v2718
    %v2724 = vlaneseq
    %v2725 = vshrl.u32 %v2724, 7
    %v2726 = vsub.s32 %v2398, %v2725
    %v2727 = vrot.slane %v2165, %v2726
    %v2728 = vsel %vm2403, %v2727, %v2723
    %v2729 = vlaneseq
    %v2730 = vshrl.u32 %v2729, 7
    %v2731 = vsub.s32 %v2405, %v2730
    %v2732 = vrot.slane %v2168, %v2731
    %v2733 = vsel %vm2410, %v2732, %v2728
    %v2734 = vlaneseq
    %v2735 = vshrl.u32 %v2734, 7
    %v2736 = vsub.s32 %v2412, %v2735
    %v2737 = vrot.slane %v2171, %v2736
    %v2738 = vsel %vm2417, %v2737, %v2733
    %v2739 = vlaneseq
    %v2740 = vshrl.u32 %v2739, 7
    %v2741 = vsub.s32 %v2419, %v2740
    %v2742 = vrot.slane %v2174, %v2741
    %v2743 = vsel %vm2424, %v2742, %v2738
    %v2744 = vlaneseq
    %v2745 = vshrl.u32 %v2744, 7
    %v2746 = vsub.s32 %v2426, %v2745
    %v2747 = vrot.slane %v2177, %v2746
    %v2748 = vsel %vm2431, %v2747, %v2743
    %v2749 = vlaneseq
    %v2750 = vshrl.u32 %v2749, 7
    %v2751 = vsub.s32 %v2323, %v2750
    %v2752 = vrot.slane %v2180, %v2751
    %v2753 = vlaneseq
    %v2754 = vshrl.u32 %v2753, 7
    %v2755 = vsub.s32 %v2328, %v2754
    %v2756 = vrot.slane %v2183, %v2755
    %v2757 = vsel %vm2333, %v2756, %v2752
    %v2758 = vlaneseq
    %v2759 = vshrl.u32 %v2758, 7
    %v2760 = vsub.s32 %v2335, %v2759
    %v2761 = vrot.slane %v2186, %v2760
    %v2762 = vsel %vm2340, %v2761, %v2757
    %v2763 = vlaneseq
    %v2764 = vshrl.u32 %v2763, 7
    %v2765 = vsub.s32 %v2342, %v2764
    %v2766 = vrot.slane %v2189, %v2765
    %v2767 = vsel %vm2347, %v2766, %v2762
    %v2768 = vlaneseq
    %v2769 = vshrl.u32 %v2768, 7
    %v2770 = vsub.s32 %v2349, %v2769
    %v2771 = vrot.slane %v2192, %v2770
    %v2772 = vsel %vm2354, %v2771, %v2767
    %v2773 = vlaneseq
    %v2774 = vshrl.u32 %v2773, 7
    %v2775 = vsub.s32 %v2356, %v2774
    %v2776 = vrot.slane %v2195, %v2775
    %v2777 = vsel %vm2361, %v2776, %v2772
    %v2778 = vlaneseq
    %v2779 = vshrl.u32 %v2778, 7
    %v2780 = vsub.s32 %v2363, %v2779
    %v2781 = vrot.slane %v2198, %v2780
    %v2782 = vsel %vm2368, %v2781, %v2777
    %v2783 = vlaneseq
    %v2784 = vshrl.u32 %v2783, 7
    %v2785 = vsub.s32 %v2370, %v2784
    %v2786 = vrot.slane %v2201, %v2785
    %v2787 = vsel %vm2375, %v2786, %v2782
    %v2788 = vlaneseq
    %v2789 = vshrl.u32 %v2788, 7
    %v2790 = vsub.s32 %v2377, %v2789
    %v2791 = vrot.slane %v2204, %v2790
    %v2792 = vsel %vm2382, %v2791, %v2787
    %v2793 = vlaneseq
    %v2794 = vshrl.u32 %v2793, 7
    %v2795 = vsub.s32 %v2384, %v2794
    %v2796 = vrot.slane %v2207, %v2795
    %v2797 = vsel %vm2389, %v2796, %v2792
    %v2798 = vlaneseq
    %v2799 = vshrl.u32 %v2798, 7
    %v2800 = vsub.s32 %v2391, %v2799
    %v2801 = vrot.slane %v2210, %v2800
    %v2802 = vsel %vm2396, %v2801, %v2797
    %v2803 = vlaneseq
    %v2804 = vshrl.u32 %v2803, 7
    %v2805 = vsub.s32 %v2398, %v2804
    %v2806 = vrot.slane %v2213, %v2805
    %v2807 = vsel %vm2403, %v2806, %v2802
    %v2808 = vlaneseq
    %v2809 = vshrl.u32 %v2808, 7
    %v2810 = vsub.s32 %v2405, %v2809
    %v2811 = vrot.slane %v2216, %v2810
    %v2812 = vsel %vm2410, %v2811, %v2807
    %v2813 = vlaneseq
    %v2814 = vshrl.u32 %v2813, 7
    %v2815 = vsub.s32 %v2412, %v2814
    %v2816 = vrot.slane %v2219, %v2815
    %v2817 = vsel %vm2417, %v2816, %v2812
    %v2818 = vlaneseq
    %v2819 = vshrl.u32 %v2818, 7
    %v2820 = vsub.s32 %v2419, %v2819
    %v2821 = vrot.slane %v2222, %v2820
    %v2822 = vsel %vm2424, %v2821, %v2817
    %v2823 = vlaneseq
    %v2824 = vshrl.u32 %v2823, 7
    %v2825 = vsub.s32 %v2426, %v2824
    %v2826 = vrot.slane %v2225, %v2825
    %v2827 = vsel %vm2431, %v2826, %v2822
    %v2828 = vlaneseq
    %v2829 = vshrl.u32 %v2828, 7
    %v2830 = vsub.s32 %v2323, %v2829
    %v2831 = vrot.slane %v2228, %v2830
    %v2832 = vlaneseq
    %v2833 = vshrl.u32 %v2832, 7
    %v2834 = vsub.s32 %v2328, %v2833
    %v2835 = vrot.slane %v2231, %v2834
    %v2836 = vsel %vm2333, %v2835, %v2831
    %v2837 = vlaneseq
    %v2838 = vshrl.u32 %v2837, 7
    %v2839 = vsub.s32 %v2335, %v2838
    %v2840 = vrot.slane %v2234, %v2839
    %v2841 = vsel %vm2340, %v2840, %v2836
    %v2842 = vlaneseq
    %v2843 = vshrl.u32 %v2842, 7
    %v2844 = vsub.s32 %v2342, %v2843
    %v2845 = vrot.slane %v2237, %v2844
    %v2846 = vsel %vm2347, %v2845, %v2841
    %v2847 = vlaneseq
    %v2848 = vshrl.u32 %v2847, 7
    %v2849 = vsub.s32 %v2349, %v2848
    %v2850 = vrot.slane %v2240, %v2849
    %v2851 = vsel %vm2354, %v2850, %v2846
    %v2852 = vlaneseq
    %v2853 = vshrl.u32 %v2852, 7
    %v2854 = vsub.s32 %v2356, %v2853
    %v2855 = vrot.slane %v2243, %v2854
    %v2856 = vsel %vm2361, %v2855, %v2851
    %v2857 = vlaneseq
    %v2858 = vshrl.u32 %v2857, 7
    %v2859 = vsub.s32 %v2363, %v2858
    %v2860 = vrot.slane %v2246, %v2859
    %v2861 = vsel %vm2368, %v2860, %v2856
    %v2862 = vlaneseq
    %v2863 = vshrl.u32 %v2862, 7
    %v2864 = vsub.s32 %v2370, %v2863
    %v2865 = vrot.slane %v2249, %v2864
    %v2866 = vsel %vm2375, %v2865, %v2861
    %v2867 = vlaneseq
    %v2868 = vshrl.u32 %v2867, 7
    %v2869 = vsub.s32 %v2377, %v2868
    %v2870 = vrot.slane %v2252, %v2869
    %v2871 = vsel %vm2382, %v2870, %v2866
    %v2872 = vlaneseq
    %v2873 = vshrl.u32 %v2872, 7
    %v2874 = vsub.s32 %v2384, %v2873
    %v2875 = vrot.slane %v2255, %v2874
    %v2876 = vsel %vm2389, %v2875, %v2871
    %v2877 = vlaneseq
    %v2878 = vshrl.u32 %v2877, 7
    %v2879 = vsub.s32 %v2391, %v2878
    %v2880 = vrot.slane %v2258, %v2879
    %v2881 = vsel %vm2396, %v2880, %v2876
    %v2882 = vlaneseq
    %v2883 = vshrl.u32 %v2882, 7
    %v2884 = vsub.s32 %v2398, %v2883
    %v2885 = vrot.slane %v2261, %v2884
    %v2886 = vsel %vm2403, %v2885, %v2881
    %v2887 = vlaneseq
    %v2888 = vshrl.u32 %v2887, 7
    %v2889 = vsub.s32 %v2405, %v2888
    %v2890 = vrot.slane %v2264, %v2889
    %v2891 = vsel %vm2410, %v2890, %v2886
    %v2892 = vlaneseq
    %v2893 = vshrl.u32 %v2892, 7
    %v2894 = vsub.s32 %v2412, %v2893
    %v2895 = vrot.slane %v2267, %v2894
    %v2896 = vsel %vm2417, %v2895, %v2891
    %v2897 = vlaneseq
    %v2898 = vshrl.u32 %v2897, 7
    %v2899 = vsub.s32 %v2419, %v2898
    %v2900 = vrot.slane %v2270, %v2899
    %v2901 = vsel %vm2424, %v2900, %v2896
    %v2902 = vlaneseq
    %v2903 = vshrl.u32 %v2902, 7
    %v2904 = vsub.s32 %v2426, %v2903
    %v2905 = vrot.slane %v2273, %v2904
    %v2906 = vsel %vm2431, %v2905, %v2901
    %v2907 = vlaneseq
    %v2908 = vshrl.u32 %v2907, 7
    %v2909 = vsub.s32 %v2323, %v2908
    %v2910 = vrot.slane %v2276, %v2909
    %v2911 = vlaneseq
    %v2912 = vshrl.u32 %v2911, 7
    %v2913 = vsub.s32 %v2328, %v2912
    %v2914 = vrot.slane %v2279, %v2913
    %v2915 = vsel %vm2333, %v2914, %v2910
    %v2916 = vlaneseq
    %v2917 = vshrl.u32 %v2916, 7
    %v2918 = vsub.s32 %v2335, %v2917
    %v2919 = vrot.slane %v2282, %v2918
    %v2920 = vsel %vm2340, %v2919, %v2915
    %v2921 = vlaneseq
    %v2922 = vshrl.u32 %v2921, 7
    %v2923 = vsub.s32 %v2342, %v2922
    %v2924 = vrot.slane %v2285, %v2923
    %v2925 = vsel %vm2347, %v2924, %v2920
    %v2926 = vlaneseq
    %v2927 = vshrl.u32 %v2926, 7
    %v2928 = vsub.s32 %v2349, %v2927
    %v2929 = vrot.slane %v2288, %v2928
    %v2930 = vsel %vm2354, %v2929, %v2925
    %v2931 = vlaneseq
    %v2932 = vshrl.u32 %v2931, 7
    %v2933 = vsub.s32 %v2356, %v2932
    %v2934 = vrot.slane %v2291, %v2933
    %v2935 = vsel %vm2361, %v2934, %v2930
    %v2936 = vlaneseq
    %v2937 = vshrl.u32 %v2936, 7
    %v2938 = vsub.s32 %v2363, %v2937
    %v2939 = vrot.slane %v2294, %v2938
    %v2940 = vsel %vm2368, %v2939, %v2935
    %v2941 = vlaneseq
    %v2942 = vshrl.u32 %v2941, 7
    %v2943 = vsub.s32 %v2370, %v2942
    %v2944 = vrot.slane %v2297, %v2943
    %v2945 = vsel %vm2375, %v2944, %v2940
    %v2946 = vlaneseq
    %v2947 = vshrl.u32 %v2946, 7
    %v2948 = vsub.s32 %v2377, %v2947
    %v2949 = vrot.slane %v2300, %v2948
    %v2950 = vsel %vm2382, %v2949, %v2945
    %v2951 = vlaneseq
    %v2952 = vshrl.u32 %v2951, 7
    %v2953 = vsub.s32 %v2384, %v2952
    %v2954 = vrot.slane %v2303, %v2953
    %v2955 = vsel %vm2389, %v2954, %v2950
    %v2956 = vlaneseq
    %v2957 = vshrl.u32 %v2956, 7
    %v2958 = vsub.s32 %v2391, %v2957
    %v2959 = vrot.slane %v2306, %v2958
    %v2960 = vsel %vm2396, %v2959, %v2955
    %v2961 = vlaneseq
    %v2962 = vshrl.u32 %v2961, 7
    %v2963 = vsub.s32 %v2398, %v2962
    %v2964 = vrot.slane %v2309, %v2963
    %v2965 = vsel %vm2403, %v2964, %v2960
    %v2966 = vlaneseq
    %v2967 = vshrl.u32 %v2966, 7
    %v2968 = vsub.s32 %v2405, %v2967
    %v2969 = vrot.slane %v2312, %v2968
    %v2970 = vsel %vm2410, %v2969, %v2965
    %v2971 = vlaneseq
    %v2972 = vshrl.u32 %v2971, 7
    %v2973 = vsub.s32 %v2412, %v2972
    %v2974 = vrot.slane %v2315, %v2973
    %v2975 = vsel %vm2417, %v2974, %v2970
    %v2976 = vlaneseq
    %v2977 = vshrl.u32 %v2976, 7
    %v2978 = vsub.s32 %v2419, %v2977
    %v2979 = vrot.slane %v2318, %v2978
    %v2980 = vsel %vm2424, %v2979, %v2975
    %v2981 = vlaneseq
    %v2982 = vshrl.u32 %v2981, 7
    %v2983 = vsub.s32 %v2426, %v2982
    %v2984 = vrot.slane %v2321, %v2983
    %v2985 = vsel %vm2431, %v2984, %v2980
    %vm2986 = vcmask 1041409
    %v2987 = vsel %vm2986, %v2511, %v2432
    %vm2988 = vcmask 1042434
    %v2989 = vsel %vm2988, %v2590, %v2987
    %vm2990 = vcmask 1043459
    %v2991 = vsel %vm2990, %v2669, %v2989
    %vm2992 = vcmask 1044484
    %v2993 = vsel %vm2992, %v2748, %v2991
    %vm2994 = vcmask 1045509
    %v2995 = vsel %vm2994, %v2827, %v2993
    %vm2996 = vcmask 1046534
    %v2997 = vsel %vm2996, %v2906, %v2995
    %vm2998 = vcmask 1047559
    %v2999 = vsel %vm2998, %v2985, %v2997
    %v3001 = vsel %vm1809, -1e+30, %v2999
    %3002 = vmax.xlane.f32.xlu0 %v3001
    %v3003 = vpop.xlane.xlu0 %3002
    %v3004 = vsub.f32 %v3001, %v3003
    %v3005 = vmul.f32 %v3004, 1.442695
    %v3006 = vpow.pop %v3005
    %3007 = vadd.xlane.f32.xlu0 %v3006
    %v3008 = vpop.xlane.xlu0 %3007
    %v3009 = vrcp.pop %v3008
    %v3010 = vmul.f32 %v3006, %v3009
    %v3011 = vpack.c.bf16 %v3010, %v3010
    %v3014 = vunpack.c.l.s4 1966171168
    %v3015 = vunpack.c.0.s8 %v3014
    %v3016 = vlaneseq
    %v3017 = vshrl.u32 %v3016, 7
    %v3018 = vsub.s32 %v3015, %v3017
    %v3019 = vrot.slane %v3011, %v3018
    %v3020 = vcombine.high %v3019, %v3019
    %v3022 = vunpack.c.l.s4 1966171168
    %v3023 = vunpack.c.0.s8 %v3022
    %v3024 = vlaneseq
    %v3025 = vshrl.u32 %v3024, 7
    %v3026 = vsub.s32 %v3023, %v3025
    %v3027 = vrot.slane %v3019, %v3026
    %v3029 = vunpack.c.l.s4 1966171168
    %v3030 = vunpack.c.0.s8 %v3029
    %v3031 = vlaneseq
    %v3032 = vshrl.u32 %v3031, 7
    %v3033 = vsub.s32 %v3030, %v3032
    %v3034 = vrot.slane %v3020, %v3033
    %v3035 = vcombine.high %v3027, %v3027
    %v3036 = vcombine.high %v3034, %v3034
    %v3037 = vunpack.i.l.s16 %v3027
    %v3038 = vunpack.i.h.s16 %v3027
    %v3039 = vunpack.i.l.s16 %v3034
    %v3040 = vunpack.i.h.s16 %v3034
    %v3041 = vunpack.i.l.s16 %v3035
    %v3042 = vunpack.i.h.s16 %v3035
    %v3043 = vunpack.i.l.s16 %v3036
    %v3044 = vunpack.i.h.s16 %v3036
    %v3045 = vld [vmem:[#allocation2] sm:$0xff]
    %v3046 = vld [vmem:[#allocation2 + $0x8] sm:$0xff]
    %v3047 = vld [vmem:[#allocation2 + $0x10] sm:$0xff]
    %v3048 = vld [vmem:[#allocation2 + $0x18] sm:$0xff]
    %v3049 = vld [vmem:[#allocation2 + $0x20] sm:$0xff]
    %v3050 = vld [vmem:[#allocation2 + $0x28] sm:$0xff]
    %v3051 = vld [vmem:[#allocation2 + $0x30] sm:$0xff]
    %v3052 = vld [vmem:[#allocation2 + $0x38] sm:$0xff]
    %v3053 = vld [vmem:[#allocation2 + $0x40] sm:$0xff]
    %v3054 = vld [vmem:[#allocation2 + $0x48] sm:$0xff]
    %v3055 = vld [vmem:[#allocation2 + $0x50] sm:$0xff]
    %v3056 = vld [vmem:[#allocation2 + $0x58] sm:$0xff]
    %v3057 = vld [vmem:[#allocation2 + $0x60] sm:$0xff]
    %v3058 = vld [vmem:[#allocation2 + $0x68] sm:$0xff]
    %v3059 = vld [vmem:[#allocation2 + $0x70] sm:$0xff]
    %v3060 = vld [vmem:[#allocation2 + $0x78] sm:$0xff]
    %v3061 = vld [vmem:[#allocation2 + $0x80] sm:$0xff]
    %v3062 = vld [vmem:[#allocation2 + $0x88] sm:$0xff]
    %v3063 = vld [vmem:[#allocation2 + $0x90] sm:$0xff]
    %v3064 = vld [vmem:[#allocation2 + $0x98] sm:$0xff]
    %v3065 = vld [vmem:[#allocation2 + $0xa0] sm:$0xff]
    %v3066 = vld [vmem:[#allocation2 + $0xa8] sm:$0xff]
    %v3067 = vld [vmem:[#allocation2 + $0xb0] sm:$0xff]
    %v3068 = vld [vmem:[#allocation2 + $0xb8] sm:$0xff]
    %v3069 = vld [vmem:[#allocation2 + $0xc0] sm:$0xff]
    %v3070 = vld [vmem:[#allocation2 + $0xc8] sm:$0xff]
    %v3071 = vld [vmem:[#allocation2 + $0xd0] sm:$0xff]
    %v3072 = vld [vmem:[#allocation2 + $0xd8] sm:$0xff]
    %v3073 = vld [vmem:[#allocation2 + $0xe0] sm:$0xff]
    %v3074 = vld [vmem:[#allocation2 + $0xe8] sm:$0xff]
    %v3075 = vld [vmem:[#allocation2 + $0xf0] sm:$0xff]
    %v3076 = vld [vmem:[#allocation2 + $0xf8] sm:$0xff]
    %v3077 = vld [vmem:[#allocation2 + $0x100] sm:$0xff]
    %v3078 = vld [vmem:[#allocation2 + $0x108] sm:$0xff]
    %v3079 = vld [vmem:[#allocation2 + $0x110] sm:$0xff]
    %v3080 = vld [vmem:[#allocation2 + $0x118] sm:$0xff]
    %v3081 = vld [vmem:[#allocation2 + $0x120] sm:$0xff]
    %v3082 = vld [vmem:[#allocation2 + $0x128] sm:$0xff]
    %v3083 = vld [vmem:[#allocation2 + $0x130] sm:$0xff]
    %v3084 = vld [vmem:[#allocation2 + $0x138] sm:$0xff]
    %v3085 = vld [vmem:[#allocation2 + $0x140] sm:$0xff]
    %v3086 = vld [vmem:[#allocation2 + $0x148] sm:$0xff]
    %v3087 = vld [vmem:[#allocation2 + $0x150] sm:$0xff]
    %v3088 = vld [vmem:[#allocation2 + $0x158] sm:$0xff]
    %v3089 = vld [vmem:[#allocation2 + $0x160] sm:$0xff]
    %v3090 = vld [vmem:[#allocation2 + $0x168] sm:$0xff]
    %v3091 = vld [vmem:[#allocation2 + $0x170] sm:$0xff]
    %v3092 = vld [vmem:[#allocation2 + $0x178] sm:$0xff]
    %v3093 = vld [vmem:[#allocation2 + $0x180] sm:$0xff]
    %v3094 = vld [vmem:[#allocation2 + $0x188] sm:$0xff]
    %v3095 = vld [vmem:[#allocation2 + $0x190] sm:$0xff]
    %v3096 = vld [vmem:[#allocation2 + $0x198] sm:$0xff]
    %v3097 = vld [vmem:[#allocation2 + $0x1a0] sm:$0xff]
    %v3098 = vld [vmem:[#allocation2 + $0x1a8] sm:$0xff]
    %v3099 = vld [vmem:[#allocation2 + $0x1b0] sm:$0xff]
    %v3100 = vld [vmem:[#allocation2 + $0x1b8] sm:$0xff]
    %v3101 = vld [vmem:[#allocation2 + $0x1c0] sm:$0xff]
    %v3102 = vld [vmem:[#allocation2 + $0x1c8] sm:$0xff]
    %v3103 = vld [vmem:[#allocation2 + $0x1d0] sm:$0xff]
    %v3104 = vld [vmem:[#allocation2 + $0x1d8] sm:$0xff]
    %v3105 = vld [vmem:[#allocation2 + $0x1e0] sm:$0xff]
    %v3106 = vld [vmem:[#allocation2 + $0x1e8] sm:$0xff]
    %v3107 = vld [vmem:[#allocation2 + $0x1f0] sm:$0xff]
    %v3108 = vld [vmem:[#allocation2 + $0x1f8] sm:$0xff]
    %v3109 = vld [vmem:[#allocation2 + $0x200] sm:$0xff]
    %v3110 = vld [vmem:[#allocation2 + $0x208] sm:$0xff]
    %v3111 = vld [vmem:[#allocation2 + $0x210] sm:$0xff]
    %v3112 = vld [vmem:[#allocation2 + $0x218] sm:$0xff]
    %v3113 = vld [vmem:[#allocation2 + $0x220] sm:$0xff]
    %v3114 = vld [vmem:[#allocation2 + $0x228] sm:$0xff]
    %v3115 = vld [vmem:[#allocation2 + $0x230] sm:$0xff]
    %v3116 = vld [vmem:[#allocation2 + $0x238] sm:$0xff]
    %v3117 = vld [vmem:[#allocation2 + $0x240] sm:$0xff]
    %v3118 = vld [vmem:[#allocation2 + $0x248] sm:$0xff]
    %v3119 = vld [vmem:[#allocation2 + $0x250] sm:$0xff]
    %v3120 = vld [vmem:[#allocation2 + $0x258] sm:$0xff]
    %v3121 = vld [vmem:[#allocation2 + $0x260] sm:$0xff]
    %v3122 = vld [vmem:[#allocation2 + $0x268] sm:$0xff]
    %v3123 = vld [vmem:[#allocation2 + $0x270] sm:$0xff]
    %v3124 = vld [vmem:[#allocation2 + $0x278] sm:$0xff]
    %v3125 = vld [vmem:[#allocation2 + $0x280] sm:$0xff]
    %v3126 = vld [vmem:[#allocation2 + $0x288] sm:$0xff]
    %v3127 = vld [vmem:[#allocation2 + $0x290] sm:$0xff]
    %v3128 = vld [vmem:[#allocation2 + $0x298] sm:$0xff]
    %v3129 = vld [vmem:[#allocation2 + $0x2a0] sm:$0xff]
    %v3130 = vld [vmem:[#allocation2 + $0x2a8] sm:$0xff]
    %v3131 = vld [vmem:[#allocation2 + $0x2b0] sm:$0xff]
    %v3132 = vld [vmem:[#allocation2 + $0x2b8] sm:$0xff]
    %v3133 = vld [vmem:[#allocation2 + $0x2c0] sm:$0xff]
    %v3134 = vld [vmem:[#allocation2 + $0x2c8] sm:$0xff]
    %v3135 = vld [vmem:[#allocation2 + $0x2d0] sm:$0xff]
    %v3136 = vld [vmem:[#allocation2 + $0x2d8] sm:$0xff]
    %v3137 = vld [vmem:[#allocation2 + $0x2e0] sm:$0xff]
    %v3138 = vld [vmem:[#allocation2 + $0x2e8] sm:$0xff]
    %v3139 = vld [vmem:[#allocation2 + $0x2f0] sm:$0xff]
    %v3140 = vld [vmem:[#allocation2 + $0x2f8] sm:$0xff]
    %v3141 = vld [vmem:[#allocation2 + $0x300] sm:$0xff]
    %v3142 = vld [vmem:[#allocation2 + $0x308] sm:$0xff]
    %v3143 = vld [vmem:[#allocation2 + $0x310] sm:$0xff]
    %v3144 = vld [vmem:[#allocation2 + $0x318] sm:$0xff]
    %v3145 = vld [vmem:[#allocation2 + $0x320] sm:$0xff]
    %v3146 = vld [vmem:[#allocation2 + $0x328] sm:$0xff]
    %v3147 = vld [vmem:[#allocation2 + $0x330] sm:$0xff]
    %v3148 = vld [vmem:[#allocation2 + $0x338] sm:$0xff]
    %v3149 = vld [vmem:[#allocation2 + $0x340] sm:$0xff]
    %v3150 = vld [vmem:[#allocation2 + $0x348] sm:$0xff]
    %v3151 = vld [vmem:[#allocation2 + $0x350] sm:$0xff]
    %v3152 = vld [vmem:[#allocation2 + $0x358] sm:$0xff]
    %v3153 = vld [vmem:[#allocation2 + $0x360] sm:$0xff]
    %v3154 = vld [vmem:[#allocation2 + $0x368] sm:$0xff]
    %v3155 = vld [vmem:[#allocation2 + $0x370] sm:$0xff]
    %v3156 = vld [vmem:[#allocation2 + $0x378] sm:$0xff]
    %v3157 = vld [vmem:[#allocation2 + $0x380] sm:$0xff]
    %v3158 = vld [vmem:[#allocation2 + $0x388] sm:$0xff]
    %v3159 = vld [vmem:[#allocation2 + $0x390] sm:$0xff]
    %v3160 = vld [vmem:[#allocation2 + $0x398] sm:$0xff]
    %v3161 = vld [vmem:[#allocation2 + $0x3a0] sm:$0xff]
    %v3162 = vld [vmem:[#allocation2 + $0x3a8] sm:$0xff]
    %v3163 = vld [vmem:[#allocation2 + $0x3b0] sm:$0xff]
    %v3164 = vld [vmem:[#allocation2 + $0x3b8] sm:$0xff]
    %v3165 = vld [vmem:[#allocation2 + $0x3c0] sm:$0xff]
    %v3166 = vld [vmem:[#allocation2 + $0x3c8] sm:$0xff]
    %v3167 = vld [vmem:[#allocation2 + $0x3d0] sm:$0xff]
    %v3168 = vld [vmem:[#allocation2 + $0x3d8] sm:$0xff]
    %v3169 = vld [vmem:[#allocation2 + $0x3e0] sm:$0xff]
    %v3170 = vld [vmem:[#allocation2 + $0x3e8] sm:$0xff]
    %v3171 = vld [vmem:[#allocation2 + $0x3f0] sm:$0xff]
    %v3172 = vld [vmem:[#allocation2 + $0x3f8] sm:$0xff]
    %v3173 = vld [vmem:[#allocation2 + $0x400] sm:$0xff]
    %v3174 = vld [vmem:[#allocation2 + $0x408] sm:$0xff]
    %v3175 = vld [vmem:[#allocation2 + $0x410] sm:$0xff]
    %v3176 = vld [vmem:[#allocation2 + $0x418] sm:$0xff]
    %v3177 = vld [vmem:[#allocation2 + $0x420] sm:$0xff]
    %v3178 = vld [vmem:[#allocation2 + $0x428] sm:$0xff]
    %v3179 = vld [vmem:[#allocation2 + $0x430] sm:$0xff]
    %v3180 = vld [vmem:[#allocation2 + $0x438] sm:$0xff]
    %v3181 = vld [vmem:[#allocation2 + $0x440] sm:$0xff]
    %v3182 = vld [vmem:[#allocation2 + $0x448] sm:$0xff]
    %v3183 = vld [vmem:[#allocation2 + $0x450] sm:$0xff]
    %v3184 = vld [vmem:[#allocation2 + $0x458] sm:$0xff]
    %v3185 = vld [vmem:[#allocation2 + $0x460] sm:$0xff]
    %v3186 = vld [vmem:[#allocation2 + $0x468] sm:$0xff]
    %v3187 = vld [vmem:[#allocation2 + $0x470] sm:$0xff]
    %v3188 = vld [vmem:[#allocation2 + $0x478] sm:$0xff]
    %v3189 = vld [vmem:[#allocation2 + $0x480] sm:$0xff]
    %v3190 = vld [vmem:[#allocation2 + $0x488] sm:$0xff]
    %v3191 = vld [vmem:[#allocation2 + $0x490] sm:$0xff]
    %v3192 = vld [vmem:[#allocation2 + $0x498] sm:$0xff]
    %v3193 = vld [vmem:[#allocation2 + $0x4a0] sm:$0xff]
    %v3194 = vld [vmem:[#allocation2 + $0x4a8] sm:$0xff]
    %v3195 = vld [vmem:[#allocation2 + $0x4b0] sm:$0xff]
    %v3196 = vld [vmem:[#allocation2 + $0x4b8] sm:$0xff]
    %v3197 = vld [vmem:[#allocation2 + $0x4c0] sm:$0xff]
    %v3198 = vld [vmem:[#allocation2 + $0x4c8] sm:$0xff]
    %v3199 = vld [vmem:[#allocation2 + $0x4d0] sm:$0xff]
    %v3200 = vld [vmem:[#allocation2 + $0x4d8] sm:$0xff]
    %v3201 = vld [vmem:[#allocation2 + $0x4e0] sm:$0xff]
    %v3202 = vld [vmem:[#allocation2 + $0x4e8] sm:$0xff]
    %v3203 = vld [vmem:[#allocation2 + $0x4f0] sm:$0xff]
    %v3204 = vld [vmem:[#allocation2 + $0x4f8] sm:$0xff]
    %v3205 = vld [vmem:[#allocation2 + $0x500] sm:$0xff]
    %v3206 = vld [vmem:[#allocation2 + $0x508] sm:$0xff]
    %v3207 = vld [vmem:[#allocation2 + $0x510] sm:$0xff]
    %v3208 = vld [vmem:[#allocation2 + $0x518] sm:$0xff]
    %v3209 = vld [vmem:[#allocation2 + $0x520] sm:$0xff]
    %v3210 = vld [vmem:[#allocation2 + $0x528] sm:$0xff]
    %v3211 = vld [vmem:[#allocation2 + $0x530] sm:$0xff]
    %v3212 = vld [vmem:[#allocation2 + $0x538] sm:$0xff]
    %v3213 = vld [vmem:[#allocation2 + $0x540] sm:$0xff]
    %v3214 = vld [vmem:[#allocation2 + $0x548] sm:$0xff]
    %v3215 = vld [vmem:[#allocation2 + $0x550] sm:$0xff]
    %v3216 = vld [vmem:[#allocation2 + $0x558] sm:$0xff]
    %v3217 = vld [vmem:[#allocation2 + $0x560] sm:$0xff]
    %v3218 = vld [vmem:[#allocation2 + $0x568] sm:$0xff]
    %v3219 = vld [vmem:[#allocation2 + $0x570] sm:$0xff]
    %v3220 = vld [vmem:[#allocation2 + $0x578] sm:$0xff]
    %v3221 = vld [vmem:[#allocation2 + $0x580] sm:$0xff]
    %v3222 = vld [vmem:[#allocation2 + $0x588] sm:$0xff]
    %v3223 = vld [vmem:[#allocation2 + $0x590] sm:$0xff]
    %v3224 = vld [vmem:[#allocation2 + $0x598] sm:$0xff]
    %v3225 = vld [vmem:[#allocation2 + $0x5a0] sm:$0xff]
    %v3226 = vld [vmem:[#allocation2 + $0x5a8] sm:$0xff]
    %v3227 = vld [vmem:[#allocation2 + $0x5b0] sm:$0xff]
    %v3228 = vld [vmem:[#allocation2 + $0x5b8] sm:$0xff]
    %v3229 = vld [vmem:[#allocation2 + $0x5c0] sm:$0xff]
    %v3230 = vld [vmem:[#allocation2 + $0x5c8] sm:$0xff]
    %v3231 = vld [vmem:[#allocation2 + $0x5d0] sm:$0xff]
    %v3232 = vld [vmem:[#allocation2 + $0x5d8] sm:$0xff]
    %v3233 = vld [vmem:[#allocation2 + $0x5e0] sm:$0xff]
    %v3234 = vld [vmem:[#allocation2 + $0x5e8] sm:$0xff]
    %v3235 = vld [vmem:[#allocation2 + $0x5f0] sm:$0xff]
    %v3236 = vld [vmem:[#allocation2 + $0x5f8] sm:$0xff]
    %v3237 = vld [vmem:[#allocation2 + $0x600] sm:$0xff]
    %v3238 = vld [vmem:[#allocation2 + $0x608] sm:$0xff]
    %v3239 = vld [vmem:[#allocation2 + $0x610] sm:$0xff]
    %v3240 = vld [vmem:[#allocation2 + $0x618] sm:$0xff]
    %v3241 = vld [vmem:[#allocation2 + $0x620] sm:$0xff]
    %v3242 = vld [vmem:[#allocation2 + $0x628] sm:$0xff]
    %v3243 = vld [vmem:[#allocation2 + $0x630] sm:$0xff]
    %v3244 = vld [vmem:[#allocation2 + $0x638] sm:$0xff]
    %v3245 = vld [vmem:[#allocation2 + $0x640] sm:$0xff]
    %v3246 = vld [vmem:[#allocation2 + $0x648] sm:$0xff]
    %v3247 = vld [vmem:[#allocation2 + $0x650] sm:$0xff]
    %v3248 = vld [vmem:[#allocation2 + $0x658] sm:$0xff]
    %v3249 = vld [vmem:[#allocation2 + $0x660] sm:$0xff]
    %v3250 = vld [vmem:[#allocation2 + $0x668] sm:$0xff]
    %v3251 = vld [vmem:[#allocation2 + $0x670] sm:$0xff]
    %v3252 = vld [vmem:[#allocation2 + $0x678] sm:$0xff]
    %v3253 = vld [vmem:[#allocation2 + $0x680] sm:$0xff]
    %v3254 = vld [vmem:[#allocation2 + $0x688] sm:$0xff]
    %v3255 = vld [vmem:[#allocation2 + $0x690] sm:$0xff]
    %v3256 = vld [vmem:[#allocation2 + $0x698] sm:$0xff]
    %v3257 = vld [vmem:[#allocation2 + $0x6a0] sm:$0xff]
    %v3258 = vld [vmem:[#allocation2 + $0x6a8] sm:$0xff]
    %v3259 = vld [vmem:[#allocation2 + $0x6b0] sm:$0xff]
    %v3260 = vld [vmem:[#allocation2 + $0x6b8] sm:$0xff]
    %v3261 = vld [vmem:[#allocation2 + $0x6c0] sm:$0xff]
    %v3262 = vld [vmem:[#allocation2 + $0x6c8] sm:$0xff]
    %v3263 = vld [vmem:[#allocation2 + $0x6d0] sm:$0xff]
    %v3264 = vld [vmem:[#allocation2 + $0x6d8] sm:$0xff]
    %v3265 = vld [vmem:[#allocation2 + $0x6e0] sm:$0xff]
    %v3266 = vld [vmem:[#allocation2 + $0x6e8] sm:$0xff]
    %v3267 = vld [vmem:[#allocation2 + $0x6f0] sm:$0xff]
    %v3268 = vld [vmem:[#allocation2 + $0x6f8] sm:$0xff]
    %v3269 = vld [vmem:[#allocation2 + $0x700] sm:$0xff]
    %v3270 = vld [vmem:[#allocation2 + $0x708] sm:$0xff]
    %v3271 = vld [vmem:[#allocation2 + $0x710] sm:$0xff]
    %v3272 = vld [vmem:[#allocation2 + $0x718] sm:$0xff]
    %v3273 = vld [vmem:[#allocation2 + $0x720] sm:$0xff]
    %v3274 = vld [vmem:[#allocation2 + $0x728] sm:$0xff]
    %v3275 = vld [vmem:[#allocation2 + $0x730] sm:$0xff]
    %v3276 = vld [vmem:[#allocation2 + $0x738] sm:$0xff]
    %v3277 = vld [vmem:[#allocation2 + $0x740] sm:$0xff]
    %v3278 = vld [vmem:[#allocation2 + $0x748] sm:$0xff]
    %v3279 = vld [vmem:[#allocation2 + $0x750] sm:$0xff]
    %v3280 = vld [vmem:[#allocation2 + $0x758] sm:$0xff]
    %v3281 = vld [vmem:[#allocation2 + $0x760] sm:$0xff]
    %v3282 = vld [vmem:[#allocation2 + $0x768] sm:$0xff]
    %v3283 = vld [vmem:[#allocation2 + $0x770] sm:$0xff]
    %v3284 = vld [vmem:[#allocation2 + $0x778] sm:$0xff]
    %v3285 = vld [vmem:[#allocation2 + $0x780] sm:$0xff]
    %v3286 = vld [vmem:[#allocation2 + $0x788] sm:$0xff]
    %v3287 = vld [vmem:[#allocation2 + $0x790] sm:$0xff]
    %v3288 = vld [vmem:[#allocation2 + $0x798] sm:$0xff]
    %v3289 = vld [vmem:[#allocation2 + $0x7a0] sm:$0xff]
    %v3290 = vld [vmem:[#allocation2 + $0x7a8] sm:$0xff]
    %v3291 = vld [vmem:[#allocation2 + $0x7b0] sm:$0xff]
    %v3292 = vld [vmem:[#allocation2 + $0x7b8] sm:$0xff]
    %v3293 = vld [vmem:[#allocation2 + $0x7c0] sm:$0xff]
    %v3294 = vld [vmem:[#allocation2 + $0x7c8] sm:$0xff]
    %v3295 = vld [vmem:[#allocation2 + $0x7d0] sm:$0xff]
    %v3296 = vld [vmem:[#allocation2 + $0x7d8] sm:$0xff]
    %v3297 = vld [vmem:[#allocation2 + $0x7e0] sm:$0xff]
    %v3298 = vld [vmem:[#allocation2 + $0x7e8] sm:$0xff]
    %v3299 = vld [vmem:[#allocation2 + $0x7f0] sm:$0xff]
    %v3300 = vld [vmem:[#allocation2 + $0x7f8] sm:$0xff]
    %v3301 = vpack.i.b16 %v3037, %v3037
    %v3302 = vlaneseq
    %v3303 = vshrl.u32 %v3302, 7
    %v3304 = vsub.s32 0, %v3303
    %v3305 = vrot.slane %v3301, %v3304
    %v3339 = vunpack.c.l.b16 %v3045
    %v3340 = vunpack.c.h.b16 %v3045
    %v3341 = vunpack.c.l.b16 %v3046
    %v3342 = vunpack.c.h.b16 %v3046
    %v3343 = vunpack.c.l.b16 %v3047
    %v3344 = vunpack.c.h.b16 %v3047
    %v3345 = vunpack.c.l.b16 %v3048
    %v3346 = vunpack.c.h.b16 %v3048
    %v3347 = vunpack.c.l.b16 %v3049
    %v3348 = vunpack.c.h.b16 %v3049
    %v3349 = vunpack.c.l.b16 %v3050
    %v3350 = vunpack.c.h.b16 %v3050
    %v3351 = vunpack.c.l.b16 %v3051
    %v3352 = vunpack.c.h.b16 %v3051
    %v3353 = vunpack.c.l.b16 %v3052
    %v3354 = vunpack.c.h.b16 %v3052
    %v3355 = vunpack.c.l.b16 %v3053
    %v3356 = vunpack.c.h.b16 %v3053
    %v3357 = vunpack.c.l.b16 %v3054
    %v3358 = vunpack.c.h.b16 %v3054
    %v3359 = vunpack.c.l.b16 %v3055
    %v3360 = vunpack.c.h.b16 %v3055
    %v3361 = vunpack.c.l.b16 %v3056
    %v3362 = vunpack.c.h.b16 %v3056
    %v3363 = vunpack.c.l.b16 %v3057
    %v3364 = vunpack.c.h.b16 %v3057
    %v3365 = vunpack.c.l.b16 %v3058
    %v3366 = vunpack.c.h.b16 %v3058
    %v3367 = vunpack.c.l.b16 %v3059
    %v3368 = vunpack.c.h.b16 %v3059
    %v3369 = vunpack.c.l.b16 %v3060
    %v3370 = vunpack.c.h.b16 %v3060
    %v3371 = vunpack.c.l.b16 %v3061
    %v3372 = vunpack.c.h.b16 %v3061
    %v3373 = vunpack.c.l.b16 %v3062
    %v3374 = vunpack.c.h.b16 %v3062
    %v3375 = vunpack.c.l.b16 %v3063
    %v3376 = vunpack.c.h.b16 %v3063
    %v3377 = vunpack.c.l.b16 %v3064
    %v3378 = vunpack.c.h.b16 %v3064
    %v3379 = vunpack.c.l.b16 %v3065
    %v3380 = vunpack.c.h.b16 %v3065
    %v3381 = vunpack.c.l.b16 %v3066
    %v3382 = vunpack.c.h.b16 %v3066
    %v3383 = vunpack.c.l.b16 %v3067
    %v3384 = vunpack.c.h.b16 %v3067
    %v3385 = vunpack.c.l.b16 %v3068
    %v3386 = vunpack.c.h.b16 %v3068
    %v3387 = vunpack.c.l.b16 %v3069
    %v3388 = vunpack.c.h.b16 %v3069
    %v3389 = vunpack.c.l.b16 %v3070
    %v3390 = vunpack.c.h.b16 %v3070
    %v3391 = vunpack.c.l.b16 %v3071
    %v3392 = vunpack.c.h.b16 %v3071
    %v3393 = vunpack.c.l.b16 %v3072
    %v3394 = vunpack.c.h.b16 %v3072
    %v3395 = vunpack.c.l.b16 %v3073
    %v3396 = vunpack.c.h.b16 %v3073
    %v3397 = vunpack.c.l.b16 %v3074
    %v3398 = vunpack.c.h.b16 %v3074
    %v3399 = vunpack.c.l.b16 %v3075
    %v3400 = vunpack.c.h.b16 %v3075
    %v3401 = vunpack.c.l.b16 %v3076
    %v3402 = vunpack.c.h.b16 %v3076
    %v3403 = vpack.c.b16 %v3343, %v3339
    %v3404 = vpack.c.b16 %v3344, %v3340
    %v3405 = vpack.c.b16 %v3345, %v3341
    %v3406 = vpack.c.b16 %v3346, %v3342
    %v3407 = vpack.c.b16 %v3351, %v3347
    %v3408 = vpack.c.b16 %v3352, %v3348
    %v3409 = vpack.c.b16 %v3353, %v3349
    %v3410 = vpack.c.b16 %v3354, %v3350
    %v3411 = vpack.c.b16 %v3359, %v3355
    %v3412 = vpack.c.b16 %v3360, %v3356
    %v3413 = vpack.c.b16 %v3361, %v3357
    %v3414 = vpack.c.b16 %v3362, %v3358
    %v3415 = vpack.c.b16 %v3367, %v3363
    %v3416 = vpack.c.b16 %v3368, %v3364
    %v3417 = vpack.c.b16 %v3369, %v3365
    %v3418 = vpack.c.b16 %v3370, %v3366
    %v3419 = vpack.c.b16 %v3375, %v3371
    %v3420 = vpack.c.b16 %v3376, %v3372
    %v3421 = vpack.c.b16 %v3377, %v3373
    %v3422 = vpack.c.b16 %v3378, %v3374
    %v3423 = vpack.c.b16 %v3383, %v3379
    %v3424 = vpack.c.b16 %v3384, %v3380
    %v3425 = vpack.c.b16 %v3385, %v3381
    %v3426 = vpack.c.b16 %v3386, %v3382
    %v3427 = vpack.c.b16 %v3391, %v3387
    %v3428 = vpack.c.b16 %v3392, %v3388
    %v3429 = vpack.c.b16 %v3393, %v3389
    %v3430 = vpack.c.b16 %v3394, %v3390
    %v3431 = vpack.c.b16 %v3399, %v3395
    %v3432 = vpack.c.b16 %v3400, %v3396
    %v3433 = vpack.c.b16 %v3401, %v3397
    %v3434 = vpack.c.b16 %v3402, %v3398
    %3467 = vmatprep.subr.bf16.mxu0 %v3404
    %3468 = vmatpush1.bf16.msra.mxu0 %v3403
    %3469 = vmatprep.subr.bf16.mxu0 %v3408
    %3470 = vmatpush1.bf16.msra.mxu0 %v3407
    %3471 = vmatprep.subr.bf16.mxu0 %v3412
    %3472 = vmatpush1.bf16.msra.mxu0 %v3411
    %3473 = vmatprep.subr.bf16.mxu0 %v3416
    %3474 = vmatpush1.bf16.msra.mxu0 %v3415
    %3475 = vmatprep.subr.bf16.mxu0 %v3420
    %3476 = vmatpush1.bf16.msra.mxu0 %v3419
    %3477 = vmatprep.subr.bf16.mxu0 %v3424
    %3478 = vmatpush1.bf16.msra.mxu0 %v3423
    %3479 = vmatprep.subr.bf16.mxu0 %v3428
    %3480 = vmatpush1.bf16.msra.mxu0 %v3427
    %3481 = vmatprep.subr.bf16.mxu0 %v3432
    %3482 = vmatpush1.bf16.msra.mxu0 %v3431
    %3483 = vmatprep.subr.bf16.mxu0 0
    %3484 = vmatpush1.bf16.msra.mxu0 0
    %3485 = vmatprep.subr.bf16.mxu0 0
    %3486 = vmatpush1.bf16.msra.mxu0 0
    %3487 = vmatprep.subr.bf16.mxu0 0
    %3488 = vmatpush1.bf16.msra.mxu0 0
    %3489 = vmatprep.subr.bf16.mxu0 0
    %3490 = vmatpush1.bf16.msra.mxu0 0
    %3491 = vmatprep.subr.bf16.mxu0 0
    %3492 = vmatpush1.bf16.msra.mxu0 0
    %3493 = vmatprep.subr.bf16.mxu0 0
    %3494 = vmatpush1.bf16.msra.mxu0 0
    %3495 = vmatprep.subr.bf16.mxu0 0
    %3496 = vmatpush1.bf16.msra.mxu0 0
    %3497 = vmatprep.subr.bf16.mxu0 0
    %3498 = vmatpush1.bf16.msra.mxu0 0
    %3499 = vmatprep.mubr.bf16.mxu0 0
    %3500 = vmatmul.mubr.bf16.gmra.mrb[0].mxu0 %v3305
    %v3501 = vpop.f32.mrb[0].mxu0
    %v3502 = vadd.f32 0.0, %v3501
    %v3503 = vpop.f32.mrb[0].mxu0
    %v3504 = vadd.f32 0.0, %v3503
    %v3505 = vpop.f32.mrb[0].mxu0
    %v3506 = vpop.f32.mrb[0].mxu0
    %3507 = vdwg.mxu0
    %3508 = vmatprep.subr.bf16.mxu0 %v3406
    %3509 = vmatpush1.bf16.msra.mxu0 %v3405
    %3510 = vmatprep.subr.bf16.mxu0 %v3410
    %3511 = vmatpush1.bf16.msra.mxu0 %v3409
    %3512 = vmatprep.subr.bf16.mxu0 %v3414
    %3513 = vmatpush1.bf16.msra.mxu0 %v3413
    %3514 = vmatprep.subr.bf16.mxu0 %v3418
    %3515 = vmatpush1.bf16.msra.mxu0 %v3417
    %3516 = vmatprep.subr.bf16.mxu0 %v3422
    %3517 = vmatpush1.bf16.msra.mxu0 %v3421
    %3518 = vmatprep.subr.bf16.mxu0 %v3426
    %3519 = vmatpush1.bf16.msra.mxu0 %v3425
    %3520 = vmatprep.subr.bf16.mxu0 %v3430
    %3521 = vmatpush1.bf16.msra.mxu0 %v3429
    %3522 = vmatprep.subr.bf16.mxu0 %v3434
    %3523 = vmatpush1.bf16.msra.mxu0 %v3433
    %3524 = vmatprep.subr.bf16.mxu0 0
    %3525 = vmatpush1.bf16.msra.mxu0 0
    %3526 = vmatprep.subr.bf16.mxu0 0
    %3527 = vmatpush1.bf16.msra.mxu0 0
    %3528 = vmatprep.subr.bf16.mxu0 0
    %3529 = vmatpush1.bf16.msra.mxu0 0
    %3530 = vmatprep.subr.bf16.mxu0 0
    %3531 = vmatpush1.bf16.msra.mxu0 0
    %3532 = vmatprep.subr.bf16.mxu0 0
    %3533 = vmatpush1.bf16.msra.mxu0 0
    %3534 = vmatprep.subr.bf16.mxu0 0
    %3535 = vmatpush1.bf16.msra.mxu0 0
    %3536 = vmatprep.subr.bf16.mxu0 0
    %3537 = vmatpush1.bf16.msra.mxu0 0
    %3538 = vmatprep.subr.bf16.mxu0 0
    %3539 = vmatpush1.bf16.msra.mxu0 0
    %3540 = vmatprep.mubr.bf16.mxu0 0
    %3541 = vmatmul.mubr.bf16.gmra.mrb[0].mxu0 %v3305
    %v3542 = vpop.f32.mrb[0].mxu0
    %v3543 = vadd.f32 0.0, %v3542
    %v3544 = vpop.f32.mrb[0].mxu0
    %v3545 = vadd.f32 0.0, %v3544
    %v3546 = vpop.f32.mrb[0].mxu0
    %v3547 = vpop.f32.mrb[0].mxu0
    %3548 = vdwg.mxu0
    %v3549 = vpack.i.b16 %v3038, %v3038
    %v3550 = vlaneseq
    %v3551 = vshrl.u32 %v3550, 7
    %v3552 = vsub.s32 0, %v3551
    %v3553 = vrot.slane %v3549, %v3552
    %v3587 = vunpack.c.l.b16 %v3077
    %v3588 = vunpack.c.h.b16 %v3077
    %v3589 = vunpack.c.l.b16 %v3078
    %v3590 = vunpack.c.h.b16 %v3078
    %v3591 = vunpack.c.l.b16 %v3079
    %v3592 = vunpack.c.h.b16 %v3079
    %v3593 = vunpack.c.l.b16 %v3080
    %v3594 = vunpack.c.h.b16 %v3080
    %v3595 = vunpack.c.l.b16 %v3081
    %v3596 = vunpack.c.h.b16 %v3081
    %v3597 = vunpack.c.l.b16 %v3082
    %v3598 = vunpack.c.h.b16 %v3082
    %v3599 = vunpack.c.l.b16 %v3083
    %v3600 = vunpack.c.h.b16 %v3083
    %v3601 = vunpack.c.l.b16 %v3084
    %v3602 = vunpack.c.h.b16 %v3084
    %v3603 = vunpack.c.l.b16 %v3085
    %v3604 = vunpack.c.h.b16 %v3085
    %v3605 = vunpack.c.l.b16 %v3086
    %v3606 = vunpack.c.h.b16 %v3086
    %v3607 = vunpack.c.l.b16 %v3087
    %v3608 = vunpack.c.h.b16 %v3087
    %v3609 = vunpack.c.l.b16 %v3088
    %v3610 = vunpack.c.h.b16 %v3088
    %v3611 = vunpack.c.l.b16 %v3089
    %v3612 = vunpack.c.h.b16 %v3089
    %v3613 = vunpack.c.l.b16 %v3090
    %v3614 = vunpack.c.h.b16 %v3090
    %v3615 = vunpack.c.l.b16 %v3091
    %v3616 = vunpack.c.h.b16 %v3091
    %v3617 = vunpack.c.l.b16 %v3092
    %v3618 = vunpack.c.h.b16 %v3092
    %v3619 = vunpack.c.l.b16 %v3093
    %v3620 = vunpack.c.h.b16 %v3093
    %v3621 = vunpack.c.l.b16 %v3094
    %v3622 = vunpack.c.h.b16 %v3094
    %v3623 = vunpack.c.l.b16 %v3095
    %v3624 = vunpack.c.h.b16 %v3095
    %v3625 = vunpack.c.l.b16 %v3096
    %v3626 = vunpack.c.h.b16 %v3096
    %v3627 = vunpack.c.l.b16 %v3097
    %v3628 = vunpack.c.h.b16 %v3097
    %v3629 = vunpack.c.l.b16 %v3098
    %v3630 = vunpack.c.h.b16 %v3098
    %v3631 = vunpack.c.l.b16 %v3099
    %v3632 = vunpack.c.h.b16 %v3099
    %v3633 = vunpack.c.l.b16 %v3100
    %v3634 = vunpack.c.h.b16 %v3100
    %v3635 = vunpack.c.l.b16 %v3101
    %v3636 = vunpack.c.h.b16 %v3101
    %v3637 = vunpack.c.l.b16 %v3102
    %v3638 = vunpack.c.h.b16 %v3102
    %v3639 = vunpack.c.l.b16 %v3103
    %v3640 = vunpack.c.h.b16 %v3103
    %v3641 = vunpack.c.l.b16 %v3104
    %v3642 = vunpack.c.h.b16 %v3104
    %v3643 = vunpack.c.l.b16 %v3105
    %v3644 = vunpack.c.h.b16 %v3105
    %v3645 = vunpack.c.l.b16 %v3106
    %v3646 = vunpack.c.h.b16 %v3106
    %v3647 = vunpack.c.l.b16 %v3107
    %v3648 = vunpack.c.h.b16 %v3107
    %v3649 = vunpack.c.l.b16 %v3108
    %v3650 = vunpack.c.h.b16 %v3108
    %v3651 = vpack.c.b16 %v3591, %v3587
    %v3652 = vpack.c.b16 %v3592, %v3588
    %v3653 = vpack.c.b16 %v3593, %v3589
    %v3654 = vpack.c.b16 %v3594, %v3590
    %v3655 = vpack.c.b16 %v3599, %v3595
    %v3656 = vpack.c.b16 %v3600, %v3596
    %v3657 = vpack.c.b16 %v3601, %v3597
    %v3658 = vpack.c.b16 %v3602, %v3598
    %v3659 = vpack.c.b16 %v3607, %v3603
    %v3660 = vpack.c.b16 %v3608, %v3604
    %v3661 = vpack.c.b16 %v3609, %v3605
    %v3662 = vpack.c.b16 %v3610, %v3606
    %v3663 = vpack.c.b16 %v3615, %v3611
    %v3664 = vpack.c.b16 %v3616, %v3612
    %v3665 = vpack.c.b16 %v3617, %v3613
    %v3666 = vpack.c.b16 %v3618, %v3614
    %v3667 = vpack.c.b16 %v3623, %v3619
    %v3668 = vpack.c.b16 %v3624, %v3620
    %v3669 = vpack.c.b16 %v3625, %v3621
    %v3670 = vpack.c.b16 %v3626, %v3622
    %v3671 = vpack.c.b16 %v3631, %v3627
    %v3672 = vpack.c.b16 %v3632, %v3628
    %v3673 = vpack.c.b16 %v3633, %v3629
    %v3674 = vpack.c.b16 %v3634, %v3630
    %v3675 = vpack.c.b16 %v3639, %v3635
    %v3676 = vpack.c.b16 %v3640, %v3636
    %v3677 = vpack.c.b16 %v3641, %v3637
    %v3678 = vpack.c.b16 %v3642, %v3638
    %v3679 = vpack.c.b16 %v3647, %v3643
    %v3680 = vpack.c.b16 %v3648, %v3644
    %v3681 = vpack.c.b16 %v3649, %v3645
    %v3682 = vpack.c.b16 %v3650, %v3646
    %3715 = vmatprep.subr.bf16.mxu0 %v3652
    %3716 = vmatpush1.bf16.msra.mxu0 %v3651
    %3717 = vmatprep.subr.bf16.mxu0 %v3656
    %3718 = vmatpush1.bf16.msra.mxu0 %v3655
    %3719 = vmatprep.subr.bf16.mxu0 %v3660
    %3720 = vmatpush1.bf16.msra.mxu0 %v3659
    %3721 = vmatprep.subr.bf16.mxu0 %v3664
    %3722 = vmatpush1.bf16.msra.mxu0 %v3663
    %3723 = vmatprep.subr.bf16.mxu0 %v3668
    %3724 = vmatpush1.bf16.msra.mxu0 %v3667
    %3725 = vmatprep.subr.bf16.mxu0 %v3672
    %3726 = vmatpush1.bf16.msra.mxu0 %v3671
    %3727 = vmatprep.subr.bf16.mxu0 %v3676
    %3728 = vmatpush1.bf16.msra.mxu0 %v3675
    %3729 = vmatprep.subr.bf16.mxu0 %v3680
    %3730 = vmatpush1.bf16.msra.mxu0 %v3679
    %3731 = vmatprep.subr.bf16.mxu0 0
    %3732 = vmatpush1.bf16.msra.mxu0 0
    %3733 = vmatprep.subr.bf16.mxu0 0
    %3734 = vmatpush1.bf16.msra.mxu0 0
    %3735 = vmatprep.subr.bf16.mxu0 0
    %3736 = vmatpush1.bf16.msra.mxu0 0
    %3737 = vmatprep.subr.bf16.mxu0 0
    %3738 = vmatpush1.bf16.msra.mxu0 0
    %3739 = vmatprep.subr.bf16.mxu0 0
    %3740 = vmatpush1.bf16.msra.mxu0 0
    %3741 = vmatprep.subr.bf16.mxu0 0
    %3742 = vmatpush1.bf16.msra.mxu0 0
    %3743 = vmatprep.subr.bf16.mxu0 0
    %3744 = vmatpush1.bf16.msra.mxu0 0
    %3745 = vmatprep.subr.bf16.mxu0 0
    %3746 = vmatpush1.bf16.msra.mxu0 0
    %3747 = vmatprep.mubr.bf16.mxu0 0
    %3748 = vmatmul.mubr.bf16.gmra.mrb[0].mxu0 %v3553
    %v3749 = vpop.f32.mrb[0].mxu0
    %v3750 = vadd.f32 0.0, %v3749
    %v3751 = vpop.f32.mrb[0].mxu0
    %v3752 = vadd.f32 0.0, %v3751
    %v3753 = vpop.f32.mrb[0].mxu0
    %v3754 = vpop.f32.mrb[0].mxu0
    %3755 = vdwg.mxu0
    %3756 = vmatprep.subr.bf16.mxu0 %v3654
    %3757 = vmatpush1.bf16.msra.mxu0 %v3653
    %3758 = vmatprep.subr.bf16.mxu0 %v3658
    %3759 = vmatpush1.bf16.msra.mxu0 %v3657
    %3760 = vmatprep.subr.bf16.mxu0 %v3662
    %3761 = vmatpush1.bf16.msra.mxu0 %v3661
    %3762 = vmatprep.subr.bf16.mxu0 %v3666
    %3763 = vmatpush1.bf16.msra.mxu0 %v3665
    %3764 = vmatprep.subr.bf16.mxu0 %v3670
    %3765 = vmatpush1.bf16.msra.mxu0 %v3669
    %3766 = vmatprep.subr.bf16.mxu0 %v3674
    %3767 = vmatpush1.bf16.msra.mxu0 %v3673
    %3768 = vmatprep.subr.bf16.mxu0 %v3678
    %3769 = vmatpush1.bf16.msra.mxu0 %v3677
    %3770 = vmatprep.subr.bf16.mxu0 %v3682
    %3771 = vmatpush1.bf16.msra.mxu0 %v3681
    %3772 = vmatprep.subr.bf16.mxu0 0
    %3773 = vmatpush1.bf16.msra.mxu0 0
    %3774 = vmatprep.subr.bf16.mxu0 0
    %3775 = vmatpush1.bf16.msra.mxu0 0
    %3776 = vmatprep.subr.bf16.mxu0 0
    %3777 = vmatpush1.bf16.msra.mxu0 0
    %3778 = vmatprep.subr.bf16.mxu0 0
    %3779 = vmatpush1.bf16.msra.mxu0 0
    %3780 = vmatprep.subr.bf16.mxu0 0
    %3781 = vmatpush1.bf16.msra.mxu0 0
    %3782 = vmatprep.subr.bf16.mxu0 0
    %3783 = vmatpush1.bf16.msra.mxu0 0
    %3784 = vmatprep.subr.bf16.mxu0 0
    %3785 = vmatpush1.bf16.msra.mxu0 0
    %3786 = vmatprep.subr.bf16.mxu0 0
    %3787 = vmatpush1.bf16.msra.mxu0 0
    %3788 = vmatprep.mubr.bf16.mxu0 0
    %3789 = vmatmul.mubr.bf16.gmra.mrb[0].mxu0 %v3553
    %v3790 = vpop.f32.mrb[0].mxu0
    %v3791 = vadd.f32 0.0, %v3790
    %v3792 = vpop.f32.mrb[0].mxu0
    %v3793 = vadd.f32 0.0, %v3792
    %v3794 = vpop.f32.mrb[0].mxu0
    %v3795 = vpop.f32.mrb[0].mxu0
    %3796 = vdwg.mxu0
    %v3797 = vpack.i.b16 %v3039, %v3039
    %v3798 = vlaneseq
    %v3799 = vshrl.u32 %v3798, 7
    %v3800 = vsub.s32 0, %v3799
    %v3801 = vrot.slane %v3797, %v3800
    %v3835 = vunpack.c.l.b16 %v3109
    %v3836 = vunpack.c.h.b16 %v3109
    %v3837 = vunpack.c.l.b16 %v3110
    %v3838 = vunpack.c.h.b16 %v3110
    %v3839 = vunpack.c.l.b16 %v3111
    %v3840 = vunpack.c.h.b16 %v3111
    %v3841 = vunpack.c.l.b16 %v3112
    %v3842 = vunpack.c.h.b16 %v3112
    %v3843 = vunpack.c.l.b16 %v3113
    %v3844 = vunpack.c.h.b16 %v3113
    %v3845 = vunpack.c.l.b16 %v3114
    %v3846 = vunpack.c.h.b16 %v3114
    %v3847 = vunpack.c.l.b16 %v3115
    %v3848 = vunpack.c.h.b16 %v3115
    %v3849 = vunpack.c.l.b16 %v3116
    %v3850 = vunpack.c.h.b16 %v3116
    %v3851 = vunpack.c.l.b16 %v3117
    %v3852 = vunpack.c.h.b16 %v3117
    %v3853 = vunpack.c.l.b16 %v3118
    %v3854 = vunpack.c.h.b16 %v3118
    %v3855 = vunpack.c.l.b16 %v3119
    %v3856 = vunpack.c.h.b16 %v3119
    %v3857 = vunpack.c.l.b16 %v3120
    %v3858 = vunpack.c.h.b16 %v3120
    %v3859 = vunpack.c.l.b16 %v3121
    %v3860 = vunpack.c.h.b16 %v3121
    %v3861 = vunpack.c.l.b16 %v3122
    %v3862 = vunpack.c.h.b16 %v3122
    %v3863 = vunpack.c.l.b16 %v3123
    %v3864 = vunpack.c.h.b16 %v3123
    %v3865 = vunpack.c.l.b16 %v3124
    %v3866 = vunpack.c.h.b16 %v3124
    %v3867 = vunpack.c.l.b16 %v3125
    %v3868 = vunpack.c.h.b16 %v3125
    %v3869 = vunpack.c.l.b16 %v3126
    %v3870 = vunpack.c.h.b16 %v3126
    %v3871 = vunpack.c.l.b16 %v3127
    %v3872 = vunpack.c.h.b16 %v3127
    %v3873 = vunpack.c.l.b16 %v3128
    %v3874 = vunpack.c.h.b16 %v3128
    %v3875 = vunpack.c.l.b16 %v3129
    %v3876 = vunpack.c.h.b16 %v3129
    %v3877 = vunpack.c.l.b16 %v3130
    %v3878 = vunpack.c.h.b16 %v3130
    %v3879 = vunpack.c.l.b16 %v3131
    %v3880 = vunpack.c.h.b16 %v3131
    %v3881 = vunpack.c.l.b16 %v3132
    %v3882 = vunpack.c.h.b16 %v3132
    %v3883 = vunpack.c.l.b16 %v3133
    %v3884 = vunpack.c.h.b16 %v3133
    %v3885 = vunpack.c.l.b16 %v3134
    %v3886 = vunpack.c.h.b16 %v3134
    %v3887 = vunpack.c.l.b16 %v3135
    %v3888 = vunpack.c.h.b16 %v3135
    %v3889 = vunpack.c.l.b16 %v3136
    %v3890 = vunpack.c.h.b16 %v3136
    %v3891 = vunpack.c.l.b16 %v3137
    %v3892 = vunpack.c.h.b16 %v3137
    %v3893 = vunpack.c.l.b16 %v3138
    %v3894 = vunpack.c.h.b16 %v3138
    %v3895 = vunpack.c.l.b16 %v3139
    %v3896 = vunpack.c.h.b16 %v3139
    %v3897 = vunpack.c.l.b16 %v3140
    %v3898 = vunpack.c.h.b16 %v3140
    %v3899 = vpack.c.b16 %v3839, %v3835
    %v3900 = vpack.c.b16 %v3840, %v3836
    %v3901 = vpack.c.b16 %v3841, %v3837
    %v3902 = vpack.c.b16 %v3842, %v3838
    %v3903 = vpack.c.b16 %v3847, %v3843
    %v3904 = vpack.c.b16 %v3848, %v3844
    %v3905 = vpack.c.b16 %v3849, %v3845
    %v3906 = vpack.c.b16 %v3850, %v3846
    %v3907 = vpack.c.b16 %v3855, %v3851
    %v3908 = vpack.c.b16 %v3856, %v3852
    %v3909 = vpack.c.b16 %v3857, %v3853
    %v3910 = vpack.c.b16 %v3858, %v3854
    %v3911 = vpack.c.b16 %v3863, %v3859
    %v3912 = vpack.c.b16 %v3864, %v3860
    %v3913 = vpack.c.b16 %v3865, %v3861
    %v3914 = vpack.c.b16 %v3866, %v3862
    %v3915 = vpack.c.b16 %v3871, %v3867
    %v3916 = vpack.c.b16 %v3872, %v3868
    %v3917 = vpack.c.b16 %v3873, %v3869
    %v3918 = vpack.c.b16 %v3874, %v3870
    %v3919 = vpack.c.b16 %v3879, %v3875
    %v3920 = vpack.c.b16 %v3880, %v3876
    %v3921 = vpack.c.b16 %v3881, %v3877
    %v3922 = vpack.c.b16 %v3882, %v3878
    %v3923 = vpack.c.b16 %v3887, %v3883
    %v3924 = vpack.c.b16 %v3888, %v3884
    %v3925 = vpack.c.b16 %v3889, %v3885
    %v3926 = vpack.c.b16 %v3890, %v3886
    %v3927 = vpack.c.b16 %v3895, %v3891
    %v3928 = vpack.c.b16 %v3896, %v3892
    %v3929 = vpack.c.b16 %v3897, %v3893
    %v3930 = vpack.c.b16 %v3898, %v3894
    %3963 = vmatprep.subr.bf16.mxu0 %v3900
    %3964 = vmatpush1.bf16.msra.mxu0 %v3899
    %3965 = vmatprep.subr.bf16.mxu0 %v3904
    %3966 = vmatpush1.bf16.msra.mxu0 %v3903
    %3967 = vmatprep.subr.bf16.mxu0 %v3908
    %3968 = vmatpush1.bf16.msra.mxu0 %v3907
    %3969 = vmatprep.subr.bf16.mxu0 %v3912
    %3970 = vmatpush1.bf16.msra.mxu0 %v3911
    %3971 = vmatprep.subr.bf16.mxu0 %v3916
    %3972 = vmatpush1.bf16.msra.mxu0 %v3915
    %3973 = vmatprep.subr.bf16.mxu0 %v3920
    %3974 = vmatpush1.bf16.msra.mxu0 %v3919
    %3975 = vmatprep.subr.bf16.mxu0 %v3924
    %3976 = vmatpush1.bf16.msra.mxu0 %v3923
    %3977 = vmatprep.subr.bf16.mxu0 %v3928
    %3978 = vmatpush1.bf16.msra.mxu0 %v3927
    %3979 = vmatprep.subr.bf16.mxu0 0
    %3980 = vmatpush1.bf16.msra.mxu0 0
    %3981 = vmatprep.subr.bf16.mxu0 0
    %3982 = vmatpush1.bf16.msra.mxu0 0
    %3983 = vmatprep.subr.bf16.mxu0 0
    %3984 = vmatpush1.bf16.msra.mxu0 0
    %3985 = vmatprep.subr.bf16.mxu0 0
    %3986 = vmatpush1.bf16.msra.mxu0 0
    %3987 = vmatprep.subr.bf16.mxu0 0
    %3988 = vmatpush1.bf16.msra.mxu0 0
    %3989 = vmatprep.subr.bf16.mxu0 0
    %3990 = vmatpush1.bf16.msra.mxu0 0
    %3991 = vmatprep.subr.bf16.mxu0 0
    %3992 = vmatpush1.bf16.msra.mxu0 0
    %3993 = vmatprep.subr.bf16.mxu0 0
    %3994 = vmatpush1.bf16.msra.mxu0 0
    %3995 = vmatprep.mubr.bf16.mxu0 0
    %3996 = vmatmul.mubr.bf16.gmra.mrb[0].mxu0 %v3801
    %v3997 = vpop.f32.mrb[0].mxu0
    %v3998 = vadd.f32 0.0, %v3997
    %v3999 = vpop.f32.mrb[0].mxu0
    %v4000 = vadd.f32 0.0, %v3999
    %v4001 = vpop.f32.mrb[0].mxu0
    %v4002 = vpop.f32.mrb[0].mxu0
    %4003 = vdwg.mxu0
    %4004 = vmatprep.subr.bf16.mxu0 %v3902
    %4005 = vmatpush1.bf16.msra.mxu0 %v3901
    %4006 = vmatprep.subr.bf16.mxu0 %v3906
    %4007 = vmatpush1.bf16.msra.mxu0 %v3905
    %4008 = vmatprep.subr.bf16.mxu0 %v3910
    %4009 = vmatpush1.bf16.msra.mxu0 %v3909
    %4010 = vmatprep.subr.bf16.mxu0 %v3914
    %4011 = vmatpush1.bf16.msra.mxu0 %v3913
    %4012 = vmatprep.subr.bf16.mxu0 %v3918
    %4013 = vmatpush1.bf16.msra.mxu0 %v3917
    %4014 = vmatprep.subr.bf16.mxu0 %v3922
    %4015 = vmatpush1.bf16.msra.mxu0 %v3921
    %4016 = vmatprep.subr.bf16.mxu0 %v3926
    %4017 = vmatpush1.bf16.msra.mxu0 %v3925
    %4018 = vmatprep.subr.bf16.mxu0 %v3930
    %4019 = vmatpush1.bf16.msra.mxu0 %v3929
    %4020 = vmatprep.subr.bf16.mxu0 0
    %4021 = vmatpush1.bf16.msra.mxu0 0
    %4022 = vmatprep.subr.bf16.mxu0 0
    %4023 = vmatpush1.bf16.msra.mxu0 0
    %4024 = vmatprep.subr.bf16.mxu0 0
    %4025 = vmatpush1.bf16.msra.mxu0 0
    %4026 = vmatprep.subr.bf16.mxu0 0
    %4027 = vmatpush1.bf16.msra.mxu0 0
    %4028 = vmatprep.subr.bf16.mxu0 0
    %4029 = vmatpush1.bf16.msra.mxu0 0
    %4030 = vmatprep.subr.bf16.mxu0 0
    %4031 = vmatpush1.bf16.msra.mxu0 0
    %4032 = vmatprep.subr.bf16.mxu0 0
    %4033 = vmatpush1.bf16.msra.mxu0 0
    %4034 = vmatprep.subr.bf16.mxu0 0
    %4035 = vmatpush1.bf16.msra.mxu0 0
    %4036 = vmatprep.mubr.bf16.mxu0 0
    %4037 = vmatmul.mubr.bf16.gmra.mrb[0].mxu0 %v3801
    %v4038 = vpop.f32.mrb[0].mxu0
    %v4039 = vadd.f32 0.0, %v4038
    %v4040 = vpop.f32.mrb[0].mxu0
    %v4041 = vadd.f32 0.0, %v4040
    %v4042 = vpop.f32.mrb[0].mxu0
    %v4043 = vpop.f32.mrb[0].mxu0
    %4044 = vdwg.mxu0
    %v4045 = vpack.i.b16 %v3040, %v3040
    %v4046 = vlaneseq
    %v4047 = vshrl.u32 %v4046, 7
    %v4048 = vsub.s32 0, %v4047
    %v4049 = vrot.slane %v4045, %v4048
    %v4083 = vunpack.c.l.b16 %v3141
    %v4084 = vunpack.c.h.b16 %v3141
    %v4085 = vunpack.c.l.b16 %v3142
    %v4086 = vunpack.c.h.b16 %v3142
    %v4087 = vunpack.c.l.b16 %v3143
    %v4088 = vunpack.c.h.b16 %v3143
    %v4089 = vunpack.c.l.b16 %v3144
    %v4090 = vunpack.c.h.b16 %v3144
    %v4091 = vunpack.c.l.b16 %v3145
    %v4092 = vunpack.c.h.b16 %v3145
    %v4093 = vunpack.c.l.b16 %v3146
    %v4094 = vunpack.c.h.b16 %v3146
    %v4095 = vunpack.c.l.b16 %v3147
    %v4096 = vunpack.c.h.b16 %v3147
    %v4097 = vunpack.c.l.b16 %v3148
    %v4098 = vunpack.c.h.b16 %v3148
    %v4099 = vunpack.c.l.b16 %v3149
    %v4100 = vunpack.c.h.b16 %v3149
    %v4101 = vunpack.c.l.b16 %v3150
    %v4102 = vunpack.c.h.b16 %v3150
    %v4103 = vunpack.c.l.b16 %v3151
    %v4104 = vunpack.c.h.b16 %v3151
    %v4105 = vunpack.c.l.b16 %v3152
    %v4106 = vunpack.c.h.b16 %v3152
    %v4107 = vunpack.c.l.b16 %v3153
    %v4108 = vunpack.c.h.b16 %v3153
    %v4109 = vunpack.c.l.b16 %v3154
    %v4110 = vunpack.c.h.b16 %v3154
    %v4111 = vunpack.c.l.b16 %v3155
    %v4112 = vunpack.c.h.b16 %v3155
    %v4113 = vunpack.c.l.b16 %v3156
    %v4114 = vunpack.c.h.b16 %v3156
    %v4115 = vunpack.c.l.b16 %v3157
    %v4116 = vunpack.c.h.b16 %v3157
    %v4117 = vunpack.c.l.b16 %v3158
    %v4118 = vunpack.c.h.b16 %v3158
    %v4119 = vunpack.c.l.b16 %v3159
    %v4120 = vunpack.c.h.b16 %v3159
    %v4121 = vunpack.c.l.b16 %v3160
    %v4122 = vunpack.c.h.b16 %v3160
    %v4123 = vunpack.c.l.b16 %v3161
    %v4124 = vunpack.c.h.b16 %v3161
    %v4125 = vunpack.c.l.b16 %v3162
    %v4126 = vunpack.c.h.b16 %v3162
    %v4127 = vunpack.c.l.b16 %v3163
    %v4128 = vunpack.c.h.b16 %v3163
    %v4129 = vunpack.c.l.b16 %v3164
    %v4130 = vunpack.c.h.b16 %v3164
    %v4131 = vunpack.c.l.b16 %v3165
    %v4132 = vunpack.c.h.b16 %v3165
    %v4133 = vunpack.c.l.b16 %v3166
    %v4134 = vunpack.c.h.b16 %v3166
    %v4135 = vunpack.c.l.b16 %v3167
    %v4136 = vunpack.c.h.b16 %v3167
    %v4137 = vunpack.c.l.b16 %v3168
    %v4138 = vunpack.c.h.b16 %v3168
    %v4139 = vunpack.c.l.b16 %v3169
    %v4140 = vunpack.c.h.b16 %v3169
    %v4141 = vunpack.c.l.b16 %v3170
    %v4142 = vunpack.c.h.b16 %v3170
    %v4143 = vunpack.c.l.b16 %v3171
    %v4144 = vunpack.c.h.b16 %v3171
    %v4145 = vunpack.c.l.b16 %v3172
    %v4146 = vunpack.c.h.b16 %v3172
    %v4147 = vpack.c.b16 %v4087, %v4083
    %v4148 = vpack.c.b16 %v4088, %v4084
    %v4149 = vpack.c.b16 %v4089, %v4085
    %v4150 = vpack.c.b16 %v4090, %v4086
    %v4151 = vpack.c.b16 %v4095, %v4091
    %v4152 = vpack.c.b16 %v4096, %v4092
    %v4153 = vpack.c.b16 %v4097, %v4093
    %v4154 = vpack.c.b16 %v4098, %v4094
    %v4155 = vpack.c.b16 %v4103, %v4099
    %v4156 = vpack.c.b16 %v4104, %v4100
    %v4157 = vpack.c.b16 %v4105, %v4101
    %v4158 = vpack.c.b16 %v4106, %v4102
    %v4159 = vpack.c.b16 %v4111, %v4107
    %v4160 = vpack.c.b16 %v4112, %v4108
    %v4161 = vpack.c.b16 %v4113, %v4109
    %v4162 = vpack.c.b16 %v4114, %v4110
    %v4163 = vpack.c.b16 %v4119, %v4115
    %v4164 = vpack.c.b16 %v4120, %v4116
    %v4165 = vpack.c.b16 %v4121, %v4117
    %v4166 = vpack.c.b16 %v4122, %v4118
    %v4167 = vpack.c.b16 %v4127, %v4123
    %v4168 = vpack.c.b16 %v4128, %v4124
    %v4169 = vpack.c.b16 %v4129, %v4125
    %v4170 = vpack.c.b16 %v4130, %v4126
    %v4171 = vpack.c.b16 %v4135, %v4131
    %v4172 = vpack.c.b16 %v4136, %v4132
    %v4173 = vpack.c.b16 %v4137, %v4133
    %v4174 = vpack.c.b16 %v4138, %v4134
    %v4175 = vpack.c.b16 %v4143, %v4139
    %v4176 = vpack.c.b16 %v4144, %v4140
    %v4177 = vpack.c.b16 %v4145, %v4141
    %v4178 = vpack.c.b16 %v4146, %v4142
    %4211 = vmatprep.subr.bf16.mxu0 %v4148
    %4212 = vmatpush1.bf16.msra.mxu0 %v4147
    %4213 = vmatprep.subr.bf16.mxu0 %v4152
    %4214 = vmatpush1.bf16.msra.mxu0 %v4151
    %4215 = vmatprep.subr.bf16.mxu0 %v4156
    %4216 = vmatpush1.bf16.msra.mxu0 %v4155
    %4217 = vmatprep.subr.bf16.mxu0 %v4160
    %4218 = vmatpush1.bf16.msra.mxu0 %v4159
    %4219 = vmatprep.subr.bf16.mxu0 %v4164
    %4220 = vmatpush1.bf16.msra.mxu0 %v4163
    %4221 = vmatprep.subr.bf16.mxu0 %v4168
    %4222 = vmatpush1.bf16.msra.mxu0 %v4167
    %4223 = vmatprep.subr.bf16.mxu0 %v4172
    %4224 = vmatpush1.bf16.msra.mxu0 %v4171
    %4225 = vmatprep.subr.bf16.mxu0 %v4176
    %4226 = vmatpush1.bf16.msra.mxu0 %v4175
    %4227 = vmatprep.subr.bf16.mxu0 0
    %4228 = vmatpush1.bf16.msra.mxu0 0
    %4229 = vmatprep.subr.bf16.mxu0 0
    %4230 = vmatpush1.bf16.msra.mxu0 0
    %4231 = vmatprep.subr.bf16.mxu0 0
    %4232 = vmatpush1.bf16.msra.mxu0 0
    %4233 = vmatprep.subr.bf16.mxu0 0
    %4234 = vmatpush1.bf16.msra.mxu0 0
    %4235 = vmatprep.subr.bf16.mxu0 0
    %4236 = vmatpush1.bf16.msra.mxu0 0
    %4237 = vmatprep.subr.bf16.mxu0 0
    %4238 = vmatpush1.bf16.msra.mxu0 0
    %4239 = vmatprep.subr.bf16.mxu0 0
    %4240 = vmatpush1.bf16.msra.mxu0 0
    %4241 = vmatprep.subr.bf16.mxu0 0
    %4242 = vmatpush1.bf16.msra.mxu0 0
    %4243 = vmatprep.mubr.bf16.mxu0 0
    %4244 = vmatmul.mubr.bf16.gmra.mrb[0].mxu0 %v4049
    %v4245 = vpop.f32.mrb[0].mxu0
    %v4246 = vadd.f32 0.0, %v4245
    %v4247 = vpop.f32.mrb[0].mxu0
    %v4248 = vadd.f32 0.0, %v4247
    %v4249 = vpop.f32.mrb[0].mxu0
    %v4250 = vpop.f32.mrb[0].mxu0
    %4251 = vdwg.mxu0
    %4252 = vmatprep.subr.bf16.mxu0 %v4150
    %4253 = vmatpush1.bf16.msra.mxu0 %v4149
    %4254 = vmatprep.subr.bf16.mxu0 %v4154
    %4255 = vmatpush1.bf16.msra.mxu0 %v4153
    %4256 = vmatprep.subr.bf16.mxu0 %v4158
    %4257 = vmatpush1.bf16.msra.mxu0 %v4157
    %4258 = vmatprep.subr.bf16.mxu0 %v4162
    %4259 = vmatpush1.bf16.msra.mxu0 %v4161
    %4260 = vmatprep.subr.bf16.mxu0 %v4166
    %4261 = vmatpush1.bf16.msra.mxu0 %v4165
    %4262 = vmatprep.subr.bf16.mxu0 %v4170
    %4263 = vmatpush1.bf16.msra.mxu0 %v4169
    %4264 = vmatprep.subr.bf16.mxu0 %v4174
    %4265 = vmatpush1.bf16.msra.mxu0 %v4173
    %4266 = vmatprep.subr.bf16.mxu0 %v4178
    %4267 = vmatpush1.bf16.msra.mxu0 %v4177
    %4268 = vmatprep.subr.bf16.mxu0 0
    %4269 = vmatpush1.bf16.msra.mxu0 0
    %4270 = vmatprep.subr.bf16.mxu0 0
    %4271 = vmatpush1.bf16.msra.mxu0 0
    %4272 = vmatprep.subr.bf16.mxu0 0
    %4273 = vmatpush1.bf16.msra.mxu0 0
    %4274 = vmatprep.subr.bf16.mxu0 0
    %4275 = vmatpush1.bf16.msra.mxu0 0
    %4276 = vmatprep.subr.bf16.mxu0 0
    %4277 = vmatpush1.bf16.msra.mxu0 0
    %4278 = vmatprep.subr.bf16.mxu0 0
    %4279 = vmatpush1.bf16.msra.mxu0 0
    %4280 = vmatprep.subr.bf16.mxu0 0
    %4281 = vmatpush1.bf16.msra.mxu0 0
    %4282 = vmatprep.subr.bf16.mxu0 0
    %4283 = vmatpush1.bf16.msra.mxu0 0
    %4284 = vmatprep.mubr.bf16.mxu0 0
    %4285 = vmatmul.mubr.bf16.gmra.mrb[0].mxu0 %v4049
    %v4286 = vpop.f32.mrb[0].mxu0
    %v4287 = vadd.f32 0.0, %v4286
    %v4288 = vpop.f32.mrb[0].mxu0
    %v4289 = vadd.f32 0.0, %v4288
    %v4290 = vpop.f32.mrb[0].mxu0
    %v4291 = vpop.f32.mrb[0].mxu0
    %4292 = vdwg.mxu0
    %v4293 = vpack.i.b16 %v3041, %v3041
    %v4294 = vlaneseq
    %v4295 = vshrl.u32 %v4294, 7
    %v4296 = vsub.s32 0, %v4295
    %v4297 = vrot.slane %v4293, %v4296
    %v4331 = vunpack.c.l.b16 %v3173
    %v4332 = vunpack.c.h.b16 %v3173
    %v4333 = vunpack.c.l.b16 %v3174
    %v4334 = vunpack.c.h.b16 %v3174
    %v4335 = vunpack.c.l.b16 %v3175
    %v4336 = vunpack.c.h.b16 %v3175
    %v4337 = vunpack.c.l.b16 %v3176
    %v4338 = vunpack.c.h.b16 %v3176
    %v4339 = vunpack.c.l.b16 %v3177
    %v4340 = vunpack.c.h.b16 %v3177
    %v4341 = vunpack.c.l.b16 %v3178
    %v4342 = vunpack.c.h.b16 %v3178
    %v4343 = vunpack.c.l.b16 %v3179
    %v4344 = vunpack.c.h.b16 %v3179
    %v4345 = vunpack.c.l.b16 %v3180
    %v4346 = vunpack.c.h.b16 %v3180
    %v4347 = vunpack.c.l.b16 %v3181
    %v4348 = vunpack.c.h.b16 %v3181
    %v4349 = vunpack.c.l.b16 %v3182
    %v4350 = vunpack.c.h.b16 %v3182
    %v4351 = vunpack.c.l.b16 %v3183
    %v4352 = vunpack.c.h.b16 %v3183
    %v4353 = vunpack.c.l.b16 %v3184
    %v4354 = vunpack.c.h.b16 %v3184
    %v4355 = vunpack.c.l.b16 %v3185
    %v4356 = vunpack.c.h.b16 %v3185
    %v4357 = vunpack.c.l.b16 %v3186
    %v4358 = vunpack.c.h.b16 %v3186
    %v4359 = vunpack.c.l.b16 %v3187
    %v4360 = vunpack.c.h.b16 %v3187
    %v4361 = vunpack.c.l.b16 %v3188
    %v4362 = vunpack.c.h.b16 %v3188
    %v4363 = vunpack.c.l.b16 %v3189
    %v4364 = vunpack.c.h.b16 %v3189
    %v4365 = vunpack.c.l.b16 %v3190
    %v4366 = vunpack.c.h.b16 %v3190
    %v4367 = vunpack.c.l.b16 %v3191
    %v4368 = vunpack.c.h.b16 %v3191
    %v4369 = vunpack.c.l.b16 %v3192
    %v4370 = vunpack.c.h.b16 %v3192
    %v4371 = vunpack.c.l.b16 %v3193
    %v4372 = vunpack.c.h.b16 %v3193
    %v4373 = vunpack.c.l.b16 %v3194
    %v4374 = vunpack.c.h.b16 %v3194
    %v4375 = vunpack.c.l.b16 %v3195
    %v4376 = vunpack.c.h.b16 %v3195
    %v4377 = vunpack.c.l.b16 %v3196
    %v4378 = vunpack.c.h.b16 %v3196
    %v4379 = vunpack.c.l.b16 %v3197
    %v4380 = vunpack.c.h.b16 %v3197
    %v4381 = vunpack.c.l.b16 %v3198
    %v4382 = vunpack.c.h.b16 %v3198
    %v4383 = vunpack.c.l.b16 %v3199
    %v4384 = vunpack.c.h.b16 %v3199
    %v4385 = vunpack.c.l.b16 %v3200
    %v4386 = vunpack.c.h.b16 %v3200
    %v4387 = vunpack.c.l.b16 %v3201
    %v4388 = vunpack.c.h.b16 %v3201
    %v4389 = vunpack.c.l.b16 %v3202
    %v4390 = vunpack.c.h.b16 %v3202
    %v4391 = vunpack.c.l.b16 %v3203
    %v4392 = vunpack.c.h.b16 %v3203
    %v4393 = vunpack.c.l.b16 %v3204
    %v4394 = vunpack.c.h.b16 %v3204
    %v4395 = vpack.c.b16 %v4335, %v4331
    %v4396 = vpack.c.b16 %v4336, %v4332
    %v4397 = vpack.c.b16 %v4337, %v4333
    %v4398 = vpack.c.b16 %v4338, %v4334
    %v4399 = vpack.c.b16 %v4343, %v4339
    %v4400 = vpack.c.b16 %v4344, %v4340
    %v4401 = vpack.c.b16 %v4345, %v4341
    %v4402 = vpack.c.b16 %v4346, %v4342
    %v4403 = vpack.c.b16 %v4351, %v4347
    %v4404 = vpack.c.b16 %v4352, %v4348
    %v4405 = vpack.c.b16 %v4353, %v4349
    %v4406 = vpack.c.b16 %v4354, %v4350
    %v4407 = vpack.c.b16 %v4359, %v4355
    %v4408 = vpack.c.b16 %v4360, %v4356
    %v4409 = vpack.c.b16 %v4361, %v4357
    %v4410 = vpack.c.b16 %v4362, %v4358
    %v4411 = vpack.c.b16 %v4367, %v4363
    %v4412 = vpack.c.b16 %v4368, %v4364
    %v4413 = vpack.c.b16 %v4369, %v4365
    %v4414 = vpack.c.b16 %v4370, %v4366
    %v4415 = vpack.c.b16 %v4375, %v4371
    %v4416 = vpack.c.b16 %v4376, %v4372
    %v4417 = vpack.c.b16 %v4377, %v4373
    %v4418 = vpack.c.b16 %v4378, %v4374
    %v4419 = vpack.c.b16 %v4383, %v4379
    %v4420 = vpack.c.b16 %v4384, %v4380
    %v4421 = vpack.c.b16 %v4385, %v4381
    %v4422 = vpack.c.b16 %v4386, %v4382
    %v4423 = vpack.c.b16 %v4391, %v4387
    %v4424 = vpack.c.b16 %v4392, %v4388
    %v4425 = vpack.c.b16 %v4393, %v4389
    %v4426 = vpack.c.b16 %v4394, %v4390
    %4459 = vmatprep.subr.bf16.mxu0 %v4396
    %4460 = vmatpush1.bf16.msra.mxu0 %v4395
    %4461 = vmatprep.subr.bf16.mxu0 %v4400
    %4462 = vmatpush1.bf16.msra.mxu0 %v4399
    %4463 = vmatprep.subr.bf16.mxu0 %v4404
    %4464 = vmatpush1.bf16.msra.mxu0 %v4403
    %4465 = vmatprep.subr.bf16.mxu0 %v4408
    %4466 = vmatpush1.bf16.msra.mxu0 %v4407
    %4467 = vmatprep.subr.bf16.mxu0 %v4412
    %4468 = vmatpush1.bf16.msra.mxu0 %v4411
    %4469 = vmatprep.subr.bf16.mxu0 %v4416
    %4470 = vmatpush1.bf16.msra.mxu0 %v4415
    %4471 = vmatprep.subr.bf16.mxu0 %v4420
    %4472 = vmatpush1.bf16.msra.mxu0 %v4419
    %4473 = vmatprep.subr.bf16.mxu0 %v4424
    %4474 = vmatpush1.bf16.msra.mxu0 %v4423
    %4475 = vmatprep.subr.bf16.mxu0 0
    %4476 = vmatpush1.bf16.msra.mxu0 0
    %4477 = vmatprep.subr.bf16.mxu0 0
    %4478 = vmatpush1.bf16.msra.mxu0 0
    %4479 = vmatprep.subr.bf16.mxu0 0
    %4480 = vmatpush1.bf16.msra.mxu0 0
    %4481 = vmatprep.subr.bf16.mxu0 0
    %4482 = vmatpush1.bf16.msra.mxu0 0
    %4483 = vmatprep.subr.bf16.mxu0 0
    %4484 = vmatpush1.bf16.msra.mxu0 0
    %4485 = vmatprep.subr.bf16.mxu0 0
    %4486 = vmatpush1.bf16.msra.mxu0 0
    %4487 = vmatprep.subr.bf16.mxu0 0
    %4488 = vmatpush1.bf16.msra.mxu0 0
    %4489 = vmatprep.subr.bf16.mxu0 0
    %4490 = vmatpush1.bf16.msra.mxu0 0
    %4491 = vmatprep.mubr.bf16.mxu0 0
    %4492 = vmatmul.mubr.bf16.gmra.mrb[0].mxu0 %v4297
    %v4493 = vpop.f32.mrb[0].mxu0
    %v4494 = vadd.f32 0.0, %v4493
    %v4495 = vpop.f32.mrb[0].mxu0
    %v4496 = vadd.f32 0.0, %v4495
    %v4497 = vpop.f32.mrb[0].mxu0
    %v4498 = vpop.f32.mrb[0].mxu0
    %4499 = vdwg.mxu0
    %4500 = vmatprep.subr.bf16.mxu0 %v4398
    %4501 = vmatpush1.bf16.msra.mxu0 %v4397
    %4502 = vmatprep.subr.bf16.mxu0 %v4402
    %4503 = vmatpush1.bf16.msra.mxu0 %v4401
    %4504 = vmatprep.subr.bf16.mxu0 %v4406
    %4505 = vmatpush1.bf16.msra.mxu0 %v4405
    %4506 = vmatprep.subr.bf16.mxu0 %v4410
    %4507 = vmatpush1.bf16.msra.mxu0 %v4409
    %4508 = vmatprep.subr.bf16.mxu0 %v4414
    %4509 = vmatpush1.bf16.msra.mxu0 %v4413
    %4510 = vmatprep.subr.bf16.mxu0 %v4418
    %4511 = vmatpush1.bf16.msra.mxu0 %v4417
    %4512 = vmatprep.subr.bf16.mxu0 %v4422
    %4513 = vmatpush1.bf16.msra.mxu0 %v4421
    %4514 = vmatprep.subr.bf16.mxu0 %v4426
    %4515 = vmatpush1.bf16.msra.mxu0 %v4425
    %4516 = vmatprep.subr.bf16.mxu0 0
    %4517 = vmatpush1.bf16.msra.mxu0 0
    %4518 = vmatprep.subr.bf16.mxu0 0
    %4519 = vmatpush1.bf16.msra.mxu0 0
    %4520 = vmatprep.subr.bf16.mxu0 0
    %4521 = vmatpush1.bf16.msra.mxu0 0
    %4522 = vmatprep.subr.bf16.mxu0 0
    %4523 = vmatpush1.bf16.msra.mxu0 0
    %4524 = vmatprep.subr.bf16.mxu0 0
    %4525 = vmatpush1.bf16.msra.mxu0 0
    %4526 = vmatprep.subr.bf16.mxu0 0
    %4527 = vmatpush1.bf16.msra.mxu0 0
    %4528 = vmatprep.subr.bf16.mxu0 0
    %4529 = vmatpush1.bf16.msra.mxu0 0
    %4530 = vmatprep.subr.bf16.mxu0 0
    %4531 = vmatpush1.bf16.msra.mxu0 0
    %4532 = vmatprep.mubr.bf16.mxu0 0
    %4533 = vmatmul.mubr.bf16.gmra.mrb[0].mxu0 %v4297
    %v4534 = vpop.f32.mrb[0].mxu0
    %v4535 = vadd.f32 0.0, %v4534
    %v4536 = vpop.f32.mrb[0].mxu0
    %v4537 = vadd.f32 0.0, %v4536
    %v4538 = vpop.f32.mrb[0].mxu0
    %v4539 = vpop.f32.mrb[0].mxu0
    %4540 = vdwg.mxu0
    %v4541 = vpack.i.b16 %v3042, %v3042
    %v4542 = vlaneseq
    %v4543 = vshrl.u32 %v4542, 7
    %v4544 = vsub.s32 0, %v4543
    %v4545 = vrot.slane %v4541, %v4544
    %v4579 = vunpack.c.l.b16 %v3205
    %v4580 = vunpack.c.h.b16 %v3205
    %v4581 = vunpack.c.l.b16 %v3206
    %v4582 = vunpack.c.h.b16 %v3206
    %v4583 = vunpack.c.l.b16 %v3207
    %v4584 = vunpack.c.h.b16 %v3207
    %v4585 = vunpack.c.l.b16 %v3208
    %v4586 = vunpack.c.h.b16 %v3208
    %v4587 = vunpack.c.l.b16 %v3209
    %v4588 = vunpack.c.h.b16 %v3209
    %v4589 = vunpack.c.l.b16 %v3210
    %v4590 = vunpack.c.h.b16 %v3210
    %v4591 = vunpack.c.l.b16 %v3211
    %v4592 = vunpack.c.h.b16 %v3211
    %v4593 = vunpack.c.l.b16 %v3212
    %v4594 = vunpack.c.h.b16 %v3212
    %v4595 = vunpack.c.l.b16 %v3213
    %v4596 = vunpack.c.h.b16 %v3213
    %v4597 = vunpack.c.l.b16 %v3214
    %v4598 = vunpack.c.h.b16 %v3214
    %v4599 = vunpack.c.l.b16 %v3215
    %v4600 = vunpack.c.h.b16 %v3215
    %v4601 = vunpack.c.l.b16 %v3216
    %v4602 = vunpack.c.h.b16 %v3216
    %v4603 = vunpack.c.l.b16 %v3217
    %v4604 = vunpack.c.h.b16 %v3217
    %v4605 = vunpack.c.l.b16 %v3218
    %v4606 = vunpack.c.h.b16 %v3218
    %v4607 = vunpack.c.l.b16 %v3219
    %v4608 = vunpack.c.h.b16 %v3219
    %v4609 = vunpack.c.l.b16 %v3220
    %v4610 = vunpack.c.h.b16 %v3220
    %v4611 = vunpack.c.l.b16 %v3221
    %v4612 = vunpack.c.h.b16 %v3221
    %v4613 = vunpack.c.l.b16 %v3222
    %v4614 = vunpack.c.h.b16 %v3222
    %v4615 = vunpack.c.l.b16 %v3223
    %v4616 = vunpack.c.h.b16 %v3223
    %v4617 = vunpack.c.l.b16 %v3224
    %v4618 = vunpack.c.h.b16 %v3224
    %v4619 = vunpack.c.l.b16 %v3225
    %v4620 = vunpack.c.h.b16 %v3225
    %v4621 = vunpack.c.l.b16 %v3226
    %v4622 = vunpack.c.h.b16 %v3226
    %v4623 = vunpack.c.l.b16 %v3227
    %v4624 = vunpack.c.h.b16 %v3227
    %v4625 = vunpack.c.l.b16 %v3228
    %v4626 = vunpack.c.h.b16 %v3228
    %v4627 = vunpack.c.l.b16 %v3229
    %v4628 = vunpack.c.h.b16 %v3229
    %v4629 = vunpack.c.l.b16 %v3230
    %v4630 = vunpack.c.h.b16 %v3230
    %v4631 = vunpack.c.l.b16 %v3231
    %v4632 = vunpack.c.h.b16 %v3231
    %v4633 = vunpack.c.l.b16 %v3232
    %v4634 = vunpack.c.h.b16 %v3232
    %v4635 = vunpack.c.l.b16 %v3233
    %v4636 = vunpack.c.h.b16 %v3233
    %v4637 = vunpack.c.l.b16 %v3234
    %v4638 = vunpack.c.h.b16 %v3234
    %v4639 = vunpack.c.l.b16 %v3235
    %v4640 = vunpack.c.h.b16 %v3235
    %v4641 = vunpack.c.l.b16 %v3236
    %v4642 = vunpack.c.h.b16 %v3236
    %v4643 = vpack.c.b16 %v4583, %v4579
    %v4644 = vpack.c.b16 %v4584, %v4580
    %v4645 = vpack.c.b16 %v4585, %v4581
    %v4646 = vpack.c.b16 %v4586, %v4582
    %v4647 = vpack.c.b16 %v4591, %v4587
    %v4648 = vpack.c.b16 %v4592, %v4588
    %v4649 = vpack.c.b16 %v4593, %v4589
    %v4650 = vpack.c.b16 %v4594, %v4590
    %v4651 = vpack.c.b16 %v4599, %v4595
    %v4652 = vpack.c.b16 %v4600, %v4596
    %v4653 = vpack.c.b16 %v4601, %v4597
    %v4654 = vpack.c.b16 %v4602, %v4598
    %v4655 = vpack.c.b16 %v4607, %v4603
    %v4656 = vpack.c.b16 %v4608, %v4604
    %v4657 = vpack.c.b16 %v4609, %v4605
    %v4658 = vpack.c.b16 %v4610, %v4606
    %v4659 = vpack.c.b16 %v4615, %v4611
    %v4660 = vpack.c.b16 %v4616, %v4612
    %v4661 = vpack.c.b16 %v4617, %v4613
    %v4662 = vpack.c.b16 %v4618, %v4614
    %v4663 = vpack.c.b16 %v4623, %v4619
    %v4664 = vpack.c.b16 %v4624, %v4620
    %v4665 = vpack.c.b16 %v4625, %v4621
    %v4666 = vpack.c.b16 %v4626, %v4622
    %v4667 = vpack.c.b16 %v4631, %v4627
    %v4668 = vpack.c.b16 %v4632, %v4628
    %v4669 = vpack.c.b16 %v4633, %v4629
    %v4670 = vpack.c.b16 %v4634, %v4630
    %v4671 = vpack.c.b16 %v4639, %v4635
    %v4672 = vpack.c.b16 %v4640, %v4636
    %v4673 = vpack.c.b16 %v4641, %v4637
    %v4674 = vpack.c.b16 %v4642, %v4638
    %4707 = vmatprep.subr.bf16.mxu0 %v4644
    %4708 = vmatpush1.bf16.msra.mxu0 %v4643
    %4709 = vmatprep.subr.bf16.mxu0 %v4648
    %4710 = vmatpush1.bf16.msra.mxu0 %v4647
    %4711 = vmatprep.subr.bf16.mxu0 %v4652
    %4712 = vmatpush1.bf16.msra.mxu0 %v4651
    %4713 = vmatprep.subr.bf16.mxu0 %v4656
    %4714 = vmatpush1.bf16.msra.mxu0 %v4655
    %4715 = vmatprep.subr.bf16.mxu0 %v4660
    %4716 = vmatpush1.bf16.msra.mxu0 %v4659
    %4717 = vmatprep.subr.bf16.mxu0 %v4664
    %4718 = vmatpush1.bf16.msra.mxu0 %v4663
    %4719 = vmatprep.subr.bf16.mxu0 %v4668
    %4720 = vmatpush1.bf16.msra.mxu0 %v4667
    %4721 = vmatprep.subr.bf16.mxu0 %v4672
    %4722 = vmatpush1.bf16.msra.mxu0 %v4671
    %4723 = vmatprep.subr.bf16.mxu0 0
    %4724 = vmatpush1.bf16.msra.mxu0 0
    %4725 = vmatprep.subr.bf16.mxu0 0
    %4726 = vmatpush1.bf16.msra.mxu0 0
    %4727 = vmatprep.subr.bf16.mxu0 0
    %4728 = vmatpush1.bf16.msra.mxu0 0
    %4729 = vmatprep.subr.bf16.mxu0 0
    %4730 = vmatpush1.bf16.msra.mxu0 0
    %4731 = vmatprep.subr.bf16.mxu0 0
    %4732 = vmatpush1.bf16.msra.mxu0 0
    %4733 = vmatprep.subr.bf16.mxu0 0
    %4734 = vmatpush1.bf16.msra.mxu0 0
    %4735 = vmatprep.subr.bf16.mxu0 0
    %4736 = vmatpush1.bf16.msra.mxu0 0
    %4737 = vmatprep.subr.bf16.mxu0 0
    %4738 = vmatpush1.bf16.msra.mxu0 0
    %4739 = vmatprep.mubr.bf16.mxu0 0
    %4740 = vmatmul.mubr.bf16.gmra.mrb[0].mxu0 %v4545
    %v4741 = vpop.f32.mrb[0].mxu0
    %v4742 = vadd.f32 0.0, %v4741
    %v4743 = vpop.f32.mrb[0].mxu0
    %v4744 = vadd.f32 0.0, %v4743
    %v4745 = vpop.f32.mrb[0].mxu0
    %v4746 = vpop.f32.mrb[0].mxu0
    %4747 = vdwg.mxu0
    %4748 = vmatprep.subr.bf16.mxu0 %v4646
    %4749 = vmatpush1.bf16.msra.mxu0 %v4645
    %4750 = vmatprep.subr.bf16.mxu0 %v4650
    %4751 = vmatpush1.bf16.msra.mxu0 %v4649
    %4752 = vmatprep.subr.bf16.mxu0 %v4654
    %4753 = vmatpush1.bf16.msra.mxu0 %v4653
    %4754 = vmatprep.subr.bf16.mxu0 %v4658
    %4755 = vmatpush1.bf16.msra.mxu0 %v4657
    %4756 = vmatprep.subr.bf16.mxu0 %v4662
    %4757 = vmatpush1.bf16.msra.mxu0 %v4661
    %4758 = vmatprep.subr.bf16.mxu0 %v4666
    %4759 = vmatpush1.bf16.msra.mxu0 %v4665
    %4760 = vmatprep.subr.bf16.mxu0 %v4670
    %4761 = vmatpush1.bf16.msra.mxu0 %v4669
    %4762 = vmatprep.subr.bf16.mxu0 %v4674
    %4763 = vmatpush1.bf16.msra.mxu0 %v4673
    %4764 = vmatprep.subr.bf16.mxu0 0
    %4765 = vmatpush1.bf16.msra.mxu0 0
    %4766 = vmatprep.subr.bf16.mxu0 0
    %4767 = vmatpush1.bf16.msra.mxu0 0
    %4768 = vmatprep.subr.bf16.mxu0 0
    %4769 = vmatpush1.bf16.msra.mxu0 0
    %4770 = vmatprep.subr.bf16.mxu0 0
    %4771 = vmatpush1.bf16.msra.mxu0 0
    %4772 = vmatprep.subr.bf16.mxu0 0
    %4773 = vmatpush1.bf16.msra.mxu0 0
    %4774 = vmatprep.subr.bf16.mxu0 0
    %4775 = vmatpush1.bf16.msra.mxu0 0
    %4776 = vmatprep.subr.bf16.mxu0 0
    %4777 = vmatpush1.bf16.msra.mxu0 0
    %4778 = vmatprep.subr.bf16.mxu0 0
    %4779 = vmatpush1.bf16.msra.mxu0 0
    %4780 = vmatprep.mubr.bf16.mxu0 0
    %4781 = vmatmul.mubr.bf16.gmra.mrb[0].mxu0 %v4545
    %v4782 = vpop.f32.mrb[0].mxu0
    %v4783 = vadd.f32 0.0, %v4782
    %v4784 = vpop.f32.mrb[0].mxu0
    %v4785 = vadd.f32 0.0, %v4784
    %v4786 = vpop.f32.mrb[0].mxu0
    %v4787 = vpop.f32.mrb[0].mxu0
    %4788 = vdwg.mxu0
    %v4789 = vpack.i.b16 %v3043, %v3043
    %v4790 = vlaneseq
    %v4791 = vshrl.u32 %v4790, 7
    %v4792 = vsub.s32 0, %v4791
    %v4793 = vrot.slane %v4789, %v4792
    %v4827 = vunpack.c.l.b16 %v3237
    %v4828 = vunpack.c.h.b16 %v3237
    %v4829 = vunpack.c.l.b16 %v3238
    %v4830 = vunpack.c.h.b16 %v3238
    %v4831 = vunpack.c.l.b16 %v3239
    %v4832 = vunpack.c.h.b16 %v3239
    %v4833 = vunpack.c.l.b16 %v3240
    %v4834 = vunpack.c.h.b16 %v3240
    %v4835 = vunpack.c.l.b16 %v3241
    %v4836 = vunpack.c.h.b16 %v3241
    %v4837 = vunpack.c.l.b16 %v3242
    %v4838 = vunpack.c.h.b16 %v3242
    %v4839 = vunpack.c.l.b16 %v3243
    %v4840 = vunpack.c.h.b16 %v3243
    %v4841 = vunpack.c.l.b16 %v3244
    %v4842 = vunpack.c.h.b16 %v3244
    %v4843 = vunpack.c.l.b16 %v3245
    %v4844 = vunpack.c.h.b16 %v3245
    %v4845 = vunpack.c.l.b16 %v3246
    %v4846 = vunpack.c.h.b16 %v3246
    %v4847 = vunpack.c.l.b16 %v3247
    %v4848 = vunpack.c.h.b16 %v3247
    %v4849 = vunpack.c.l.b16 %v3248
    %v4850 = vunpack.c.h.b16 %v3248
    %v4851 = vunpack.c.l.b16 %v3249
    %v4852 = vunpack.c.h.b16 %v3249
    %v4853 = vunpack.c.l.b16 %v3250
    %v4854 = vunpack.c.h.b16 %v3250
    %v4855 = vunpack.c.l.b16 %v3251
    %v4856 = vunpack.c.h.b16 %v3251
    %v4857 = vunpack.c.l.b16 %v3252
    %v4858 = vunpack.c.h.b16 %v3252
    %v4859 = vunpack.c.l.b16 %v3253
    %v4860 = vunpack.c.h.b16 %v3253
    %v4861 = vunpack.c.l.b16 %v3254
    %v4862 = vunpack.c.h.b16 %v3254
    %v4863 = vunpack.c.l.b16 %v3255
    %v4864 = vunpack.c.h.b16 %v3255
    %v4865 = vunpack.c.l.b16 %v3256
    %v4866 = vunpack.c.h.b16 %v3256
    %v4867 = vunpack.c.l.b16 %v3257
    %v4868 = vunpack.c.h.b16 %v3257
    %v4869 = vunpack.c.l.b16 %v3258
    %v4870 = vunpack.c.h.b16 %v3258
    %v4871 = vunpack.c.l.b16 %v3259
    %v4872 = vunpack.c.h.b16 %v3259
    %v4873 = vunpack.c.l.b16 %v3260
    %v4874 = vunpack.c.h.b16 %v3260
    %v4875 = vunpack.c.l.b16 %v3261
    %v4876 = vunpack.c.h.b16 %v3261
    %v4877 = vunpack.c.l.b16 %v3262
    %v4878 = vunpack.c.h.b16 %v3262
    %v4879 = vunpack.c.l.b16 %v3263
    %v4880 = vunpack.c.h.b16 %v3263
    %v4881 = vunpack.c.l.b16 %v3264
    %v4882 = vunpack.c.h.b16 %v3264
    %v4883 = vunpack.c.l.b16 %v3265
    %v4884 = vunpack.c.h.b16 %v3265
    %v4885 = vunpack.c.l.b16 %v3266
    %v4886 = vunpack.c.h.b16 %v3266
    %v4887 = vunpack.c.l.b16 %v3267
    %v4888 = vunpack.c.h.b16 %v3267
    %v4889 = vunpack.c.l.b16 %v3268
    %v4890 = vunpack.c.h.b16 %v3268
    %v4891 = vpack.c.b16 %v4831, %v4827
    %v4892 = vpack.c.b16 %v4832, %v4828
    %v4893 = vpack.c.b16 %v4833, %v4829
    %v4894 = vpack.c.b16 %v4834, %v4830
    %v4895 = vpack.c.b16 %v4839, %v4835
    %v4896 = vpack.c.b16 %v4840, %v4836
    %v4897 = vpack.c.b16 %v4841, %v4837
    %v4898 = vpack.c.b16 %v4842, %v4838
    %v4899 = vpack.c.b16 %v4847, %v4843
    %v4900 = vpack.c.b16 %v4848, %v4844
    %v4901 = vpack.c.b16 %v4849, %v4845
    %v4902 = vpack.c.b16 %v4850, %v4846
    %v4903 = vpack.c.b16 %v4855, %v4851
    %v4904 = vpack.c.b16 %v4856, %v4852
    %v4905 = vpack.c.b16 %v4857, %v4853
    %v4906 = vpack.c.b16 %v4858, %v4854
    %v4907 = vpack.c.b16 %v4863, %v4859
    %v4908 = vpack.c.b16 %v4864, %v4860
    %v4909 = vpack.c.b16 %v4865, %v4861
    %v4910 = vpack.c.b16 %v4866, %v4862
    %v4911 = vpack.c.b16 %v4871, %v4867
    %v4912 = vpack.c.b16 %v4872, %v4868
    %v4913 = vpack.c.b16 %v4873, %v4869
    %v4914 = vpack.c.b16 %v4874, %v4870
    %v4915 = vpack.c.b16 %v4879, %v4875
    %v4916 = vpack.c.b16 %v4880, %v4876
    %v4917 = vpack.c.b16 %v4881, %v4877
    %v4918 = vpack.c.b16 %v4882, %v4878
    %v4919 = vpack.c.b16 %v4887, %v4883
    %v4920 = vpack.c.b16 %v4888, %v4884
    %v4921 = vpack.c.b16 %v4889, %v4885
    %v4922 = vpack.c.b16 %v4890, %v4886
    %4955 = vmatprep.subr.bf16.mxu0 %v4892
    %4956 = vmatpush1.bf16.msra.mxu0 %v4891
    %4957 = vmatprep.subr.bf16.mxu0 %v4896
    %4958 = vmatpush1.bf16.msra.mxu0 %v4895
    %4959 = vmatprep.subr.bf16.mxu0 %v4900
    %4960 = vmatpush1.bf16.msra.mxu0 %v4899
    %4961 = vmatprep.subr.bf16.mxu0 %v4904
    %4962 = vmatpush1.bf16.msra.mxu0 %v4903
    %4963 = vmatprep.subr.bf16.mxu0 %v4908
    %4964 = vmatpush1.bf16.msra.mxu0 %v4907
    %4965 = vmatprep.subr.bf16.mxu0 %v4912
    %4966 = vmatpush1.bf16.msra.mxu0 %v4911
    %4967 = vmatprep.subr.bf16.mxu0 %v4916
    %4968 = vmatpush1.bf16.msra.mxu0 %v4915
    %4969 = vmatprep.subr.bf16.mxu0 %v4920
    %4970 = vmatpush1.bf16.msra.mxu0 %v4919
    %4971 = vmatprep.subr.bf16.mxu0 0
    %4972 = vmatpush1.bf16.msra.mxu0 0
    %4973 = vmatprep.subr.bf16.mxu0 0
    %4974 = vmatpush1.bf16.msra.mxu0 0
    %4975 = vmatprep.subr.bf16.mxu0 0
    %4976 = vmatpush1.bf16.msra.mxu0 0
    %4977 = vmatprep.subr.bf16.mxu0 0
    %4978 = vmatpush1.bf16.msra.mxu0 0
    %4979 = vmatprep.subr.bf16.mxu0 0
    %4980 = vmatpush1.bf16.msra.mxu0 0
    %4981 = vmatprep.subr.bf16.mxu0 0
    %4982 = vmatpush1.bf16.msra.mxu0 0
    %4983 = vmatprep.subr.bf16.mxu0 0
    %4984 = vmatpush1.bf16.msra.mxu0 0
    %4985 = vmatprep.subr.bf16.mxu0 0
    %4986 = vmatpush1.bf16.msra.mxu0 0
    %4987 = vmatprep.mubr.bf16.mxu0 0
    %4988 = vmatmul.mubr.bf16.gmra.mrb[0].mxu0 %v4793
    %v4989 = vpop.f32.mrb[0].mxu0
    %v4990 = vadd.f32 0.0, %v4989
    %v4991 = vpop.f32.mrb[0].mxu0
    %v4992 = vadd.f32 0.0, %v4991
    %v4993 = vpop.f32.mrb[0].mxu0
    %v4994 = vpop.f32.mrb[0].mxu0
    %4995 = vdwg.mxu0
    %4996 = vmatprep.subr.bf16.mxu0 %v4894
    %4997 = vmatpush1.bf16.msra.mxu0 %v4893
    %4998 = vmatprep.subr.bf16.mxu0 %v4898
    %4999 = vmatpush1.bf16.msra.mxu0 %v4897
    %5000 = vmatprep.subr.bf16.mxu0 %v4902
    %5001 = vmatpush1.bf16.msra.mxu0 %v4901
    %5002 = vmatprep.subr.bf16.mxu0 %v4906
    %5003 = vmatpush1.bf16.msra.mxu0 %v4905
    %5004 = vmatprep.subr.bf16.mxu0 %v4910
    %5005 = vmatpush1.bf16.msra.mxu0 %v4909
    %5006 = vmatprep.subr.bf16.mxu0 %v4914
    %5007 = vmatpush1.bf16.msra.mxu0 %v4913
    %5008 = vmatprep.subr.bf16.mxu0 %v4918
    %5009 = vmatpush1.bf16.msra.mxu0 %v4917
    %5010 = vmatprep.subr.bf16.mxu0 %v4922
    %5011 = vmatpush1.bf16.msra.mxu0 %v4921
    %5012 = vmatprep.subr.bf16.mxu0 0
    %5013 = vmatpush1.bf16.msra.mxu0 0
    %5014 = vmatprep.subr.bf16.mxu0 0
    %5015 = vmatpush1.bf16.msra.mxu0 0
    %5016 = vmatprep.subr.bf16.mxu0 0
    %5017 = vmatpush1.bf16.msra.mxu0 0
    %5018 = vmatprep.subr.bf16.mxu0 0
    %5019 = vmatpush1.bf16.msra.mxu0 0
    %5020 = vmatprep.subr.bf16.mxu0 0
    %5021 = vmatpush1.bf16.msra.mxu0 0
    %5022 = vmatprep.subr.bf16.mxu0 0
    %5023 = vmatpush1.bf16.msra.mxu0 0
    %5024 = vmatprep.subr.bf16.mxu0 0
    %5025 = vmatpush1.bf16.msra.mxu0 0
    %5026 = vmatprep.subr.bf16.mxu0 0
    %5027 = vmatpush1.bf16.msra.mxu0 0
    %5028 = vmatprep.mubr.bf16.mxu0 0
    %5029 = vmatmul.mubr.bf16.gmra.mrb[0].mxu0 %v4793
    %v5030 = vpop.f32.mrb[0].mxu0
    %v5031 = vadd.f32 0.0, %v5030
    %v5032 = vpop.f32.mrb[0].mxu0
    %v5033 = vadd.f32 0.0, %v5032
    %v5034 = vpop.f32.mrb[0].mxu0
    %v5035 = vpop.f32.mrb[0].mxu0
    %5036 = vdwg.mxu0
    %v5037 = vpack.i.b16 %v3044, %v3044
    %v5038 = vlaneseq
    %v5039 = vshrl.u32 %v5038, 7
    %v5040 = vsub.s32 0, %v5039
    %v5041 = vrot.slane %v5037, %v5040
    %v5075 = vunpack.c.l.b16 %v3269
    %v5076 = vunpack.c.h.b16 %v3269
    %v5077 = vunpack.c.l.b16 %v3270
    %v5078 = vunpack.c.h.b16 %v3270
    %v5079 = vunpack.c.l.b16 %v3271
    %v5080 = vunpack.c.h.b16 %v3271
    %v5081 = vunpack.c.l.b16 %v3272
    %v5082 = vunpack.c.h.b16 %v3272
    %v5083 = vunpack.c.l.b16 %v3273
    %v5084 = vunpack.c.h.b16 %v3273
    %v5085 = vunpack.c.l.b16 %v3274
    %v5086 = vunpack.c.h.b16 %v3274
    %v5087 = vunpack.c.l.b16 %v3275
    %v5088 = vunpack.c.h.b16 %v3275
    %v5089 = vunpack.c.l.b16 %v3276
    %v5090 = vunpack.c.h.b16 %v3276
    %v5091 = vunpack.c.l.b16 %v3277
    %v5092 = vunpack.c.h.b16 %v3277
    %v5093 = vunpack.c.l.b16 %v3278
    %v5094 = vunpack.c.h.b16 %v3278
    %v5095 = vunpack.c.l.b16 %v3279
    %v5096 = vunpack.c.h.b16 %v3279
    %v5097 = vunpack.c.l.b16 %v3280
    %v5098 = vunpack.c.h.b16 %v3280
    %v5099 = vunpack.c.l.b16 %v3281
    %v5100 = vunpack.c.h.b16 %v3281
    %v5101 = vunpack.c.l.b16 %v3282
    %v5102 = vunpack.c.h.b16 %v3282
    %v5103 = vunpack.c.l.b16 %v3283
    %v5104 = vunpack.c.h.b16 %v3283
    %v5105 = vunpack.c.l.b16 %v3284
    %v5106 = vunpack.c.h.b16 %v3284
    %v5107 = vunpack.c.l.b16 %v3285
    %v5108 = vunpack.c.h.b16 %v3285
    %v5109 = vunpack.c.l.b16 %v3286
    %v5110 = vunpack.c.h.b16 %v3286
    %v5111 = vunpack.c.l.b16 %v3287
    %v5112 = vunpack.c.h.b16 %v3287
    %v5113 = vunpack.c.l.b16 %v3288
    %v5114 = vunpack.c.h.b16 %v3288
    %v5115 = vunpack.c.l.b16 %v3289
    %v5116 = vunpack.c.h.b16 %v3289
    %v5117 = vunpack.c.l.b16 %v3290
    %v5118 = vunpack.c.h.b16 %v3290
    %v5119 = vunpack.c.l.b16 %v3291
    %v5120 = vunpack.c.h.b16 %v3291
    %v5121 = vunpack.c.l.b16 %v3292
    %v5122 = vunpack.c.h.b16 %v3292
    %v5123 = vunpack.c.l.b16 %v3293
    %v5124 = vunpack.c.h.b16 %v3293
    %v5125 = vunpack.c.l.b16 %v3294
    %v5126 = vunpack.c.h.b16 %v3294
    %v5127 = vunpack.c.l.b16 %v3295
    %v5128 = vunpack.c.h.b16 %v3295
    %v5129 = vunpack.c.l.b16 %v3296
    %v5130 = vunpack.c.h.b16 %v3296
    %v5131 = vunpack.c.l.b16 %v3297
    %v5132 = vunpack.c.h.b16 %v3297
    %v5133 = vunpack.c.l.b16 %v3298
    %v5134 = vunpack.c.h.b16 %v3298
    %v5135 = vunpack.c.l.b16 %v3299
    %v5136 = vunpack.c.h.b16 %v3299
    %v5137 = vunpack.c.l.b16 %v3300
    %v5138 = vunpack.c.h.b16 %v3300
    %v5139 = vpack.c.b16 %v5079, %v5075
    %v5140 = vpack.c.b16 %v5080, %v5076
    %v5141 = vpack.c.b16 %v5081, %v5077
    %v5142 = vpack.c.b16 %v5082, %v5078
    %v5143 = vpack.c.b16 %v5087, %v5083
    %v5144 = vpack.c.b16 %v5088, %v5084
    %v5145 = vpack.c.b16 %v5089, %v5085
    %v5146 = vpack.c.b16 %v5090, %v5086
    %v5147 = vpack.c.b16 %v5095, %v5091
    %v5148 = vpack.c.b16 %v5096, %v5092
    %v5149 = vpack.c.b16 %v5097, %v5093
    %v5150 = vpack.c.b16 %v5098, %v5094
    %v5151 = vpack.c.b16 %v5103, %v5099
    %v5152 = vpack.c.b16 %v5104, %v5100
    %v5153 = vpack.c.b16 %v5105, %v5101
    %v5154 = vpack.c.b16 %v5106, %v5102
    %v5155 = vpack.c.b16 %v5111, %v5107
    %v5156 = vpack.c.b16 %v5112, %v5108
    %v5157 = vpack.c.b16 %v5113, %v5109
    %v5158 = vpack.c.b16 %v5114, %v5110
    %v5159 = vpack.c.b16 %v5119, %v5115
    %v5160 = vpack.c.b16 %v5120, %v5116
    %v5161 = vpack.c.b16 %v5121, %v5117
    %v5162 = vpack.c.b16 %v5122, %v5118
    %v5163 = vpack.c.b16 %v5127, %v5123
    %v5164 = vpack.c.b16 %v5128, %v5124
    %v5165 = vpack.c.b16 %v5129, %v5125
    %v5166 = vpack.c.b16 %v5130, %v5126
    %v5167 = vpack.c.b16 %v5135, %v5131
    %v5168 = vpack.c.b16 %v5136, %v5132
    %v5169 = vpack.c.b16 %v5137, %v5133
    %v5170 = vpack.c.b16 %v5138, %v5134
    %5203 = vmatprep.subr.bf16.mxu0 %v5140
    %5204 = vmatpush1.bf16.msra.mxu0 %v5139
    %5205 = vmatprep.subr.bf16.mxu0 %v5144
    %5206 = vmatpush1.bf16.msra.mxu0 %v5143
    %5207 = vmatprep.subr.bf16.mxu0 %v5148
    %5208 = vmatpush1.bf16.msra.mxu0 %v5147
    %5209 = vmatprep.subr.bf16.mxu0 %v5152
    %5210 = vmatpush1.bf16.msra.mxu0 %v5151
    %5211 = vmatprep.subr.bf16.mxu0 %v5156
    %5212 = vmatpush1.bf16.msra.mxu0 %v5155
    %5213 = vmatprep.subr.bf16.mxu0 %v5160
    %5214 = vmatpush1.bf16.msra.mxu0 %v5159
    %5215 = vmatprep.subr.bf16.mxu0 %v5164
    %5216 = vmatpush1.bf16.msra.mxu0 %v5163
    %5217 = vmatprep.subr.bf16.mxu0 %v5168
    %5218 = vmatpush1.bf16.msra.mxu0 %v5167
    %5219 = vmatprep.subr.bf16.mxu0 0
    %5220 = vmatpush1.bf16.msra.mxu0 0
    %5221 = vmatprep.subr.bf16.mxu0 0
    %5222 = vmatpush1.bf16.msra.mxu0 0
    %5223 = vmatprep.subr.bf16.mxu0 0
    %5224 = vmatpush1.bf16.msra.mxu0 0
    %5225 = vmatprep.subr.bf16.mxu0 0
    %5226 = vmatpush1.bf16.msra.mxu0 0
    %5227 = vmatprep.subr.bf16.mxu0 0
    %5228 = vmatpush1.bf16.msra.mxu0 0
    %5229 = vmatprep.subr.bf16.mxu0 0
    %5230 = vmatpush1.bf16.msra.mxu0 0
    %5231 = vmatprep.subr.bf16.mxu0 0
    %5232 = vmatpush1.bf16.msra.mxu0 0
    %5233 = vmatprep.subr.bf16.mxu0 0
    %5234 = vmatpush1.bf16.msra.mxu0 0
    %5235 = vmatprep.mubr.bf16.mxu0 0
    %5236 = vmatmul.mubr.bf16.gmra.mrb[0].mxu0 %v5041
    %v5237 = vpop.f32.mrb[0].mxu0
    %v5238 = vadd.f32 0.0, %v5237
    %v5239 = vpop.f32.mrb[0].mxu0
    %v5240 = vadd.f32 0.0, %v5239
    %v5241 = vpop.f32.mrb[0].mxu0
    %v5242 = vpop.f32.mrb[0].mxu0
    %5243 = vdwg.mxu0
    %5244 = vmatprep.subr.bf16.mxu0 %v5142
    %5245 = vmatpush1.bf16.msra.mxu0 %v5141
    %5246 = vmatprep.subr.bf16.mxu0 %v5146
    %5247 = vmatpush1.bf16.msra.mxu0 %v5145
    %5248 = vmatprep.subr.bf16.mxu0 %v5150
    %5249 = vmatpush1.bf16.msra.mxu0 %v5149
    %5250 = vmatprep.subr.bf16.mxu0 %v5154
    %5251 = vmatpush1.bf16.msra.mxu0 %v5153
    %5252 = vmatprep.subr.bf16.mxu0 %v5158
    %5253 = vmatpush1.bf16.msra.mxu0 %v5157
    %5254 = vmatprep.subr.bf16.mxu0 %v5162
    %5255 = vmatpush1.bf16.msra.mxu0 %v5161
    %5256 = vmatprep.subr.bf16.mxu0 %v5166
    %5257 = vmatpush1.bf16.msra.mxu0 %v5165
    %5258 = vmatprep.subr.bf16.mxu0 %v5170
    %5259 = vmatpush1.bf16.msra.mxu0 %v5169
    %5260 = vmatprep.subr.bf16.mxu0 0
    %5261 = vmatpush1.bf16.msra.mxu0 0
    %5262 = vmatprep.subr.bf16.mxu0 0
    %5263 = vmatpush1.bf16.msra.mxu0 0
    %5264 = vmatprep.subr.bf16.mxu0 0
    %5265 = vmatpush1.bf16.msra.mxu0 0
    %5266 = vmatprep.subr.bf16.mxu0 0
    %5267 = vmatpush1.bf16.msra.mxu0 0
    %5268 = vmatprep.subr.bf16.mxu0 0
    %5269 = vmatpush1.bf16.msra.mxu0 0
    %5270 = vmatprep.subr.bf16.mxu0 0
    %5271 = vmatpush1.bf16.msra.mxu0 0
    %5272 = vmatprep.subr.bf16.mxu0 0
    %5273 = vmatpush1.bf16.msra.mxu0 0
    %5274 = vmatprep.subr.bf16.mxu0 0
    %5275 = vmatpush1.bf16.msra.mxu0 0
    %5276 = vmatprep.mubr.bf16.mxu0 0
    %5277 = vmatmul.mubr.bf16.gmra.mrb[0].mxu0 %v5041
    %v5278 = vpop.f32.mrb[0].mxu0
    %v5279 = vadd.f32 0.0, %v5278
    %v5280 = vpop.f32.mrb[0].mxu0
    %v5281 = vadd.f32 0.0, %v5280
    %v5282 = vpop.f32.mrb[0].mxu0
    %v5283 = vpop.f32.mrb[0].mxu0
    %5284 = vdwg.mxu0
    %v5317 = vrot.slane %v3750, 7
    %v5318 = vsel %vm2986, %v5317, %v3502
    %v5319 = vrot.slane %v3998, 6
    %v5320 = vsel %vm2988, %v5319, %v5318
    %v5321 = vrot.slane %v4246, 5
    %v5322 = vsel %vm2990, %v5321, %v5320
    %v5323 = vrot.slane %v4494, 4
    %v5324 = vsel %vm2992, %v5323, %v5322
    %v5325 = vrot.slane %v4742, 3
    %v5326 = vsel %vm2994, %v5325, %v5324
    %v5327 = vrot.slane %v4990, 2
    %v5328 = vsel %vm2996, %v5327, %v5326
    %v5329 = vrot.slane %v5238, 1
    %v5330 = vsel %vm2998, %v5329, %v5328
    %v5331 = vrot.slane %v3752, 7
    %v5332 = vsel %vm2986, %v5331, %v3504
    %v5333 = vrot.slane %v4000, 6
    %v5334 = vsel %vm2988, %v5333, %v5332
    %v5335 = vrot.slane %v4248, 5
    %v5336 = vsel %vm2990, %v5335, %v5334
    %v5337 = vrot.slane %v4496, 4
    %v5338 = vsel %vm2992, %v5337, %v5336
    %v5339 = vrot.slane %v4744, 3
    %v5340 = vsel %vm2994, %v5339, %v5338
    %v5341 = vrot.slane %v4992, 2
    %v5342 = vsel %vm2996, %v5341, %v5340
    %v5343 = vrot.slane %v5240, 1
    %v5344 = vsel %vm2998, %v5343, %v5342
    %v5345 = vrot.slane %v3791, 7
    %v5346 = vsel %vm2986, %v5345, %v3543
    %v5347 = vrot.slane %v4039, 6
    %v5348 = vsel %vm2988, %v5347, %v5346
    %v5349 = vrot.slane %v4287, 5
    %v5350 = vsel %vm2990, %v5349, %v5348
    %v5351 = vrot.slane %v4535, 4
    %v5352 = vsel %vm2992, %v5351, %v5350
    %v5353 = vrot.slane %v4783, 3
    %v5354 = vsel %vm2994, %v5353, %v5352
    %v5355 = vrot.slane %v5031, 2
    %v5356 = vsel %vm2996, %v5355, %v5354
    %v5357 = vrot.slane %v5279, 1
    %v5358 = vsel %vm2998, %v5357, %v5356
    %v5359 = vrot.slane %v3793, 7
    %v5360 = vsel %vm2986, %v5359, %v3545
    %v5361 = vrot.slane %v4041, 6
    %v5362 = vsel %vm2988, %v5361, %v5360
    %v5363 = vrot.slane %v4289, 5
    %v5364 = vsel %vm2990, %v5363, %v5362
    %v5365 = vrot.slane %v4537, 4
    %v5366 = vsel %vm2992, %v5365, %v5364
    %v5367 = vrot.slane %v4785, 3
    %v5368 = vsel %vm2994, %v5367, %v5366
    %v5369 = vrot.slane %v5033, 2
    %v5370 = vsel %vm2996, %v5369, %v5368
    %v5371 = vrot.slane %v5281, 1
    %v5372 = vsel %vm2998, %v5371, %v5370
    %5377 = vst [vmem:[#allocation8] sm:$0xff] %v5330
    %5378 = vst [vmem:[#allocation8 + $0x8] sm:$0xff] %v5344
    %5379 = vst [vmem:[#allocation8 + $0x10] sm:$0xff] %v5358
    %5380 = vst [vmem:[#allocation8 + $0x18] sm:$0xff] %v5372
    %5381 = vst [vmem:[#allocation9] sm:$0xff] %v3010
    // Predicated region
    $region38: #{tpu_custom_call.1} parent=1 // pred_check
      _
    $region39: #{tpu_custom_call.1} parent=1 // pred_check_branch
      %5383 = sbr.rel (0) target = $region41
    $region40: #{tpu_custom_call.1} parent=1 // pred_region
      %s5385 = ssub.s32 512, 512
      %5386 = vsyncadd [#allocation4], %s5385
      %s5388 = sshll.u32 [#allocation8], 4
      %s5389 = int_to_ptr.vmem [resolvable:$true] %s5388
      %5391 = dma.vmem_to_hbm [thread:$0]  %s5389, 512, %s6, [#allocation4]
    $region41: #{tpu_custom_call.1} parent=1 // pred_fallthru
      _
    // Predicated region
    $region42: #{tpu_custom_call.1} parent=1 // pred_check
      _
    $region43: #{tpu_custom_call.1} parent=1 // pred_check_branch
      %5393 = sbr.rel (0) target = $region45
    $region44: #{tpu_custom_call.1} parent=1 // pred_region
      %s5395 = ssub.s32 128, 128
      %5396 = vsyncadd [#allocation10], %s5395
      %s5398 = sshll.u32 [#allocation9], 4
      %s5399 = int_to_ptr.vmem [resolvable:$true] %s5398
      %5401 = dma.vmem_to_hbm [thread:$0]  %s5399, 128, %s7, [#allocation10]
    $region45: #{tpu_custom_call.1} parent=1 // pred_fallthru
      _
    // Predicated region
    $region46: #{tpu_custom_call.1} parent=1 // pred_check
      _
    $region47: #{tpu_custom_call.1} parent=1 // pred_check_branch
      %5403 = sbr.rel (0) target = $region49
    $region48: #{tpu_custom_call.1} parent=1 // pred_region
      %5404 = dma.done [#allocation4], 512
    $region49: #{tpu_custom_call.1} parent=1 // pred_fallthru
      _
    // Predicated region
    $region50: #{tpu_custom_call.1} parent=1 // pred_check
      _
    $region51: #{tpu_custom_call.1} parent=1 // pred_check_branch
      %5406 = sbr.rel (0) target = $region53
    $region52: #{tpu_custom_call.1} parent=1 // pred_region
      %5407 = dma.done [#allocation10], 128
    $region53: #{tpu_custom_call.1} parent=1 // pred_fallthru
      _
    %5408 = vsyncpa [#allocation3], 1
    %5409 = vsyncpa [#allocation6], 1
    %5410 = vsyncpa [#allocation4], 1
    %5411 = vsyncpa [#allocation10], 1

</llo_original>
